<compile_context>
chip_gen: v7x
topology: tpu7x:2x2x1
jax: 0.10.0
libtpu: 0.0.40
codegen_flags: <defaults>
</compile_context>

<pallas_src>
import functools

import jax
import jax.numpy as jnp
from jax import lax
from jax.experimental import pallas as pl
from jax.experimental.pallas import tpu as pltpu


def _simple_block_kernel(x1_ref, w1_ref, b1_ref, w2_ref, b2_ref, w3_ref, b3_ref,
                         o_ref, *, H, W, Hp, Wp, nb):
    # x1_ref : (nb, Hp*Wp, 9*Cin) bf16   conv1 im2col over the zero-padded grid
    # w1_ref : (9*Cin, GCp) bf16   b1_ref: (1, GCp) f32
    # w2_ref : (GCp, GCp)   bf16   b2_ref: (1, GCp) f32
    # w3_ref : (Coutp, 9*GCp) f32  b3_ref: (1, Coutp) f32
    # o_ref  : (nb, H*W, Coutp) f32
    gcp = w1_ref.shape[1]            # padded hidden width (multiple of 128)
    coutp = w3_ref.shape[0]          # padded output channels (multiple of 8)
    M = Hp * Wp
    wp_shift = Wp.bit_length() - 1   # Wp is a power of two

    # ---- conv1 (3x3, SAME): one deep-K im2col matmul over all nb images ----
    x1 = x1_ref[...].reshape(nb * M, x1_ref.shape[2])                # (nb*M, 9*Cin)
    h1 = jnp.dot(x1, w1_ref[...], preferred_element_type=jnp.float32)
    h1 = jnp.maximum(h1 + b1_ref[...], 0.0)                          # f32 (nb*M, GCp)

    # ---- conv2 (1x1) ----
    h2 = jnp.dot(h1.astype(jnp.bfloat16), w2_ref[...],
                 preferred_element_type=jnp.float32)
    h2 = jnp.maximum(h2 + b2_ref[...], 0.0)
    h2 = h2.astype(jnp.bfloat16)                                     # (nb*M, GCp)

    # Interior mask generated in-kernel (no lane-sparse mask input / extra DMA).
    r = lax.broadcasted_iota(jnp.int32, (M, gcp), 0)
    yy = r >> wp_shift               # row within the padded image
    xx = r & (Wp - 1)                # col within the padded image
    interior = (yy >= 1) & (yy <= H) & (xx >= 1) & (xx <= W)         # (M, GCp)

    # conv3 weight: shipped lane-dense; one tiny (Coutp, 9*GCp) transpose here.
    w3k = jnp.transpose(w3_ref[...]).astype(jnp.bfloat16)            # (9*GCp, Coutp)

    # ---- conv3 (3x3, SAME): 3 dx sublane shifts reused across dy (free leading
    # slices); 9 lane-aligned 128-wide chunks -> one deep-K matmul.
    h3_rows = []
    for n in range(nb):                                              # static, tiny
        slab = h2[n * M:(n + 1) * M]
        slab = jnp.where(interior, slab, jnp.zeros_like(slab))       # zero halo rows
        img = slab.reshape(Hp, Wp, gcp)
        sx = [img[:, dx:dx + W, :] for dx in range(3)]               # 3 distinct dx
        h3 = jnp.concatenate(
            [sx[dx][dy:dy + H] for dy in range(3) for dx in range(3)], axis=-1)
        h3_rows.append(h3.reshape(H * W, 9 * gcp))
    h3 = jnp.concatenate(h3_rows, axis=0) if nb > 1 else h3_rows[0]

    out = jnp.dot(h3, w3k, preferred_element_type=jnp.float32) + b3_ref[...]
    o_ref[...] = out.reshape(nb, H * W, coutp).astype(o_ref.dtype)


def _tensorcores_per_chip():
    """v7x exposes 2 TensorCores per chip; v5e/v6e have 1."""
    try:
        kind = jax.devices()[0].device_kind.lower()
    except Exception:
        return 1
    return 2 if "7" in kind else 1


def simple_block_pallas(x_nchw, params):
    """Fused SimpleBlock forward.  x_nchw: (N, Cin, H, W) f32 (PyTorch layout).
    params hold OIHW weights + biases.  Returns (N, Cout, H, W) f32."""
    N, cin, H, W = x_nchw.shape
    w1, b1 = params["w1"], params["b1"]     # (GC, Cin, 3, 3), (GC,)
    w2, b2 = params["w2"], params["b2"]     # (GC, GC, 1, 1),  (GC,)
    w3, b3 = params["w3"], params["b3"]     # (Cout, GC, 3, 3),(Cout,)
    gc = w1.shape[0]
    cout = w3.shape[0]
    gcp = pl.cdiv(gc, 128) * 128            # hidden width -> full lane tiles
    coutp = pl.cdiv(cout, 8) * 8            # output channels -> one sublane tile

    # Padded evaluation grid: 1-pixel halo; Wp is a power of two (>= 16) so bf16
    # reshapes stay tile-aligned and the in-kernel mask uses shift/and only.
    Hp = H + 2
    Wp = max(16, pl.next_power_of_2(W + 2))
    M = Hp * Wp

    # conv1 im2col over the padded grid (wrapper-side; tiny at these shapes).
    # TODO(synk): move in-kernel once H/W/Cin scale (9x HBM read amplification).
    x_nhwc = jnp.transpose(x_nchw, (0, 2, 3, 1))
    x_pad = jnp.pad(x_nhwc, ((0, 0), (1, 1), (1, 1), (0, 0)))
    cols = [x_pad[:, dy:dy + H, dx:dx + W, :]
            for dy in range(3) for dx in range(3)]
    x1 = jnp.concatenate(cols, axis=-1)                           # (N, H, W, 9*Cin)
    x1 = jnp.pad(x1, ((0, 0), (1, 1), (1, Wp - W - 1), (0, 0)))   # (N, Hp, Wp, 9*Cin)
    x1 = x1.reshape(N, M, 9 * cin).astype(jnp.bfloat16)

    # Matmul-layout weights (OIHW -> im2col order), hidden dim zero-padded to GCp.
    w1r = jnp.transpose(w1, (2, 3, 1, 0)).reshape(9 * cin, gc)
    w1r = jnp.pad(w1r, ((0, 0), (0, gcp - gc))).astype(jnp.bfloat16)
    w2r = jnp.transpose(w2[:, :, 0, 0], (1, 0))
    w2r = jnp.pad(w2r, ((0, gcp - gc), (0, gcp - gc))).astype(jnp.bfloat16)
    w3r = jnp.transpose(w3, (2, 3, 1, 0))                         # (3,3,GC,Cout)
    w3r = jnp.pad(w3r, ((0, 0), (0, 0), (0, gcp - gc), (0, coutp - cout)))
    w3r = jnp.transpose(w3r.reshape(9 * gcp, coutp))              # (Coutp, 9*GCp) f32
    b1r = jnp.pad(b1, (0, gcp - gc)).reshape(1, gcp).astype(jnp.float32)
    b2r = jnp.pad(b2, (0, gcp - gc)).reshape(1, gcp).astype(jnp.float32)
    b3r = jnp.pad(b3, (0, coutp - cout)).reshape(1, coutp).astype(jnp.float32)

    # Batch mapping: one image per TensorCore on v7x; fold batch into M on
    # single-TC chips (v5e/v6e) to kill per-grid-step overhead.
    if N > 1 and _tensorcores_per_chip() > 1:
        nb, grid, dim_sem = 1, (N,), ("parallel",)
    else:
        nb, grid, dim_sem = N, (1,), ("arbitrary",)

    kernel = functools.partial(_simple_block_kernel, H=H, W=W, Hp=Hp, Wp=Wp, nb=nb)

    grid_spec = pltpu.PrefetchScalarGridSpec(
        num_scalar_prefetch=0,
        grid=grid,
        in_specs=[
            pl.BlockSpec((nb, M, 9 * cin), lambda n: (n, 0, 0)),
            pl.BlockSpec((9 * cin, gcp), lambda n: (0, 0)),
            pl.BlockSpec((1, gcp), lambda n: (0, 0)),
            pl.BlockSpec((gcp, gcp), lambda n: (0, 0)),
            pl.BlockSpec((1, gcp), lambda n: (0, 0)),
            pl.BlockSpec((coutp, 9 * gcp), lambda n: (0, 0)),
            pl.BlockSpec((1, coutp), lambda n: (0, 0)),
        ],
        out_specs=pl.BlockSpec((nb, H * W, coutp), lambda n: (n, 0, 0)),
    )

    out = pl.pallas_call(
        kernel,
        out_shape=jax.ShapeDtypeStruct((N, H * W, coutp), x_nchw.dtype),
        grid_spec=grid_spec,
        compiler_params=pltpu.CompilerParams(dimension_semantics=dim_sem),
    )(x1, w1r, b1r, w2r, b2r, w3r, b3r)

    out = out[..., :cout].reshape(N, H, W, cout)
    return jnp.transpose(out, (0, 3, 1, 2))


# -------------------- parameter setup (plain-JAX glue) --------------------

def spectral_normalize(w_oihw, key, n_iter=1, eps=1e-12):
    """One power-iteration spectral normalization (W / sigma), mirroring
    torch.nn.utils.spectral_norm semantics with a deterministic u init."""
    out_ch = w_oihw.shape[0]
    w_mat = w_oihw.reshape(out_ch, -1)
    u = jax.random.normal(key, (out_ch,), dtype=w_oihw.dtype)
    u = u / (jnp.linalg.norm(u) + eps)
    v = None
    for _ in range(n_iter):
        v = w_mat.T @ u
        v = v / (jnp.linalg.norm(v) + eps)
        u = w_mat @ v
        u = u / (jnp.linalg.norm(u) + eps)
    sigma = u @ (w_mat @ v)
    return w_oihw / sigma


def make_params(key, channel_in, channel_out, gc=64):
    k1, k2, k3, ku1, ku2, ku3 = jax.random.split(key, 6)
    w1 = 0.02 * jax.random.normal(k1, (gc, channel_in, 3, 3), jnp.float32)
    w2 = 0.02 * jax.random.normal(k2, (gc, gc, 1, 1), jnp.float32)
    w3 = 0.02 * jax.random.normal(k3, (channel_out, gc, 3, 3), jnp.float32)
    return {
        "w1": spectral_normalize(w1, ku1), "b1": jnp.zeros((gc,), jnp.float32),
        "w2": spectral_normalize(w2, ku2), "b2": jnp.zeros((gc,), jnp.float32),
        "w3": spectral_normalize(w3, ku3),
        "b3": jnp.zeros((channel_out,), jnp.float32),
    }


def simple_block_reference(x_nchw, params):
    """Pure-JAX reference (lax.conv, NCHW/OIHW like the PyTorch module)."""
    dn = ("NCHW", "OIHW", "NCHW")
    h = lax.conv_general_dilated(x_nchw, params["w1"], (1, 1), "SAME",
                                 dimension_numbers=dn)
    h = jnp.maximum(h + params["b1"][None, :, None, None], 0.0)
    h = lax.conv_general_dilated(h, params["w2"], (1, 1), "SAME",
                                 dimension_numbers=dn)
    h = jnp.maximum(h + params["b2"][None, :, None, None], 0.0)
    h = lax.conv_general_dilated(h, params["w3"], (1, 1), "SAME",
                                 dimension_numbers=dn)
    return h + params["b3"][None, :, None, None]


if __name__ == "__main__":
    key = jax.random.PRNGKey(0)
    kx, kp = jax.random.split(key)

    N, C_IN, C_OUT, H, W, GC = 2, 4, 4, 16, 16, 64
    x = jax.random.normal(kx, (N, C_IN, H, W), jnp.float32)   # NCHW, like PyTorch
    params = make_params(kp, C_IN, C_OUT, gc=GC)

    fwd = jax.jit(simple_block_pallas)
    out = jax.block_until_ready(fwd(x, params))

    ref = simple_block_reference(x, params)
    assert out.shape == (N, C_OUT, H, W)
    # bf16 matmul operands (f32 accumulation) -> slightly looser tolerance.
    assert jnp.allclose(out, ref, atol=2e-2, rtol=2e-2), (
        f"mismatch vs reference (max abs err {jnp.max(jnp.abs(out - ref))})")

    print("KERNEL_OK")
</pallas_src>

<mosaic_0001>
module attributes {stable_mosaic.version = 11 : i64} {
  func.func @_simple_block_kernel(%arg0: i32, %arg1: memref<2x576x36xbf16, #tpu.memory_space<vmem>>, %arg2: memref<36x128xbf16, #tpu.memory_space<vmem>>, %arg3: memref<1x128xf32, #tpu.memory_space<vmem>>, %arg4: memref<128x128xbf16, #tpu.memory_space<vmem>>, %arg5: memref<1x128xf32, #tpu.memory_space<vmem>>, %arg6: memref<8x1152xf32, #tpu.memory_space<vmem>>, %arg7: memref<1x8xf32, #tpu.memory_space<vmem>>, %arg8: memref<2x256x8xf32, #tpu.memory_space<vmem>>) attributes {dimension_semantics = [#tpu.dimension_semantics<arbitrary>], iteration_bounds = array<i64: 1>, scalar_prefetch = 0 : i64, scratch_operands = 0 : i64, tpu.core_type = #tpu.core_type<tc>, window_params = [{transform_indices = @transform_0, window_bounds = array<i64: 2, 576, 36>}, {pipeline_mode = #tpu.pipeline_mode<synchronous>, transform_indices = @transform_1, window_bounds = array<i64: 36, 128>}, {pipeline_mode = #tpu.pipeline_mode<synchronous>, transform_indices = @transform_2, window_bounds = array<i64: 1, 128>}, {pipeline_mode = #tpu.pipeline_mode<synchronous>, transform_indices = @transform_3, window_bounds = array<i64: 128, 128>}, {pipeline_mode = #tpu.pipeline_mode<synchronous>, transform_indices = @transform_4, window_bounds = array<i64: 1, 128>}, {pipeline_mode = #tpu.pipeline_mode<synchronous>, transform_indices = @transform_5, window_bounds = array<i64: 8, 1152>}, {pipeline_mode = #tpu.pipeline_mode<synchronous>, transform_indices = @transform_6, window_bounds = array<i64: 1, 8>}, {transform_indices = @transform_7, window_bounds = array<i64: 2, 256, 8>}]} {
    %c0 = arith.constant 0 : index
    %c0_0 = arith.constant 0 : index
    %c0_1 = arith.constant 0 : index
    %0 = vector.load %arg1[%c0, %c0_0, %c0_1] : memref<2x576x36xbf16, #tpu.memory_space<vmem>>, vector<2x576x36xbf16>
    %1 = vector.shape_cast %0 : vector<2x576x36xbf16> to vector<1152x36xbf16>
    %c0_2 = arith.constant 0 : index
    %c0_3 = arith.constant 0 : index
    %2 = vector.load %arg2[%c0_2, %c0_3] : memref<36x128xbf16, #tpu.memory_space<vmem>>, vector<36x128xbf16>
    %cst = arith.constant dense<0.000000e+00> : vector<1152x128xf32>
    %3 = tpu.matmul %1, %2, %cst {dimension_numbers = #tpu.dot_dimension_numbers<[1], [0], [0], [1], [0, 0, 1, 1], [], []>} : vector<1152x36xbf16>, vector<36x128xbf16>, vector<1152x128xf32> -> vector<1152x128xf32>
    %c0_4 = arith.constant 0 : index
    %c0_5 = arith.constant 0 : index
    %4 = vector.load %arg3[%c0_4, %c0_5] : memref<1x128xf32, #tpu.memory_space<vmem>>, vector<1x128xf32>
    %5 = vector.broadcast %4 : vector<1x128xf32> to vector<1152x128xf32>
    %6 = arith.addf %3, %5 : vector<1152x128xf32>
    %cst_6 = arith.constant 0.000000e+00 : f32
    %7 = vector.broadcast %cst_6 : f32 to vector<1152x128xf32>
    %8 = arith.maximumf %6, %7 : vector<1152x128xf32>
    %9 = arith.truncf %8 : vector<1152x128xf32> to vector<1152x128xbf16>
    %c0_7 = arith.constant 0 : index
    %c0_8 = arith.constant 0 : index
    %10 = vector.load %arg4[%c0_7, %c0_8] : memref<128x128xbf16, #tpu.memory_space<vmem>>, vector<128x128xbf16>
    %cst_9 = arith.constant dense<0.000000e+00> : vector<1152x128xf32>
    %11 = tpu.matmul %9, %10, %cst_9 {dimension_numbers = #tpu.dot_dimension_numbers<[1], [0], [0], [1], [0, 0, 1, 1], [], []>} : vector<1152x128xbf16>, vector<128x128xbf16>, vector<1152x128xf32> -> vector<1152x128xf32>
    %c0_10 = arith.constant 0 : index
    %c0_11 = arith.constant 0 : index
    %12 = vector.load %arg5[%c0_10, %c0_11] : memref<1x128xf32, #tpu.memory_space<vmem>>, vector<1x128xf32>
    %13 = vector.broadcast %12 : vector<1x128xf32> to vector<1152x128xf32>
    %14 = arith.addf %11, %13 : vector<1152x128xf32>
    %cst_12 = arith.constant 0.000000e+00 : f32
    %15 = vector.broadcast %cst_12 : f32 to vector<1152x128xf32>
    %16 = arith.maximumf %14, %15 : vector<1152x128xf32>
    %17 = arith.truncf %16 : vector<1152x128xf32> to vector<1152x128xbf16>
    %18 = tpu.iota {dimensions = array<i32: 0>} : vector<576x128xi32>
    %c5_i32 = arith.constant 5 : i32
    %19 = vector.broadcast %c5_i32 : i32 to vector<576x128xi32>
    %20 = arith.shrsi %18, %19 : vector<576x128xi32>
    %c31_i32 = arith.constant 31 : i32
    %21 = vector.broadcast %c31_i32 : i32 to vector<576x128xi32>
    %22 = arith.andi %18, %21 : vector<576x128xi32>
    %c1_i32 = arith.constant 1 : i32
    %23 = vector.broadcast %c1_i32 : i32 to vector<576x128xi32>
    %24 = arith.cmpi sge, %20, %23 : vector<576x128xi32>
    %c16_i32 = arith.constant 16 : i32
    %25 = vector.broadcast %c16_i32 : i32 to vector<576x128xi32>
    %26 = arith.cmpi sle, %20, %25 : vector<576x128xi32>
    %27 = arith.andi %24, %26 : vector<576x128xi1>
    %c1_i32_13 = arith.constant 1 : i32
    %28 = vector.broadcast %c1_i32_13 : i32 to vector<576x128xi32>
    %29 = arith.cmpi sge, %22, %28 : vector<576x128xi32>
    %30 = arith.andi %27, %29 : vector<576x128xi1>
    %c16_i32_14 = arith.constant 16 : i32
    %31 = vector.broadcast %c16_i32_14 : i32 to vector<576x128xi32>
    %32 = arith.cmpi sle, %22, %31 : vector<576x128xi32>
    %33 = arith.andi %30, %32 : vector<576x128xi1>
    %c0_15 = arith.constant 0 : index
    %c0_16 = arith.constant 0 : index
    %34 = vector.load %arg6[%c0_15, %c0_16] : memref<8x1152xf32, #tpu.memory_space<vmem>>, vector<8x1152xf32>
    %35 = tpu.transpose %34, [1, 0] : vector<8x1152xf32> -> vector<1152x8xf32>
    %36 = arith.truncf %35 : vector<1152x8xf32> to vector<1152x8xbf16>
    %37 = vector.extract_strided_slice %17 {offsets = [0, 0], sizes = [576, 128], strides = [1, 1]} : vector<1152x128xbf16> to vector<576x128xbf16>
    %cst_17 = arith.constant 0.000000e+00 : bf16
    %38 = vector.broadcast %cst_17 : bf16 to vector<576x128xbf16>
    %39 = arith.select %33, %37, %38 : vector<576x128xi1>, vector<576x128xbf16>
    %40 = vector.shape_cast %39 : vector<576x128xbf16> to vector<18x32x128xbf16>
    %41 = vector.extract_strided_slice %40 {offsets = [0, 0, 0], sizes = [18, 16, 128], strides = [1, 1, 1]} : vector<18x32x128xbf16> to vector<18x16x128xbf16>
    %42 = vector.extract_strided_slice %40 {offsets = [0, 1, 0], sizes = [18, 16, 128], strides = [1, 1, 1]} : vector<18x32x128xbf16> to vector<18x16x128xbf16>
    %43 = vector.extract_strided_slice %40 {offsets = [0, 2, 0], sizes = [18, 16, 128], strides = [1, 1, 1]} : vector<18x32x128xbf16> to vector<18x16x128xbf16>
    %44 = vector.extract_strided_slice %41 {offsets = [0, 0, 0], sizes = [16, 16, 128], strides = [1, 1, 1]} : vector<18x16x128xbf16> to vector<16x16x128xbf16>
    %45 = vector.extract_strided_slice %42 {offsets = [0, 0, 0], sizes = [16, 16, 128], strides = [1, 1, 1]} : vector<18x16x128xbf16> to vector<16x16x128xbf16>
    %46 = vector.extract_strided_slice %43 {offsets = [0, 0, 0], sizes = [16, 16, 128], strides = [1, 1, 1]} : vector<18x16x128xbf16> to vector<16x16x128xbf16>
    %47 = vector.extract_strided_slice %41 {offsets = [1, 0, 0], sizes = [16, 16, 128], strides = [1, 1, 1]} : vector<18x16x128xbf16> to vector<16x16x128xbf16>
    %48 = vector.extract_strided_slice %42 {offsets = [1, 0, 0], sizes = [16, 16, 128], strides = [1, 1, 1]} : vector<18x16x128xbf16> to vector<16x16x128xbf16>
    %49 = vector.extract_strided_slice %43 {offsets = [1, 0, 0], sizes = [16, 16, 128], strides = [1, 1, 1]} : vector<18x16x128xbf16> to vector<16x16x128xbf16>
    %50 = vector.extract_strided_slice %41 {offsets = [2, 0, 0], sizes = [16, 16, 128], strides = [1, 1, 1]} : vector<18x16x128xbf16> to vector<16x16x128xbf16>
    %51 = vector.extract_strided_slice %42 {offsets = [2, 0, 0], sizes = [16, 16, 128], strides = [1, 1, 1]} : vector<18x16x128xbf16> to vector<16x16x128xbf16>
    %52 = vector.extract_strided_slice %43 {offsets = [2, 0, 0], sizes = [16, 16, 128], strides = [1, 1, 1]} : vector<18x16x128xbf16> to vector<16x16x128xbf16>
    %53 = tpu.concatenate %44, %45, %46, %47, %48, %49, %50, %51, %52 in 2 : vector<16x16x128xbf16>, vector<16x16x128xbf16>, vector<16x16x128xbf16>, vector<16x16x128xbf16>, vector<16x16x128xbf16>, vector<16x16x128xbf16>, vector<16x16x128xbf16>, vector<16x16x128xbf16>, vector<16x16x128xbf16> -> vector<16x16x1152xbf16>
    %54 = vector.shape_cast %53 : vector<16x16x1152xbf16> to vector<256x1152xbf16>
    %55 = vector.extract_strided_slice %17 {offsets = [576, 0], sizes = [576, 128], strides = [1, 1]} : vector<1152x128xbf16> to vector<576x128xbf16>
    %cst_18 = arith.constant 0.000000e+00 : bf16
    %56 = vector.broadcast %cst_18 : bf16 to vector<576x128xbf16>
    %57 = arith.select %33, %55, %56 : vector<576x128xi1>, vector<576x128xbf16>
    %58 = vector.shape_cast %57 : vector<576x128xbf16> to vector<18x32x128xbf16>
    %59 = vector.extract_strided_slice %58 {offsets = [0, 0, 0], sizes = [18, 16, 128], strides = [1, 1, 1]} : vector<18x32x128xbf16> to vector<18x16x128xbf16>
    %60 = vector.extract_strided_slice %58 {offsets = [0, 1, 0], sizes = [18, 16, 128], strides = [1, 1, 1]} : vector<18x32x128xbf16> to vector<18x16x128xbf16>
    %61 = vector.extract_strided_slice %58 {offsets = [0, 2, 0], sizes = [18, 16, 128], strides = [1, 1, 1]} : vector<18x32x128xbf16> to vector<18x16x128xbf16>
    %62 = vector.extract_strided_slice %59 {offsets = [0, 0, 0], sizes = [16, 16, 128], strides = [1, 1, 1]} : vector<18x16x128xbf16> to vector<16x16x128xbf16>
    %63 = vector.extract_strided_slice %60 {offsets = [0, 0, 0], sizes = [16, 16, 128], strides = [1, 1, 1]} : vector<18x16x128xbf16> to vector<16x16x128xbf16>
    %64 = vector.extract_strided_slice %61 {offsets = [0, 0, 0], sizes = [16, 16, 128], strides = [1, 1, 1]} : vector<18x16x128xbf16> to vector<16x16x128xbf16>
    %65 = vector.extract_strided_slice %59 {offsets = [1, 0, 0], sizes = [16, 16, 128], strides = [1, 1, 1]} : vector<18x16x128xbf16> to vector<16x16x128xbf16>
    %66 = vector.extract_strided_slice %60 {offsets = [1, 0, 0], sizes = [16, 16, 128], strides = [1, 1, 1]} : vector<18x16x128xbf16> to vector<16x16x128xbf16>
    %67 = vector.extract_strided_slice %61 {offsets = [1, 0, 0], sizes = [16, 16, 128], strides = [1, 1, 1]} : vector<18x16x128xbf16> to vector<16x16x128xbf16>
    %68 = vector.extract_strided_slice %59 {offsets = [2, 0, 0], sizes = [16, 16, 128], strides = [1, 1, 1]} : vector<18x16x128xbf16> to vector<16x16x128xbf16>
    %69 = vector.extract_strided_slice %60 {offsets = [2, 0, 0], sizes = [16, 16, 128], strides = [1, 1, 1]} : vector<18x16x128xbf16> to vector<16x16x128xbf16>
    %70 = vector.extract_strided_slice %61 {offsets = [2, 0, 0], sizes = [16, 16, 128], strides = [1, 1, 1]} : vector<18x16x128xbf16> to vector<16x16x128xbf16>
    %71 = tpu.concatenate %62, %63, %64, %65, %66, %67, %68, %69, %70 in 2 : vector<16x16x128xbf16>, vector<16x16x128xbf16>, vector<16x16x128xbf16>, vector<16x16x128xbf16>, vector<16x16x128xbf16>, vector<16x16x128xbf16>, vector<16x16x128xbf16>, vector<16x16x128xbf16>, vector<16x16x128xbf16> -> vector<16x16x1152xbf16>
    %72 = vector.shape_cast %71 : vector<16x16x1152xbf16> to vector<256x1152xbf16>
    %73 = tpu.concatenate %54, %72 in 0 : vector<256x1152xbf16>, vector<256x1152xbf16> -> vector<512x1152xbf16>
    %cst_19 = arith.constant dense<0.000000e+00> : vector<512x8xf32>
    %74 = tpu.matmul %73, %36, %cst_19 {dimension_numbers = #tpu.dot_dimension_numbers<[1], [0], [0], [1], [0, 0, 1, 1], [], []>} : vector<512x1152xbf16>, vector<1152x8xbf16>, vector<512x8xf32> -> vector<512x8xf32>
    %c0_20 = arith.constant 0 : index
    %c0_21 = arith.constant 0 : index
    %75 = vector.load %arg7[%c0_20, %c0_21] : memref<1x8xf32, #tpu.memory_space<vmem>>, vector<1x8xf32>
    %76 = vector.broadcast %75 : vector<1x8xf32> to vector<512x8xf32>
    %77 = arith.addf %74, %76 : vector<512x8xf32>
    %78 = vector.shape_cast %77 : vector<512x8xf32> to vector<2x256x8xf32>
    %c0_22 = arith.constant 0 : index
    %c0_23 = arith.constant 0 : index
    %c0_24 = arith.constant 0 : index
    %79 = vector.load %arg8[%c0_22, %c0_23, %c0_24] : memref<2x256x8xf32, #tpu.memory_space<vmem>>, vector<2x256x8xf32>
    tpu.vector_store %arg8[%c0_22, %c0_23, %c0_24], %78 {strides = array<i32>} : memref<2x256x8xf32, #tpu.memory_space<vmem>>, vector<2x256x8xf32>,
    return
  }
  func.func @transform_0(%arg0: i32) -> (i32, i32, i32) {
    %c0_i32 = arith.constant 0 : i32
    %c0_i32_0 = arith.constant 0 : i32
    %c0_i32_1 = arith.constant 0 : i32
    return %arg0, %c0_i32, %c0_i32_0 : i32, i32, i32
  }
  func.func @transform_1(%arg0: i32) -> (i32, i32) {
    %c0_i32 = arith.constant 0 : i32
    %c0_i32_0 = arith.constant 0 : i32
    %c0_i32_1 = arith.constant 0 : i32
    return %c0_i32, %c0_i32_0 : i32, i32
  }
  func.func @transform_2(%arg0: i32) -> (i32, i32) {
    %c0_i32 = arith.constant 0 : i32
    %c0_i32_0 = arith.constant 0 : i32
    %c0_i32_1 = arith.constant 0 : i32
    return %c0_i32, %c0_i32_0 : i32, i32
  }
  func.func @transform_3(%arg0: i32) -> (i32, i32) {
    %c0_i32 = arith.constant 0 : i32
    %c0_i32_0 = arith.constant 0 : i32
    %c0_i32_1 = arith.constant 0 : i32
    return %c0_i32, %c0_i32_0 : i32, i32
  }
  func.func @transform_4(%arg0: i32) -> (i32, i32) {
    %c0_i32 = arith.constant 0 : i32
    %c0_i32_0 = arith.constant 0 : i32
    %c0_i32_1 = arith.constant 0 : i32
    return %c0_i32, %c0_i32_0 : i32, i32
  }
  func.func @transform_5(%arg0: i32) -> (i32, i32) {
    %c0_i32 = arith.constant 0 : i32
    %c0_i32_0 = arith.constant 0 : i32
    %c0_i32_1 = arith.constant 0 : i32
    return %c0_i32, %c0_i32_0 : i32, i32
  }
  func.func @transform_6(%arg0: i32) -> (i32, i32) {
    %c0_i32 = arith.constant 0 : i32
    %c0_i32_0 = arith.constant 0 : i32
    %c0_i32_1 = arith.constant 0 : i32
    return %c0_i32, %c0_i32_0 : i32, i32
  }
  func.func @transform_7(%arg0: i32) -> (i32, i32, i32) {
    %c0_i32 = arith.constant 0 : i32
    %c0_i32_0 = arith.constant 0 : i32
    %c0_i32_1 = arith.constant 0 : i32
    return %arg0, %c0_i32, %c0_i32_0 : i32, i32, i32
  }
}

</mosaic_0001>

<llo_original>
// kernel: simple_block_pallas.1
$region0: #{simple_block_pallas.1}
  #allocation0 [shape = 'u32[]', space=smem, size = 0x4, offset = 0x4, fixed_abs, tag = 'smem constant byte address 0x4 - core index']
  #allocation1 [shape = 'u32[144,128]{1,0:T(1,128)}', space=vmem, size = 0x12000, scoped, tag = 'internal scratch']
  %s0 = inlined_call_operand.vmem [shape: bf16[2,576,36], index: 0, kind: input, shape index: {}]
  %s1 = inlined_call_operand.vmem [shape: bf16[36,128], index: 1, kind: input, shape index: {}]
  %s2 = inlined_call_operand.vmem [shape: f32[1,128], index: 2, kind: input, shape index: {}]
  %s3 = inlined_call_operand.vmem [shape: bf16[128,128], index: 3, kind: input, shape index: {}]
  %s4 = inlined_call_operand.vmem [shape: f32[1,128], index: 4, kind: input, shape index: {}]
  %s5 = inlined_call_operand.vmem [shape: f32[8,1152], index: 5, kind: input, shape index: {}]
  %s6 = inlined_call_operand.vmem [shape: f32[1,8], index: 6, kind: input, shape index: {}]
  %s7 = inlined_call_operand.vmem [shape: f32[2,256,8], index: 7, kind: output, shape index: {}]
  %s8 = sld [smem:[#allocation0]]
  $region38: #{simple_block_pallas.1} parent=0
    _
  %s10 = ssub.s32 1, %s8
  %s11 = scalar_select 0, %s10, %s8
  // Predicated region
  $region2: #{simple_block_pallas.1} parent=0 // pred_check
    _
  $region3: #{simple_block_pallas.1} parent=0 // pred_check_branch
    %13 = sbr.rel (0) target = $region5
  $region4: #{simple_block_pallas.1} parent=0 // pred_region
    _
  $region5: #{simple_block_pallas.1} parent=0 // pred_fallthru
    _
  // Predicated region
  $region6: #{simple_block_pallas.1} parent=0 // pred_check
    _
  $region7: #{simple_block_pallas.1} parent=0 // pred_check_branch
    %15 = sbr.rel (0) target = $region9
  $region8: #{simple_block_pallas.1} parent=0 // pred_region
    _
  $region9: #{simple_block_pallas.1} parent=0 // pred_fallthru
    _
  // Predicated region
  $region10: #{simple_block_pallas.1} parent=0 // pred_check
    _
  $region11: #{simple_block_pallas.1} parent=0 // pred_check_branch
    %17 = sbr.rel (0) target = $region13
  $region12: #{simple_block_pallas.1} parent=0 // pred_region
    _
  $region13: #{simple_block_pallas.1} parent=0 // pred_fallthru
    _
  // Predicated region
  $region14: #{simple_block_pallas.1} parent=0 // pred_check
    _
  $region15: #{simple_block_pallas.1} parent=0 // pred_check_branch
    %19 = sbr.rel (0) target = $region17
  $region16: #{simple_block_pallas.1} parent=0 // pred_region
    _
  $region17: #{simple_block_pallas.1} parent=0 // pred_fallthru
    _
  // Predicated region
  $region18: #{simple_block_pallas.1} parent=0 // pred_check
    _
  $region19: #{simple_block_pallas.1} parent=0 // pred_check_branch
    %21 = sbr.rel (0) target = $region21
  $region20: #{simple_block_pallas.1} parent=0 // pred_region
    _
  $region21: #{simple_block_pallas.1} parent=0 // pred_fallthru
    _
  // Predicated region
  $region22: #{simple_block_pallas.1} parent=0 // pred_check
    _
  $region23: #{simple_block_pallas.1} parent=0 // pred_check_branch
    %23 = sbr.rel (0) target = $region25
  $region24: #{simple_block_pallas.1} parent=0 // pred_region
    _
  $region25: #{simple_block_pallas.1} parent=0 // pred_fallthru
    _
  // Predicated region
  $region26: #{simple_block_pallas.1} parent=0 // pred_check
    _
  $region27: #{simple_block_pallas.1} parent=0 // pred_check_branch
    %25 = sbr.rel (0) target = $region29
  $region28: #{simple_block_pallas.1} parent=0 // pred_region
    _
  $region29: #{simple_block_pallas.1} parent=0 // pred_fallthru
    _
  %v29 = vld [vmem:[%s0] sm:$0xf]
  %v30 = vld [vmem:[%s0 + $0x4] sm:$0xf]
  %v31 = vld [vmem:[%s0 + $0x8] sm:$0xf]
  %v32 = vld [vmem:[%s0 + $0xc] sm:$0xf]
  %v33 = vld [vmem:[%s0 + $0x10] sm:$0xf]
  %v34 = vld [vmem:[%s0 + $0x14] sm:$0xf]
  %v35 = vld [vmem:[%s0 + $0x18] sm:$0xf]
  %v36 = vld [vmem:[%s0 + $0x1c] sm:$0xf]
  %v37 = vld [vmem:[%s0 + $0x20] sm:$0xf]
  %v38 = vld [vmem:[%s0 + $0x24] sm:$0xf]
  %v39 = vld [vmem:[%s0 + $0x28] sm:$0xf]
  %v40 = vld [vmem:[%s0 + $0x2c] sm:$0xf]
  %v41 = vld [vmem:[%s0 + $0x30] sm:$0xf]
  %v42 = vld [vmem:[%s0 + $0x34] sm:$0xf]
  %v43 = vld [vmem:[%s0 + $0x38] sm:$0xf]
  %v44 = vld [vmem:[%s0 + $0x3c] sm:$0xf]
  %v45 = vld [vmem:[%s0 + $0x40] sm:$0xf]
  %v46 = vld [vmem:[%s0 + $0x44] sm:$0xf]
  %v47 = vld [vmem:[%s0 + $0x48] sm:$0xf]
  %v48 = vld [vmem:[%s0 + $0x4c] sm:$0xf]
  %v49 = vld [vmem:[%s0 + $0x50] sm:$0xf]
  %v50 = vld [vmem:[%s0 + $0x54] sm:$0xf]
  %v51 = vld [vmem:[%s0 + $0x58] sm:$0xf]
  %v52 = vld [vmem:[%s0 + $0x5c] sm:$0xf]
  %v53 = vld [vmem:[%s0 + $0x60] sm:$0xf]
  %v54 = vld [vmem:[%s0 + $0x64] sm:$0xf]
  %v55 = vld [vmem:[%s0 + $0x68] sm:$0xf]
  %v56 = vld [vmem:[%s0 + $0x6c] sm:$0xf]
  %v57 = vld [vmem:[%s0 + $0x70] sm:$0xf]
  %v58 = vld [vmem:[%s0 + $0x74] sm:$0xf]
  %v59 = vld [vmem:[%s0 + $0x78] sm:$0xf]
  %v60 = vld [vmem:[%s0 + $0x7c] sm:$0xf]
  %v61 = vld [vmem:[%s0 + $0x80] sm:$0xf]
  %v62 = vld [vmem:[%s0 + $0x84] sm:$0xf]
  %v63 = vld [vmem:[%s0 + $0x88] sm:$0xf]
  %v64 = vld [vmem:[%s0 + $0x8c] sm:$0xf]
  %v65 = vld [vmem:[%s0 + $0x90] sm:$0xf]
  %v66 = vld [vmem:[%s0 + $0x94] sm:$0xf]
  %v67 = vld [vmem:[%s0 + $0x98] sm:$0xf]
  %v68 = vld [vmem:[%s0 + $0x9c] sm:$0xf]
  %v69 = vld [vmem:[%s0 + $0xa0] sm:$0xf]
  %v70 = vld [vmem:[%s0 + $0xa4] sm:$0xf]
  %v71 = vld [vmem:[%s0 + $0xa8] sm:$0xf]
  %v72 = vld [vmem:[%s0 + $0xac] sm:$0xf]
  %v73 = vld [vmem:[%s0 + $0xb0] sm:$0xf]
  %v74 = vld [vmem:[%s0 + $0xb4] sm:$0xf]
  %v75 = vld [vmem:[%s0 + $0xb8] sm:$0xf]
  %v76 = vld [vmem:[%s0 + $0xbc] sm:$0xf]
  %v77 = vld [vmem:[%s0 + $0xc0] sm:$0xf]
  %v78 = vld [vmem:[%s0 + $0xc4] sm:$0xf]
  %v79 = vld [vmem:[%s0 + $0xc8] sm:$0xf]
  %v80 = vld [vmem:[%s0 + $0xcc] sm:$0xf]
  %v81 = vld [vmem:[%s0 + $0xd0] sm:$0xf]
  %v82 = vld [vmem:[%s0 + $0xd4] sm:$0xf]
  %v83 = vld [vmem:[%s0 + $0xd8] sm:$0xf]
  %v84 = vld [vmem:[%s0 + $0xdc] sm:$0xf]
  %v85 = vld [vmem:[%s0 + $0xe0] sm:$0xf]
  %v86 = vld [vmem:[%s0 + $0xe4] sm:$0xf]
  %v87 = vld [vmem:[%s0 + $0xe8] sm:$0xf]
  %v88 = vld [vmem:[%s0 + $0xec] sm:$0xf]
  %v89 = vld [vmem:[%s0 + $0xf0] sm:$0xf]
  %v90 = vld [vmem:[%s0 + $0xf4] sm:$0xf]
  %v91 = vld [vmem:[%s0 + $0xf8] sm:$0xf]
  %v92 = vld [vmem:[%s0 + $0xfc] sm:$0xf]
  %v93 = vld [vmem:[%s0 + $0x100] sm:$0xf]
  %v94 = vld [vmem:[%s0 + $0x104] sm:$0xf]
  %v95 = vld [vmem:[%s0 + $0x108] sm:$0xf]
  %v96 = vld [vmem:[%s0 + $0x10c] sm:$0xf]
  %v97 = vld [vmem:[%s0 + $0x110] sm:$0xf]
  %v98 = vld [vmem:[%s0 + $0x114] sm:$0xf]
  %v99 = vld [vmem:[%s0 + $0x118] sm:$0xf]
  %v100 = vld [vmem:[%s0 + $0x11c] sm:$0xf]
  %v101 = vld [vmem:[%s0 + $0x120] sm:$0xf]
  %v102 = vld [vmem:[%s0 + $0x124] sm:$0xf]
  %v103 = vld [vmem:[%s0 + $0x128] sm:$0xf]
  %v104 = vld [vmem:[%s0 + $0x12c] sm:$0xf]
  %v105 = vld [vmem:[%s0 + $0x130] sm:$0xf]
  %v106 = vld [vmem:[%s0 + $0x134] sm:$0xf]
  %v107 = vld [vmem:[%s0 + $0x138] sm:$0xf]
  %v108 = vld [vmem:[%s0 + $0x13c] sm:$0xf]
  %v109 = vld [vmem:[%s0 + $0x140] sm:$0xf]
  %v110 = vld [vmem:[%s0 + $0x144] sm:$0xf]
  %v111 = vld [vmem:[%s0 + $0x148] sm:$0xf]
  %v112 = vld [vmem:[%s0 + $0x14c] sm:$0xf]
  %v113 = vld [vmem:[%s0 + $0x150] sm:$0xf]
  %v114 = vld [vmem:[%s0 + $0x154] sm:$0xf]
  %v115 = vld [vmem:[%s0 + $0x158] sm:$0xf]
  %v116 = vld [vmem:[%s0 + $0x15c] sm:$0xf]
  %v117 = vld [vmem:[%s0 + $0x160] sm:$0xf]
  %v118 = vld [vmem:[%s0 + $0x164] sm:$0xf]
  %v119 = vld [vmem:[%s0 + $0x168] sm:$0xf]
  %v120 = vld [vmem:[%s0 + $0x16c] sm:$0xf]
  %v121 = vld [vmem:[%s0 + $0x170] sm:$0xf]
  %v122 = vld [vmem:[%s0 + $0x174] sm:$0xf]
  %v123 = vld [vmem:[%s0 + $0x178] sm:$0xf]
  %v124 = vld [vmem:[%s0 + $0x17c] sm:$0xf]
  %v125 = vld [vmem:[%s0 + $0x180] sm:$0xf]
  %v126 = vld [vmem:[%s0 + $0x184] sm:$0xf]
  %v127 = vld [vmem:[%s0 + $0x188] sm:$0xf]
  %v128 = vld [vmem:[%s0 + $0x18c] sm:$0xf]
  %v129 = vld [vmem:[%s0 + $0x190] sm:$0xf]
  %v130 = vld [vmem:[%s0 + $0x194] sm:$0xf]
  %v131 = vld [vmem:[%s0 + $0x198] sm:$0xf]
  %v132 = vld [vmem:[%s0 + $0x19c] sm:$0xf]
  %v133 = vld [vmem:[%s0 + $0x1a0] sm:$0xf]
  %v134 = vld [vmem:[%s0 + $0x1a4] sm:$0xf]
  %v135 = vld [vmem:[%s0 + $0x1a8] sm:$0xf]
  %v136 = vld [vmem:[%s0 + $0x1ac] sm:$0xf]
  %v137 = vld [vmem:[%s0 + $0x1b0] sm:$0xf]
  %v138 = vld [vmem:[%s0 + $0x1b4] sm:$0xf]
  %v139 = vld [vmem:[%s0 + $0x1b8] sm:$0xf]
  %v140 = vld [vmem:[%s0 + $0x1bc] sm:$0xf]
  %v141 = vld [vmem:[%s0 + $0x1c0] sm:$0xf]
  %v142 = vld [vmem:[%s0 + $0x1c4] sm:$0xf]
  %v143 = vld [vmem:[%s0 + $0x1c8] sm:$0xf]
  %v144 = vld [vmem:[%s0 + $0x1cc] sm:$0xf]
  %v145 = vld [vmem:[%s0 + $0x1d0] sm:$0xf]
  %v146 = vld [vmem:[%s0 + $0x1d4] sm:$0xf]
  %v147 = vld [vmem:[%s0 + $0x1d8] sm:$0xf]
  %v148 = vld [vmem:[%s0 + $0x1dc] sm:$0xf]
  %v149 = vld [vmem:[%s0 + $0x1e0] sm:$0xf]
  %v150 = vld [vmem:[%s0 + $0x1e4] sm:$0xf]
  %v151 = vld [vmem:[%s0 + $0x1e8] sm:$0xf]
  %v152 = vld [vmem:[%s0 + $0x1ec] sm:$0xf]
  %v153 = vld [vmem:[%s0 + $0x1f0] sm:$0xf]
  %v154 = vld [vmem:[%s0 + $0x1f4] sm:$0xf]
  %v155 = vld [vmem:[%s0 + $0x1f8] sm:$0xf]
  %v156 = vld [vmem:[%s0 + $0x1fc] sm:$0xf]
  %v157 = vld [vmem:[%s0 + $0x200] sm:$0xf]
  %v158 = vld [vmem:[%s0 + $0x204] sm:$0xf]
  %v159 = vld [vmem:[%s0 + $0x208] sm:$0xf]
  %v160 = vld [vmem:[%s0 + $0x20c] sm:$0xf]
  %v161 = vld [vmem:[%s0 + $0x210] sm:$0xf]
  %v162 = vld [vmem:[%s0 + $0x214] sm:$0xf]
  %v163 = vld [vmem:[%s0 + $0x218] sm:$0xf]
  %v164 = vld [vmem:[%s0 + $0x21c] sm:$0xf]
  %v165 = vld [vmem:[%s0 + $0x220] sm:$0xf]
  %v166 = vld [vmem:[%s0 + $0x224] sm:$0xf]
  %v167 = vld [vmem:[%s0 + $0x228] sm:$0xf]
  %v168 = vld [vmem:[%s0 + $0x22c] sm:$0xf]
  %v169 = vld [vmem:[%s0 + $0x230] sm:$0xf]
  %v170 = vld [vmem:[%s0 + $0x234] sm:$0xf]
  %v171 = vld [vmem:[%s0 + $0x238] sm:$0xf]
  %v172 = vld [vmem:[%s0 + $0x23c] sm:$0xf]
  %v173 = vld [vmem:[%s1] sm:$0xf]
  %v174 = vld [vmem:[%s1 + $0x4] sm:$0xf]
  %v175 = vld [vmem:[%s1 + $0x8] sm:$0xf]
  %v176 = vld [vmem:[%s1 + $0xc] sm:$0xf]
  %v177 = vld [vmem:[%s1 + $0x10] sm:$0x3]
  %v178 = vld [vmem:[%s2] sm:$0x1]
  %v180 = vlaneseq
  %v181 = vshrl.u32 %v180, 7
  %v182 = vsub.s32 0, %v181
  %v183 = vrot.slane %v178, %v182
  %v329 = vunpack.c.l.b16 %v29
  %v330 = vunpack.c.l.b16 %v30
  %v331 = vunpack.c.l.b16 %v31
  %v332 = vunpack.c.l.b16 %v32
  %v333 = vunpack.c.l.b16 %v33
  %v334 = vunpack.c.l.b16 %v34
  %v335 = vunpack.c.l.b16 %v35
  %v336 = vunpack.c.l.b16 %v36
  %v337 = vunpack.c.l.b16 %v37
  %v338 = vunpack.c.l.b16 %v38
  %v339 = vunpack.c.l.b16 %v39
  %v340 = vunpack.c.l.b16 %v40
  %v341 = vunpack.c.l.b16 %v41
  %v342 = vunpack.c.l.b16 %v42
  %v343 = vunpack.c.l.b16 %v43
  %v344 = vunpack.c.l.b16 %v44
  %v345 = vunpack.c.l.b16 %v45
  %v346 = vunpack.c.l.b16 %v46
  %v347 = vunpack.c.l.b16 %v47
  %v348 = vunpack.c.l.b16 %v48
  %v349 = vunpack.c.l.b16 %v49
  %v350 = vunpack.c.l.b16 %v50
  %v351 = vunpack.c.l.b16 %v51
  %v352 = vunpack.c.l.b16 %v52
  %v353 = vunpack.c.l.b16 %v53
  %v354 = vunpack.c.l.b16 %v54
  %v355 = vunpack.c.l.b16 %v55
  %v356 = vunpack.c.l.b16 %v56
  %v357 = vunpack.c.l.b16 %v57
  %v358 = vunpack.c.l.b16 %v58
  %v359 = vunpack.c.l.b16 %v59
  %v360 = vunpack.c.l.b16 %v60
  %v361 = vunpack.c.l.b16 %v61
  %v362 = vunpack.c.l.b16 %v62
  %v363 = vunpack.c.l.b16 %v63
  %v364 = vunpack.c.l.b16 %v64
  %v365 = vunpack.c.l.b16 %v65
  %v366 = vunpack.c.l.b16 %v66
  %v367 = vunpack.c.l.b16 %v67
  %v368 = vunpack.c.l.b16 %v68
  %v369 = vunpack.c.l.b16 %v69
  %v370 = vunpack.c.l.b16 %v70
  %v371 = vunpack.c.l.b16 %v71
  %v372 = vunpack.c.l.b16 %v72
  %v373 = vunpack.c.l.b16 %v73
  %v374 = vunpack.c.l.b16 %v74
  %v375 = vunpack.c.l.b16 %v75
  %v376 = vunpack.c.l.b16 %v76
  %v377 = vunpack.c.l.b16 %v77
  %v378 = vunpack.c.l.b16 %v78
  %v379 = vunpack.c.l.b16 %v79
  %v380 = vunpack.c.l.b16 %v80
  %v381 = vunpack.c.l.b16 %v81
  %v382 = vunpack.c.l.b16 %v82
  %v383 = vunpack.c.l.b16 %v83
  %v384 = vunpack.c.l.b16 %v84
  %v385 = vunpack.c.l.b16 %v85
  %v386 = vunpack.c.l.b16 %v86
  %v387 = vunpack.c.l.b16 %v87
  %v388 = vunpack.c.l.b16 %v88
  %v389 = vunpack.c.l.b16 %v89
  %v390 = vunpack.c.l.b16 %v90
  %v391 = vunpack.c.l.b16 %v91
  %v392 = vunpack.c.l.b16 %v92
  %v393 = vunpack.c.l.b16 %v93
  %v394 = vunpack.c.l.b16 %v94
  %v395 = vunpack.c.l.b16 %v95
  %v396 = vunpack.c.l.b16 %v96
  %v397 = vunpack.c.l.b16 %v97
  %v398 = vunpack.c.l.b16 %v98
  %v399 = vunpack.c.l.b16 %v99
  %v400 = vunpack.c.l.b16 %v100
  %v401 = vunpack.c.l.b16 %v101
  %v402 = vunpack.c.l.b16 %v102
  %v403 = vunpack.c.l.b16 %v103
  %v404 = vunpack.c.l.b16 %v104
  %v405 = vunpack.c.l.b16 %v105
  %v406 = vunpack.c.l.b16 %v106
  %v407 = vunpack.c.l.b16 %v107
  %v408 = vunpack.c.l.b16 %v108
  %v409 = vunpack.c.l.b16 %v109
  %v410 = vunpack.c.l.b16 %v110
  %v411 = vunpack.c.l.b16 %v111
  %v412 = vunpack.c.l.b16 %v112
  %v413 = vunpack.c.l.b16 %v113
  %v414 = vunpack.c.l.b16 %v114
  %v415 = vunpack.c.l.b16 %v115
  %v416 = vunpack.c.l.b16 %v116
  %v417 = vunpack.c.l.b16 %v117
  %v418 = vunpack.c.l.b16 %v118
  %v419 = vunpack.c.l.b16 %v119
  %v420 = vunpack.c.l.b16 %v120
  %v421 = vunpack.c.l.b16 %v121
  %v422 = vunpack.c.l.b16 %v122
  %v423 = vunpack.c.l.b16 %v123
  %v424 = vunpack.c.l.b16 %v124
  %v425 = vunpack.c.l.b16 %v125
  %v426 = vunpack.c.l.b16 %v126
  %v427 = vunpack.c.l.b16 %v127
  %v428 = vunpack.c.l.b16 %v128
  %v429 = vunpack.c.l.b16 %v129
  %v430 = vunpack.c.l.b16 %v130
  %v431 = vunpack.c.l.b16 %v131
  %v432 = vunpack.c.l.b16 %v132
  %v433 = vunpack.c.l.b16 %v133
  %v434 = vunpack.c.l.b16 %v134
  %v435 = vunpack.c.l.b16 %v135
  %v436 = vunpack.c.l.b16 %v136
  %v437 = vunpack.c.l.b16 %v137
  %v438 = vunpack.c.l.b16 %v138
  %v439 = vunpack.c.l.b16 %v139
  %v440 = vunpack.c.l.b16 %v140
  %v441 = vunpack.c.l.b16 %v141
  %v442 = vunpack.c.l.b16 %v142
  %v443 = vunpack.c.l.b16 %v143
  %v444 = vunpack.c.l.b16 %v144
  %v445 = vunpack.c.l.b16 %v145
  %v446 = vunpack.c.l.b16 %v146
  %v447 = vunpack.c.l.b16 %v147
  %v448 = vunpack.c.l.b16 %v148
  %v449 = vunpack.c.l.b16 %v149
  %v450 = vunpack.c.l.b16 %v150
  %v451 = vunpack.c.l.b16 %v151
  %v452 = vunpack.c.l.b16 %v152
  %v453 = vunpack.c.l.b16 %v153
  %v454 = vunpack.c.l.b16 %v154
  %v455 = vunpack.c.l.b16 %v155
  %v456 = vunpack.c.l.b16 %v156
  %v457 = vunpack.c.l.b16 %v157
  %v458 = vunpack.c.l.b16 %v158
  %v459 = vunpack.c.l.b16 %v159
  %v460 = vunpack.c.l.b16 %v160
  %v461 = vunpack.c.l.b16 %v161
  %v462 = vunpack.c.l.b16 %v162
  %v463 = vunpack.c.l.b16 %v163
  %v464 = vunpack.c.l.b16 %v164
  %v465 = vunpack.c.l.b16 %v165
  %v466 = vunpack.c.l.b16 %v166
  %v467 = vunpack.c.l.b16 %v167
  %v468 = vunpack.c.l.b16 %v168
  %v469 = vunpack.c.l.b16 %v169
  %v470 = vunpack.c.l.b16 %v170
  %v471 = vunpack.c.l.b16 %v171
  %v472 = vunpack.c.l.b16 %v172
  %v473 = vpack.c.b16 %v330, %v329
  %v474 = vpack.c.b16 %v332, %v331
  %v475 = vpack.c.b16 %v334, %v333
  %v476 = vpack.c.b16 %v336, %v335
  %v477 = vpack.c.b16 %v338, %v337
  %v478 = vpack.c.b16 %v340, %v339
  %v479 = vpack.c.b16 %v342, %v341
  %v480 = vpack.c.b16 %v344, %v343
  %v481 = vpack.c.b16 %v346, %v345
  %v482 = vpack.c.b16 %v348, %v347
  %v483 = vpack.c.b16 %v350, %v349
  %v484 = vpack.c.b16 %v352, %v351
  %v485 = vpack.c.b16 %v354, %v353
  %v486 = vpack.c.b16 %v356, %v355
  %v487 = vpack.c.b16 %v358, %v357
  %v488 = vpack.c.b16 %v360, %v359
  %v489 = vpack.c.b16 %v362, %v361
  %v490 = vpack.c.b16 %v364, %v363
  %v491 = vpack.c.b16 %v366, %v365
  %v492 = vpack.c.b16 %v368, %v367
  %v493 = vpack.c.b16 %v370, %v369
  %v494 = vpack.c.b16 %v372, %v371
  %v495 = vpack.c.b16 %v374, %v373
  %v496 = vpack.c.b16 %v376, %v375
  %v497 = vpack.c.b16 %v378, %v377
  %v498 = vpack.c.b16 %v380, %v379
  %v499 = vpack.c.b16 %v382, %v381
  %v500 = vpack.c.b16 %v384, %v383
  %v501 = vpack.c.b16 %v386, %v385
  %v502 = vpack.c.b16 %v388, %v387
  %v503 = vpack.c.b16 %v390, %v389
  %v504 = vpack.c.b16 %v392, %v391
  %v505 = vpack.c.b16 %v394, %v393
  %v506 = vpack.c.b16 %v396, %v395
  %v507 = vpack.c.b16 %v398, %v397
  %v508 = vpack.c.b16 %v400, %v399
  %v509 = vpack.c.b16 %v402, %v401
  %v510 = vpack.c.b16 %v404, %v403
  %v511 = vpack.c.b16 %v406, %v405
  %v512 = vpack.c.b16 %v408, %v407
  %v513 = vpack.c.b16 %v410, %v409
  %v514 = vpack.c.b16 %v412, %v411
  %v515 = vpack.c.b16 %v414, %v413
  %v516 = vpack.c.b16 %v416, %v415
  %v517 = vpack.c.b16 %v418, %v417
  %v518 = vpack.c.b16 %v420, %v419
  %v519 = vpack.c.b16 %v422, %v421
  %v520 = vpack.c.b16 %v424, %v423
  %v521 = vpack.c.b16 %v426, %v425
  %v522 = vpack.c.b16 %v428, %v427
  %v523 = vpack.c.b16 %v430, %v429
  %v524 = vpack.c.b16 %v432, %v431
  %v525 = vpack.c.b16 %v434, %v433
  %v526 = vpack.c.b16 %v436, %v435
  %v527 = vpack.c.b16 %v438, %v437
  %v528 = vpack.c.b16 %v440, %v439
  %v529 = vpack.c.b16 %v442, %v441
  %v530 = vpack.c.b16 %v444, %v443
  %v531 = vpack.c.b16 %v446, %v445
  %v532 = vpack.c.b16 %v448, %v447
  %v533 = vpack.c.b16 %v450, %v449
  %v534 = vpack.c.b16 %v452, %v451
  %v535 = vpack.c.b16 %v454, %v453
  %v536 = vpack.c.b16 %v456, %v455
  %v537 = vpack.c.b16 %v458, %v457
  %v538 = vpack.c.b16 %v460, %v459
  %v539 = vpack.c.b16 %v462, %v461
  %v540 = vpack.c.b16 %v464, %v463
  %v541 = vpack.c.b16 %v466, %v465
  %v542 = vpack.c.b16 %v468, %v467
  %v543 = vpack.c.b16 %v470, %v469
  %v544 = vpack.c.b16 %v472, %v471
  %v550 = vunpack.c.l.b16 %v173
  %v551 = vunpack.c.l.b16 %v174
  %v552 = vunpack.c.l.b16 %v175
  %v553 = vunpack.c.l.b16 %v176
  %v554 = vunpack.c.l.b16 %v177
  %v555 = vpack.c.b16 %v551, %v550
  %v556 = vpack.c.b16 %v553, %v552
  %v557 = vpack.c.b16 %v554, %v554
  %vm560 = vcmask 293888
  %v562 = vsel %vm560, %v473, 0
  %v565 = vsel %vm560, %v474, 0
  %v568 = vsel %vm560, %v475, 0
  %v571 = vsel %vm560, %v476, 0
  %v574 = vsel %vm560, %v477, 0
  %v577 = vsel %vm560, %v478, 0
  %v580 = vsel %vm560, %v479, 0
  %v583 = vsel %vm560, %v480, 0
  %v586 = vsel %vm560, %v481, 0
  %v589 = vsel %vm560, %v482, 0
  %v592 = vsel %vm560, %v483, 0
  %v595 = vsel %vm560, %v484, 0
  %v598 = vsel %vm560, %v485, 0
  %v601 = vsel %vm560, %v486, 0
  %v604 = vsel %vm560, %v487, 0
  %v607 = vsel %vm560, %v488, 0
  %v610 = vsel %vm560, %v489, 0
  %v613 = vsel %vm560, %v490, 0
  %v616 = vsel %vm560, %v491, 0
  %v619 = vsel %vm560, %v492, 0
  %v622 = vsel %vm560, %v493, 0
  %v625 = vsel %vm560, %v494, 0
  %v628 = vsel %vm560, %v495, 0
  %v631 = vsel %vm560, %v496, 0
  %v634 = vsel %vm560, %v497, 0
  %v637 = vsel %vm560, %v498, 0
  %v640 = vsel %vm560, %v499, 0
  %v643 = vsel %vm560, %v500, 0
  %v646 = vsel %vm560, %v501, 0
  %v649 = vsel %vm560, %v502, 0
  %v652 = vsel %vm560, %v503, 0
  %v655 = vsel %vm560, %v504, 0
  %v658 = vsel %vm560, %v505, 0
  %v661 = vsel %vm560, %v506, 0
  %v664 = vsel %vm560, %v507, 0
  %v667 = vsel %vm560, %v508, 0
  %v670 = vsel %vm560, %v509, 0
  %v673 = vsel %vm560, %v510, 0
  %v676 = vsel %vm560, %v511, 0
  %v679 = vsel %vm560, %v512, 0
  %v682 = vsel %vm560, %v513, 0
  %v685 = vsel %vm560, %v514, 0
  %v688 = vsel %vm560, %v515, 0
  %v691 = vsel %vm560, %v516, 0
  %v694 = vsel %vm560, %v517, 0
  %v697 = vsel %vm560, %v518, 0
  %v700 = vsel %vm560, %v519, 0
  %v703 = vsel %vm560, %v520, 0
  %v706 = vsel %vm560, %v521, 0
  %v709 = vsel %vm560, %v522, 0
  %v712 = vsel %vm560, %v523, 0
  %v715 = vsel %vm560, %v524, 0
  %v718 = vsel %vm560, %v525, 0
  %v721 = vsel %vm560, %v526, 0
  %v724 = vsel %vm560, %v527, 0
  %v727 = vsel %vm560, %v528, 0
  %v730 = vsel %vm560, %v529, 0
  %v733 = vsel %vm560, %v530, 0
  %v736 = vsel %vm560, %v531, 0
  %v739 = vsel %vm560, %v532, 0
  %v742 = vsel %vm560, %v533, 0
  %v745 = vsel %vm560, %v534, 0
  %v748 = vsel %vm560, %v535, 0
  %v751 = vsel %vm560, %v536, 0
  %v754 = vsel %vm560, %v537, 0
  %v757 = vsel %vm560, %v538, 0
  %v760 = vsel %vm560, %v539, 0
  %v763 = vsel %vm560, %v540, 0
  %v766 = vsel %vm560, %v541, 0
  %v769 = vsel %vm560, %v542, 0
  %v772 = vsel %vm560, %v543, 0
  %v775 = vsel %vm560, %v544, 0
  %vm777 = vcmask 1041408
  %v779 = vsel %vm777, %v557, 0
  %781 = vmatprep.subr.bf16.mxu0 0
  %782 = vmatpush1.bf16.msra.mxu0 %v555
  %783 = vmatprep.subr.bf16.mxu0 0
  %784 = vmatpush1.bf16.msra.mxu0 %v556
  %785 = vmatprep.subr.bf16.mxu0 0
  %786 = vmatpush1.bf16.msra.mxu0 %v779
  %787 = vmatprep.subr.bf16.mxu0 0
  %788 = vmatpush1.bf16.msra.mxu0 0
  %789 = vmatprep.subr.bf16.mxu0 0
  %790 = vmatpush1.bf16.msra.mxu0 0
  %791 = vmatprep.subr.bf16.mxu0 0
  %792 = vmatpush1.bf16.msra.mxu0 0
  %793 = vmatprep.subr.bf16.mxu0 0
  %794 = vmatpush1.bf16.msra.mxu0 0
  %795 = vmatprep.subr.bf16.mxu0 0
  %796 = vmatpush1.bf16.msra.mxu0 0
  %797 = vmatprep.subr.bf16.mxu0 0
  %798 = vmatpush1.bf16.msra.mxu0 0
  %799 = vmatprep.subr.bf16.mxu0 0
  %800 = vmatpush1.bf16.msra.mxu0 0
  %801 = vmatprep.subr.bf16.mxu0 0
  %802 = vmatpush1.bf16.msra.mxu0 0
  %803 = vmatprep.subr.bf16.mxu0 0
  %804 = vmatpush1.bf16.msra.mxu0 0
  %805 = vmatprep.subr.bf16.mxu0 0
  %806 = vmatpush1.bf16.msra.mxu0 0
  %807 = vmatprep.subr.bf16.mxu0 0
  %808 = vmatpush1.bf16.msra.mxu0 0
  %809 = vmatprep.subr.bf16.mxu0 0
  %810 = vmatpush1.bf16.msra.mxu0 0
  %811 = vmatprep.subr.bf16.mxu0 0
  %812 = vmatpush1.bf16.msra.mxu0 0
  %813 = vmatprep.mubr.bf16.mxu0 0
  %814 = vmatmul.mubr.bf16.gmra.mrb[0].mxu0 %v562
  %v815 = vpop.f32.mrb[0].mxu0
  %v816 = vadd.f32 %v183, %v815
  %v817 = vpop.f32.mrb[0].mxu0
  %v818 = vpop.f32.mrb[0].mxu0
  %v819 = vadd.f32 %v183, %v818
  %v820 = vpop.f32.mrb[0].mxu0
  %821 = vmatprep.mubr.bf16.mxu0 0
  %822 = vmatmul.mubr.bf16.gmra.mrb[0].mxu0 %v565
  %v823 = vpop.f32.mrb[0].mxu0
  %v824 = vadd.f32 %v183, %v823
  %v825 = vpop.f32.mrb[0].mxu0
  %v826 = vpop.f32.mrb[0].mxu0
  %v827 = vadd.f32 %v183, %v826
  %v828 = vpop.f32.mrb[0].mxu0
  %829 = vmatprep.mubr.bf16.mxu0 0
  %830 = vmatmul.mubr.bf16.gmra.mrb[0].mxu0 %v568
  %v831 = vpop.f32.mrb[0].mxu0
  %v832 = vadd.f32 %v183, %v831
  %v833 = vpop.f32.mrb[0].mxu0
  %v834 = vpop.f32.mrb[0].mxu0
  %v835 = vadd.f32 %v183, %v834
  %v836 = vpop.f32.mrb[0].mxu0
  %837 = vmatprep.mubr.bf16.mxu0 0
  %838 = vmatmul.mubr.bf16.gmra.mrb[0].mxu0 %v571
  %v839 = vpop.f32.mrb[0].mxu0
  %v840 = vadd.f32 %v183, %v839
  %v841 = vpop.f32.mrb[0].mxu0
  %v842 = vpop.f32.mrb[0].mxu0
  %v843 = vadd.f32 %v183, %v842
  %v844 = vpop.f32.mrb[0].mxu0
  %845 = vmatprep.mubr.bf16.mxu0 0
  %846 = vmatmul.mubr.bf16.gmra.mrb[0].mxu0 %v574
  %v847 = vpop.f32.mrb[0].mxu0
  %v848 = vadd.f32 %v183, %v847
  %v849 = vpop.f32.mrb[0].mxu0
  %v850 = vpop.f32.mrb[0].mxu0
  %v851 = vadd.f32 %v183, %v850
  %v852 = vpop.f32.mrb[0].mxu0
  %853 = vmatprep.mubr.bf16.mxu0 0
  %854 = vmatmul.mubr.bf16.gmra.mrb[0].mxu0 %v577
  %v855 = vpop.f32.mrb[0].mxu0
  %v856 = vadd.f32 %v183, %v855
  %v857 = vpop.f32.mrb[0].mxu0
  %v858 = vpop.f32.mrb[0].mxu0
  %v859 = vadd.f32 %v183, %v858
  %v860 = vpop.f32.mrb[0].mxu0
  %861 = vmatprep.mubr.bf16.mxu0 0
  %862 = vmatmul.mubr.bf16.gmra.mrb[0].mxu0 %v580
  %v863 = vpop.f32.mrb[0].mxu0
  %v864 = vadd.f32 %v183, %v863
  %v865 = vpop.f32.mrb[0].mxu0
  %v866 = vpop.f32.mrb[0].mxu0
  %v867 = vadd.f32 %v183, %v866
  %v868 = vpop.f32.mrb[0].mxu0
  %869 = vmatprep.mubr.bf16.mxu0 0
  %870 = vmatmul.mubr.bf16.gmra.mrb[0].mxu0 %v583
  %v871 = vpop.f32.mrb[0].mxu0
  %v872 = vadd.f32 %v183, %v871
  %v873 = vpop.f32.mrb[0].mxu0
  %v874 = vpop.f32.mrb[0].mxu0
  %v875 = vadd.f32 %v183, %v874
  %v876 = vpop.f32.mrb[0].mxu0
  %877 = vmatprep.mubr.bf16.mxu0 0
  %878 = vmatmul.mubr.bf16.gmra.mrb[0].mxu0 %v586
  %v879 = vpop.f32.mrb[0].mxu0
  %v880 = vadd.f32 %v183, %v879
  %v881 = vpop.f32.mrb[0].mxu0
  %v882 = vpop.f32.mrb[0].mxu0
  %v883 = vadd.f32 %v183, %v882
  %v884 = vpop.f32.mrb[0].mxu0
  %885 = vmatprep.mubr.bf16.mxu0 0
  %886 = vmatmul.mubr.bf16.gmra.mrb[0].mxu0 %v589
  %v887 = vpop.f32.mrb[0].mxu0
  %v888 = vadd.f32 %v183, %v887
  %v889 = vpop.f32.mrb[0].mxu0
  %v890 = vpop.f32.mrb[0].mxu0
  %v891 = vadd.f32 %v183, %v890
  %v892 = vpop.f32.mrb[0].mxu0
  %893 = vmatprep.mubr.bf16.mxu0 0
  %894 = vmatmul.mubr.bf16.gmra.mrb[0].mxu0 %v592
  %v895 = vpop.f32.mrb[0].mxu0
  %v896 = vadd.f32 %v183, %v895
  %v897 = vpop.f32.mrb[0].mxu0
  %v898 = vpop.f32.mrb[0].mxu0
  %v899 = vadd.f32 %v183, %v898
  %v900 = vpop.f32.mrb[0].mxu0
  %901 = vmatprep.mubr.bf16.mxu0 0
  %902 = vmatmul.mubr.bf16.gmra.mrb[0].mxu0 %v595
  %v903 = vpop.f32.mrb[0].mxu0
  %v904 = vadd.f32 %v183, %v903
  %v905 = vpop.f32.mrb[0].mxu0
  %v906 = vpop.f32.mrb[0].mxu0
  %v907 = vadd.f32 %v183, %v906
  %v908 = vpop.f32.mrb[0].mxu0
  %909 = vmatprep.mubr.bf16.mxu0 0
  %910 = vmatmul.mubr.bf16.gmra.mrb[0].mxu0 %v598
  %v911 = vpop.f32.mrb[0].mxu0
  %v912 = vadd.f32 %v183, %v911
  %v913 = vpop.f32.mrb[0].mxu0
  %v914 = vpop.f32.mrb[0].mxu0
  %v915 = vadd.f32 %v183, %v914
  %v916 = vpop.f32.mrb[0].mxu0
  %917 = vmatprep.mubr.bf16.mxu0 0
  %918 = vmatmul.mubr.bf16.gmra.mrb[0].mxu0 %v601
  %v919 = vpop.f32.mrb[0].mxu0
  %v920 = vadd.f32 %v183, %v919
  %v921 = vpop.f32.mrb[0].mxu0
  %v922 = vpop.f32.mrb[0].mxu0
  %v923 = vadd.f32 %v183, %v922
  %v924 = vpop.f32.mrb[0].mxu0
  %925 = vmatprep.mubr.bf16.mxu0 0
  %926 = vmatmul.mubr.bf16.gmra.mrb[0].mxu0 %v604
  %v927 = vpop.f32.mrb[0].mxu0
  %v928 = vadd.f32 %v183, %v927
  %v929 = vpop.f32.mrb[0].mxu0
  %v930 = vpop.f32.mrb[0].mxu0
  %v931 = vadd.f32 %v183, %v930
  %v932 = vpop.f32.mrb[0].mxu0
  %933 = vmatprep.mubr.bf16.mxu0 0
  %934 = vmatmul.mubr.bf16.gmra.mrb[0].mxu0 %v607
  %v935 = vpop.f32.mrb[0].mxu0
  %v936 = vadd.f32 %v183, %v935
  %v937 = vpop.f32.mrb[0].mxu0
  %v938 = vpop.f32.mrb[0].mxu0
  %v939 = vadd.f32 %v183, %v938
  %v940 = vpop.f32.mrb[0].mxu0
  %941 = vmatprep.mubr.bf16.mxu0 0
  %942 = vmatmul.mubr.bf16.gmra.mrb[0].mxu0 %v610
  %v943 = vpop.f32.mrb[0].mxu0
  %v944 = vadd.f32 %v183, %v943
  %v945 = vpop.f32.mrb[0].mxu0
  %v946 = vpop.f32.mrb[0].mxu0
  %v947 = vadd.f32 %v183, %v946
  %v948 = vpop.f32.mrb[0].mxu0
  %949 = vmatprep.mubr.bf16.mxu0 0
  %950 = vmatmul.mubr.bf16.gmra.mrb[0].mxu0 %v613
  %v951 = vpop.f32.mrb[0].mxu0
  %v952 = vadd.f32 %v183, %v951
  %v953 = vpop.f32.mrb[0].mxu0
  %v954 = vpop.f32.mrb[0].mxu0
  %v955 = vadd.f32 %v183, %v954
  %v956 = vpop.f32.mrb[0].mxu0
  %957 = vmatprep.mubr.bf16.mxu0 0
  %958 = vmatmul.mubr.bf16.gmra.mrb[0].mxu0 %v616
  %v959 = vpop.f32.mrb[0].mxu0
  %v960 = vadd.f32 %v183, %v959
  %v961 = vpop.f32.mrb[0].mxu0
  %v962 = vpop.f32.mrb[0].mxu0
  %v963 = vadd.f32 %v183, %v962
  %v964 = vpop.f32.mrb[0].mxu0
  %965 = vmatprep.mubr.bf16.mxu0 0
  %966 = vmatmul.mubr.bf16.gmra.mrb[0].mxu0 %v619
  %v967 = vpop.f32.mrb[0].mxu0
  %v968 = vadd.f32 %v183, %v967
  %v969 = vpop.f32.mrb[0].mxu0
  %v970 = vpop.f32.mrb[0].mxu0
  %v971 = vadd.f32 %v183, %v970
  %v972 = vpop.f32.mrb[0].mxu0
  %973 = vmatprep.mubr.bf16.mxu0 0
  %974 = vmatmul.mubr.bf16.gmra.mrb[0].mxu0 %v622
  %v975 = vpop.f32.mrb[0].mxu0
  %v976 = vadd.f32 %v183, %v975
  %v977 = vpop.f32.mrb[0].mxu0
  %v978 = vpop.f32.mrb[0].mxu0
  %v979 = vadd.f32 %v183, %v978
  %v980 = vpop.f32.mrb[0].mxu0
  %981 = vmatprep.mubr.bf16.mxu0 0
  %982 = vmatmul.mubr.bf16.gmra.mrb[0].mxu0 %v625
  %v983 = vpop.f32.mrb[0].mxu0
  %v984 = vadd.f32 %v183, %v983
  %v985 = vpop.f32.mrb[0].mxu0
  %v986 = vpop.f32.mrb[0].mxu0
  %v987 = vadd.f32 %v183, %v986
  %v988 = vpop.f32.mrb[0].mxu0
  %989 = vmatprep.mubr.bf16.mxu0 0
  %990 = vmatmul.mubr.bf16.gmra.mrb[0].mxu0 %v628
  %v991 = vpop.f32.mrb[0].mxu0
  %v992 = vadd.f32 %v183, %v991
  %v993 = vpop.f32.mrb[0].mxu0
  %v994 = vpop.f32.mrb[0].mxu0
  %v995 = vadd.f32 %v183, %v994
  %v996 = vpop.f32.mrb[0].mxu0
  %997 = vmatprep.mubr.bf16.mxu0 0
  %998 = vmatmul.mubr.bf16.gmra.mrb[0].mxu0 %v631
  %v999 = vpop.f32.mrb[0].mxu0
  %v1000 = vadd.f32 %v183, %v999
  %v1001 = vpop.f32.mrb[0].mxu0
  %v1002 = vpop.f32.mrb[0].mxu0
  %v1003 = vadd.f32 %v183, %v1002
  %v1004 = vpop.f32.mrb[0].mxu0
  %1005 = vmatprep.mubr.bf16.mxu0 0
  %1006 = vmatmul.mubr.bf16.gmra.mrb[0].mxu0 %v634
  %v1007 = vpop.f32.mrb[0].mxu0
  %v1008 = vadd.f32 %v183, %v1007
  %v1009 = vpop.f32.mrb[0].mxu0
  %v1010 = vpop.f32.mrb[0].mxu0
  %v1011 = vadd.f32 %v183, %v1010
  %v1012 = vpop.f32.mrb[0].mxu0
  %1013 = vmatprep.mubr.bf16.mxu0 0
  %1014 = vmatmul.mubr.bf16.gmra.mrb[0].mxu0 %v637
  %v1015 = vpop.f32.mrb[0].mxu0
  %v1016 = vadd.f32 %v183, %v1015
  %v1017 = vpop.f32.mrb[0].mxu0
  %v1018 = vpop.f32.mrb[0].mxu0
  %v1019 = vadd.f32 %v183, %v1018
  %v1020 = vpop.f32.mrb[0].mxu0
  %1021 = vmatprep.mubr.bf16.mxu0 0
  %1022 = vmatmul.mubr.bf16.gmra.mrb[0].mxu0 %v640
  %v1023 = vpop.f32.mrb[0].mxu0
  %v1024 = vadd.f32 %v183, %v1023
  %v1025 = vpop.f32.mrb[0].mxu0
  %v1026 = vpop.f32.mrb[0].mxu0
  %v1027 = vadd.f32 %v183, %v1026
  %v1028 = vpop.f32.mrb[0].mxu0
  %1029 = vmatprep.mubr.bf16.mxu0 0
  %1030 = vmatmul.mubr.bf16.gmra.mrb[0].mxu0 %v643
  %v1031 = vpop.f32.mrb[0].mxu0
  %v1032 = vadd.f32 %v183, %v1031
  %v1033 = vpop.f32.mrb[0].mxu0
  %v1034 = vpop.f32.mrb[0].mxu0
  %v1035 = vadd.f32 %v183, %v1034
  %v1036 = vpop.f32.mrb[0].mxu0
  %1037 = vmatprep.mubr.bf16.mxu0 0
  %1038 = vmatmul.mubr.bf16.gmra.mrb[0].mxu0 %v646
  %v1039 = vpop.f32.mrb[0].mxu0
  %v1040 = vadd.f32 %v183, %v1039
  %v1041 = vpop.f32.mrb[0].mxu0
  %v1042 = vpop.f32.mrb[0].mxu0
  %v1043 = vadd.f32 %v183, %v1042
  %v1044 = vpop.f32.mrb[0].mxu0
  %1045 = vmatprep.mubr.bf16.mxu0 0
  %1046 = vmatmul.mubr.bf16.gmra.mrb[0].mxu0 %v649
  %v1047 = vpop.f32.mrb[0].mxu0
  %v1048 = vadd.f32 %v183, %v1047
  %v1049 = vpop.f32.mrb[0].mxu0
  %v1050 = vpop.f32.mrb[0].mxu0
  %v1051 = vadd.f32 %v183, %v1050
  %v1052 = vpop.f32.mrb[0].mxu0
  %1053 = vmatprep.mubr.bf16.mxu0 0
  %1054 = vmatmul.mubr.bf16.gmra.mrb[0].mxu0 %v652
  %v1055 = vpop.f32.mrb[0].mxu0
  %v1056 = vadd.f32 %v183, %v1055
  %v1057 = vpop.f32.mrb[0].mxu0
  %v1058 = vpop.f32.mrb[0].mxu0
  %v1059 = vadd.f32 %v183, %v1058
  %v1060 = vpop.f32.mrb[0].mxu0
  %1061 = vmatprep.mubr.bf16.mxu0 0
  %1062 = vmatmul.mubr.bf16.gmra.mrb[0].mxu0 %v655
  %v1063 = vpop.f32.mrb[0].mxu0
  %v1064 = vadd.f32 %v183, %v1063
  %v1065 = vpop.f32.mrb[0].mxu0
  %v1066 = vpop.f32.mrb[0].mxu0
  %v1067 = vadd.f32 %v183, %v1066
  %v1068 = vpop.f32.mrb[0].mxu0
  %1069 = vmatprep.mubr.bf16.mxu0 0
  %1070 = vmatmul.mubr.bf16.gmra.mrb[0].mxu0 %v658
  %v1071 = vpop.f32.mrb[0].mxu0
  %v1072 = vadd.f32 %v183, %v1071
  %v1073 = vpop.f32.mrb[0].mxu0
  %v1074 = vpop.f32.mrb[0].mxu0
  %v1075 = vadd.f32 %v183, %v1074
  %v1076 = vpop.f32.mrb[0].mxu0
  %1077 = vmatprep.mubr.bf16.mxu0 0
  %1078 = vmatmul.mubr.bf16.gmra.mrb[0].mxu0 %v661
  %v1079 = vpop.f32.mrb[0].mxu0
  %v1080 = vadd.f32 %v183, %v1079
  %v1081 = vpop.f32.mrb[0].mxu0
  %v1082 = vpop.f32.mrb[0].mxu0
  %v1083 = vadd.f32 %v183, %v1082
  %v1084 = vpop.f32.mrb[0].mxu0
  %1085 = vmatprep.mubr.bf16.mxu0 0
  %1086 = vmatmul.mubr.bf16.gmra.mrb[0].mxu0 %v664
  %v1087 = vpop.f32.mrb[0].mxu0
  %v1088 = vadd.f32 %v183, %v1087
  %v1089 = vpop.f32.mrb[0].mxu0
  %v1090 = vpop.f32.mrb[0].mxu0
  %v1091 = vadd.f32 %v183, %v1090
  %v1092 = vpop.f32.mrb[0].mxu0
  %1093 = vmatprep.mubr.bf16.mxu0 0
  %1094 = vmatmul.mubr.bf16.gmra.mrb[0].mxu0 %v667
  %v1095 = vpop.f32.mrb[0].mxu0
  %v1096 = vadd.f32 %v183, %v1095
  %v1097 = vpop.f32.mrb[0].mxu0
  %v1098 = vpop.f32.mrb[0].mxu0
  %v1099 = vadd.f32 %v183, %v1098
  %v1100 = vpop.f32.mrb[0].mxu0
  %1101 = vmatprep.mubr.bf16.mxu0 0
  %1102 = vmatmul.mubr.bf16.gmra.mrb[0].mxu0 %v670
  %v1103 = vpop.f32.mrb[0].mxu0
  %v1104 = vadd.f32 %v183, %v1103
  %v1105 = vpop.f32.mrb[0].mxu0
  %v1106 = vpop.f32.mrb[0].mxu0
  %v1107 = vadd.f32 %v183, %v1106
  %v1108 = vpop.f32.mrb[0].mxu0
  %1109 = vmatprep.mubr.bf16.mxu0 0
  %1110 = vmatmul.mubr.bf16.gmra.mrb[0].mxu0 %v673
  %v1111 = vpop.f32.mrb[0].mxu0
  %v1112 = vadd.f32 %v183, %v1111
  %v1113 = vpop.f32.mrb[0].mxu0
  %v1114 = vpop.f32.mrb[0].mxu0
  %v1115 = vadd.f32 %v183, %v1114
  %v1116 = vpop.f32.mrb[0].mxu0
  %1117 = vmatprep.mubr.bf16.mxu0 0
  %1118 = vmatmul.mubr.bf16.gmra.mrb[0].mxu0 %v676
  %v1119 = vpop.f32.mrb[0].mxu0
  %v1120 = vadd.f32 %v183, %v1119
  %v1121 = vpop.f32.mrb[0].mxu0
  %v1122 = vpop.f32.mrb[0].mxu0
  %v1123 = vadd.f32 %v183, %v1122
  %v1124 = vpop.f32.mrb[0].mxu0
  %1125 = vmatprep.mubr.bf16.mxu0 0
  %1126 = vmatmul.mubr.bf16.gmra.mrb[0].mxu0 %v679
  %v1127 = vpop.f32.mrb[0].mxu0
  %v1128 = vadd.f32 %v183, %v1127
  %v1129 = vpop.f32.mrb[0].mxu0
  %v1130 = vpop.f32.mrb[0].mxu0
  %v1131 = vadd.f32 %v183, %v1130
  %v1132 = vpop.f32.mrb[0].mxu0
  %1133 = vmatprep.mubr.bf16.mxu0 0
  %1134 = vmatmul.mubr.bf16.gmra.mrb[0].mxu0 %v682
  %v1135 = vpop.f32.mrb[0].mxu0
  %v1136 = vadd.f32 %v183, %v1135
  %v1137 = vpop.f32.mrb[0].mxu0
  %v1138 = vpop.f32.mrb[0].mxu0
  %v1139 = vadd.f32 %v183, %v1138
  %v1140 = vpop.f32.mrb[0].mxu0
  %1141 = vmatprep.mubr.bf16.mxu0 0
  %1142 = vmatmul.mubr.bf16.gmra.mrb[0].mxu0 %v685
  %v1143 = vpop.f32.mrb[0].mxu0
  %v1144 = vadd.f32 %v183, %v1143
  %v1145 = vpop.f32.mrb[0].mxu0
  %v1146 = vpop.f32.mrb[0].mxu0
  %v1147 = vadd.f32 %v183, %v1146
  %v1148 = vpop.f32.mrb[0].mxu0
  %1149 = vmatprep.mubr.bf16.mxu0 0
  %1150 = vmatmul.mubr.bf16.gmra.mrb[0].mxu0 %v688
  %v1151 = vpop.f32.mrb[0].mxu0
  %v1152 = vadd.f32 %v183, %v1151
  %v1153 = vpop.f32.mrb[0].mxu0
  %v1154 = vpop.f32.mrb[0].mxu0
  %v1155 = vadd.f32 %v183, %v1154
  %v1156 = vpop.f32.mrb[0].mxu0
  %1157 = vmatprep.mubr.bf16.mxu0 0
  %1158 = vmatmul.mubr.bf16.gmra.mrb[0].mxu0 %v691
  %v1159 = vpop.f32.mrb[0].mxu0
  %v1160 = vadd.f32 %v183, %v1159
  %v1161 = vpop.f32.mrb[0].mxu0
  %v1162 = vpop.f32.mrb[0].mxu0
  %v1163 = vadd.f32 %v183, %v1162
  %v1164 = vpop.f32.mrb[0].mxu0
  %1165 = vmatprep.mubr.bf16.mxu0 0
  %1166 = vmatmul.mubr.bf16.gmra.mrb[0].mxu0 %v694
  %v1167 = vpop.f32.mrb[0].mxu0
  %v1168 = vadd.f32 %v183, %v1167
  %v1169 = vpop.f32.mrb[0].mxu0
  %v1170 = vpop.f32.mrb[0].mxu0
  %v1171 = vadd.f32 %v183, %v1170
  %v1172 = vpop.f32.mrb[0].mxu0
  %1173 = vmatprep.mubr.bf16.mxu0 0
  %1174 = vmatmul.mubr.bf16.gmra.mrb[0].mxu0 %v697
  %v1175 = vpop.f32.mrb[0].mxu0
  %v1176 = vadd.f32 %v183, %v1175
  %v1177 = vpop.f32.mrb[0].mxu0
  %v1178 = vpop.f32.mrb[0].mxu0
  %v1179 = vadd.f32 %v183, %v1178
  %v1180 = vpop.f32.mrb[0].mxu0
  %1181 = vmatprep.mubr.bf16.mxu0 0
  %1182 = vmatmul.mubr.bf16.gmra.mrb[0].mxu0 %v700
  %v1183 = vpop.f32.mrb[0].mxu0
  %v1184 = vadd.f32 %v183, %v1183
  %v1185 = vpop.f32.mrb[0].mxu0
  %v1186 = vpop.f32.mrb[0].mxu0
  %v1187 = vadd.f32 %v183, %v1186
  %v1188 = vpop.f32.mrb[0].mxu0
  %1189 = vmatprep.mubr.bf16.mxu0 0
  %1190 = vmatmul.mubr.bf16.gmra.mrb[0].mxu0 %v703
  %v1191 = vpop.f32.mrb[0].mxu0
  %v1192 = vadd.f32 %v183, %v1191
  %v1193 = vpop.f32.mrb[0].mxu0
  %v1194 = vpop.f32.mrb[0].mxu0
  %v1195 = vadd.f32 %v183, %v1194
  %v1196 = vpop.f32.mrb[0].mxu0
  %1197 = vmatprep.mubr.bf16.mxu0 0
  %1198 = vmatmul.mubr.bf16.gmra.mrb[0].mxu0 %v706
  %v1199 = vpop.f32.mrb[0].mxu0
  %v1200 = vadd.f32 %v183, %v1199
  %v1201 = vpop.f32.mrb[0].mxu0
  %v1202 = vpop.f32.mrb[0].mxu0
  %v1203 = vadd.f32 %v183, %v1202
  %v1204 = vpop.f32.mrb[0].mxu0
  %1205 = vmatprep.mubr.bf16.mxu0 0
  %1206 = vmatmul.mubr.bf16.gmra.mrb[0].mxu0 %v709
  %v1207 = vpop.f32.mrb[0].mxu0
  %v1208 = vadd.f32 %v183, %v1207
  %v1209 = vpop.f32.mrb[0].mxu0
  %v1210 = vpop.f32.mrb[0].mxu0
  %v1211 = vadd.f32 %v183, %v1210
  %v1212 = vpop.f32.mrb[0].mxu0
  %1213 = vmatprep.mubr.bf16.mxu0 0
  %1214 = vmatmul.mubr.bf16.gmra.mrb[0].mxu0 %v712
  %v1215 = vpop.f32.mrb[0].mxu0
  %v1216 = vadd.f32 %v183, %v1215
  %v1217 = vpop.f32.mrb[0].mxu0
  %v1218 = vpop.f32.mrb[0].mxu0
  %v1219 = vadd.f32 %v183, %v1218
  %v1220 = vpop.f32.mrb[0].mxu0
  %1221 = vmatprep.mubr.bf16.mxu0 0
  %1222 = vmatmul.mubr.bf16.gmra.mrb[0].mxu0 %v715
  %v1223 = vpop.f32.mrb[0].mxu0
  %v1224 = vadd.f32 %v183, %v1223
  %v1225 = vpop.f32.mrb[0].mxu0
  %v1226 = vpop.f32.mrb[0].mxu0
  %v1227 = vadd.f32 %v183, %v1226
  %v1228 = vpop.f32.mrb[0].mxu0
  %1229 = vmatprep.mubr.bf16.mxu0 0
  %1230 = vmatmul.mubr.bf16.gmra.mrb[0].mxu0 %v718
  %v1231 = vpop.f32.mrb[0].mxu0
  %v1232 = vadd.f32 %v183, %v1231
  %v1233 = vpop.f32.mrb[0].mxu0
  %v1234 = vpop.f32.mrb[0].mxu0
  %v1235 = vadd.f32 %v183, %v1234
  %v1236 = vpop.f32.mrb[0].mxu0
  %1237 = vmatprep.mubr.bf16.mxu0 0
  %1238 = vmatmul.mubr.bf16.gmra.mrb[0].mxu0 %v721
  %v1239 = vpop.f32.mrb[0].mxu0
  %v1240 = vadd.f32 %v183, %v1239
  %v1241 = vpop.f32.mrb[0].mxu0
  %v1242 = vpop.f32.mrb[0].mxu0
  %v1243 = vadd.f32 %v183, %v1242
  %v1244 = vpop.f32.mrb[0].mxu0
  %1245 = vmatprep.mubr.bf16.mxu0 0
  %1246 = vmatmul.mubr.bf16.gmra.mrb[0].mxu0 %v724
  %v1247 = vpop.f32.mrb[0].mxu0
  %v1248 = vadd.f32 %v183, %v1247
  %v1249 = vpop.f32.mrb[0].mxu0
  %v1250 = vpop.f32.mrb[0].mxu0
  %v1251 = vadd.f32 %v183, %v1250
  %v1252 = vpop.f32.mrb[0].mxu0
  %1253 = vmatprep.mubr.bf16.mxu0 0
  %1254 = vmatmul.mubr.bf16.gmra.mrb[0].mxu0 %v727
  %v1255 = vpop.f32.mrb[0].mxu0
  %v1256 = vadd.f32 %v183, %v1255
  %v1257 = vpop.f32.mrb[0].mxu0
  %v1258 = vpop.f32.mrb[0].mxu0
  %v1259 = vadd.f32 %v183, %v1258
  %v1260 = vpop.f32.mrb[0].mxu0
  %1261 = vmatprep.mubr.bf16.mxu0 0
  %1262 = vmatmul.mubr.bf16.gmra.mrb[0].mxu0 %v730
  %v1263 = vpop.f32.mrb[0].mxu0
  %v1264 = vadd.f32 %v183, %v1263
  %v1265 = vpop.f32.mrb[0].mxu0
  %v1266 = vpop.f32.mrb[0].mxu0
  %v1267 = vadd.f32 %v183, %v1266
  %v1268 = vpop.f32.mrb[0].mxu0
  %1269 = vmatprep.mubr.bf16.mxu0 0
  %1270 = vmatmul.mubr.bf16.gmra.mrb[0].mxu0 %v733
  %v1271 = vpop.f32.mrb[0].mxu0
  %v1272 = vadd.f32 %v183, %v1271
  %v1273 = vpop.f32.mrb[0].mxu0
  %v1274 = vpop.f32.mrb[0].mxu0
  %v1275 = vadd.f32 %v183, %v1274
  %v1276 = vpop.f32.mrb[0].mxu0
  %1277 = vmatprep.mubr.bf16.mxu0 0
  %1278 = vmatmul.mubr.bf16.gmra.mrb[0].mxu0 %v736
  %v1279 = vpop.f32.mrb[0].mxu0
  %v1280 = vadd.f32 %v183, %v1279
  %v1281 = vpop.f32.mrb[0].mxu0
  %v1282 = vpop.f32.mrb[0].mxu0
  %v1283 = vadd.f32 %v183, %v1282
  %v1284 = vpop.f32.mrb[0].mxu0
  %1285 = vmatprep.mubr.bf16.mxu0 0
  %1286 = vmatmul.mubr.bf16.gmra.mrb[0].mxu0 %v739
  %v1287 = vpop.f32.mrb[0].mxu0
  %v1288 = vadd.f32 %v183, %v1287
  %v1289 = vpop.f32.mrb[0].mxu0
  %v1290 = vpop.f32.mrb[0].mxu0
  %v1291 = vadd.f32 %v183, %v1290
  %v1292 = vpop.f32.mrb[0].mxu0
  %1293 = vmatprep.mubr.bf16.mxu0 0
  %1294 = vmatmul.mubr.bf16.gmra.mrb[0].mxu0 %v742
  %v1295 = vpop.f32.mrb[0].mxu0
  %v1296 = vadd.f32 %v183, %v1295
  %v1297 = vpop.f32.mrb[0].mxu0
  %v1298 = vpop.f32.mrb[0].mxu0
  %v1299 = vadd.f32 %v183, %v1298
  %v1300 = vpop.f32.mrb[0].mxu0
  %1301 = vmatprep.mubr.bf16.mxu0 0
  %1302 = vmatmul.mubr.bf16.gmra.mrb[0].mxu0 %v745
  %v1303 = vpop.f32.mrb[0].mxu0
  %v1304 = vadd.f32 %v183, %v1303
  %v1305 = vpop.f32.mrb[0].mxu0
  %v1306 = vpop.f32.mrb[0].mxu0
  %v1307 = vadd.f32 %v183, %v1306
  %v1308 = vpop.f32.mrb[0].mxu0
  %1309 = vmatprep.mubr.bf16.mxu0 0
  %1310 = vmatmul.mubr.bf16.gmra.mrb[0].mxu0 %v748
  %v1311 = vpop.f32.mrb[0].mxu0
  %v1312 = vadd.f32 %v183, %v1311
  %v1313 = vpop.f32.mrb[0].mxu0
  %v1314 = vpop.f32.mrb[0].mxu0
  %v1315 = vadd.f32 %v183, %v1314
  %v1316 = vpop.f32.mrb[0].mxu0
  %1317 = vmatprep.mubr.bf16.mxu0 0
  %1318 = vmatmul.mubr.bf16.gmra.mrb[0].mxu0 %v751
  %v1319 = vpop.f32.mrb[0].mxu0
  %v1320 = vadd.f32 %v183, %v1319
  %v1321 = vpop.f32.mrb[0].mxu0
  %v1322 = vpop.f32.mrb[0].mxu0
  %v1323 = vadd.f32 %v183, %v1322
  %v1324 = vpop.f32.mrb[0].mxu0
  %1325 = vmatprep.mubr.bf16.mxu0 0
  %1326 = vmatmul.mubr.bf16.gmra.mrb[0].mxu0 %v754
  %v1327 = vpop.f32.mrb[0].mxu0
  %v1328 = vadd.f32 %v183, %v1327
  %v1329 = vpop.f32.mrb[0].mxu0
  %v1330 = vpop.f32.mrb[0].mxu0
  %v1331 = vadd.f32 %v183, %v1330
  %v1332 = vpop.f32.mrb[0].mxu0
  %1333 = vmatprep.mubr.bf16.mxu0 0
  %1334 = vmatmul.mubr.bf16.gmra.mrb[0].mxu0 %v757
  %v1335 = vpop.f32.mrb[0].mxu0
  %v1336 = vadd.f32 %v183, %v1335
  %v1337 = vpop.f32.mrb[0].mxu0
  %v1338 = vpop.f32.mrb[0].mxu0
  %v1339 = vadd.f32 %v183, %v1338
  %v1340 = vpop.f32.mrb[0].mxu0
  %1341 = vmatprep.mubr.bf16.mxu0 0
  %1342 = vmatmul.mubr.bf16.gmra.mrb[0].mxu0 %v760
  %v1343 = vpop.f32.mrb[0].mxu0
  %v1344 = vadd.f32 %v183, %v1343
  %v1345 = vpop.f32.mrb[0].mxu0
  %v1346 = vpop.f32.mrb[0].mxu0
  %v1347 = vadd.f32 %v183, %v1346
  %v1348 = vpop.f32.mrb[0].mxu0
  %1349 = vmatprep.mubr.bf16.mxu0 0
  %1350 = vmatmul.mubr.bf16.gmra.mrb[0].mxu0 %v763
  %v1351 = vpop.f32.mrb[0].mxu0
  %v1352 = vadd.f32 %v183, %v1351
  %v1353 = vpop.f32.mrb[0].mxu0
  %v1354 = vpop.f32.mrb[0].mxu0
  %v1355 = vadd.f32 %v183, %v1354
  %v1356 = vpop.f32.mrb[0].mxu0
  %1357 = vmatprep.mubr.bf16.mxu0 0
  %1358 = vmatmul.mubr.bf16.gmra.mrb[0].mxu0 %v766
  %v1359 = vpop.f32.mrb[0].mxu0
  %v1360 = vadd.f32 %v183, %v1359
  %v1361 = vpop.f32.mrb[0].mxu0
  %v1362 = vpop.f32.mrb[0].mxu0
  %v1363 = vadd.f32 %v183, %v1362
  %v1364 = vpop.f32.mrb[0].mxu0
  %1365 = vmatprep.mubr.bf16.mxu0 0
  %1366 = vmatmul.mubr.bf16.gmra.mrb[0].mxu0 %v769
  %v1367 = vpop.f32.mrb[0].mxu0
  %v1368 = vadd.f32 %v183, %v1367
  %v1369 = vpop.f32.mrb[0].mxu0
  %v1370 = vpop.f32.mrb[0].mxu0
  %v1371 = vadd.f32 %v183, %v1370
  %v1372 = vpop.f32.mrb[0].mxu0
  %1373 = vmatprep.mubr.bf16.mxu0 0
  %1374 = vmatmul.mubr.bf16.gmra.mrb[0].mxu0 %v772
  %v1375 = vpop.f32.mrb[0].mxu0
  %v1376 = vadd.f32 %v183, %v1375
  %v1377 = vpop.f32.mrb[0].mxu0
  %v1378 = vpop.f32.mrb[0].mxu0
  %v1379 = vadd.f32 %v183, %v1378
  %v1380 = vpop.f32.mrb[0].mxu0
  %1381 = vmatprep.mubr.bf16.mxu0 0
  %1382 = vmatmul.mubr.bf16.gmra.mrb[0].mxu0 %v775
  %v1383 = vpop.f32.mrb[0].mxu0
  %v1384 = vadd.f32 %v183, %v1383
  %v1385 = vpop.f32.mrb[0].mxu0
  %v1386 = vpop.f32.mrb[0].mxu0
  %v1387 = vadd.f32 %v183, %v1386
  %v1388 = vpop.f32.mrb[0].mxu0
  %1389 = vdwg.mxu0
  %v1390 = vmax.f32 %v816, 0.0
  %v1391 = vmax.f32 %v819, 0.0
  %v1392 = vmax.f32 %v824, 0.0
  %v1393 = vmax.f32 %v827, 0.0
  %v1394 = vmax.f32 %v832, 0.0
  %v1395 = vmax.f32 %v835, 0.0
  %v1396 = vmax.f32 %v840, 0.0
  %v1397 = vmax.f32 %v843, 0.0
  %v1398 = vmax.f32 %v848, 0.0
  %v1399 = vmax.f32 %v851, 0.0
  %v1400 = vmax.f32 %v856, 0.0
  %v1401 = vmax.f32 %v859, 0.0
  %v1402 = vmax.f32 %v864, 0.0
  %v1403 = vmax.f32 %v867, 0.0
  %v1404 = vmax.f32 %v872, 0.0
  %v1405 = vmax.f32 %v875, 0.0
  %v1406 = vmax.f32 %v880, 0.0
  %v1407 = vmax.f32 %v883, 0.0
  %v1408 = vmax.f32 %v888, 0.0
  %v1409 = vmax.f32 %v891, 0.0
  %v1410 = vmax.f32 %v896, 0.0
  %v1411 = vmax.f32 %v899, 0.0
  %v1412 = vmax.f32 %v904, 0.0
  %v1413 = vmax.f32 %v907, 0.0
  %v1414 = vmax.f32 %v912, 0.0
  %v1415 = vmax.f32 %v915, 0.0
  %v1416 = vmax.f32 %v920, 0.0
  %v1417 = vmax.f32 %v923, 0.0
  %v1418 = vmax.f32 %v928, 0.0
  %v1419 = vmax.f32 %v931, 0.0
  %v1420 = vmax.f32 %v936, 0.0
  %v1421 = vmax.f32 %v939, 0.0
  %v1422 = vmax.f32 %v944, 0.0
  %v1423 = vmax.f32 %v947, 0.0
  %v1424 = vmax.f32 %v952, 0.0
  %v1425 = vmax.f32 %v955, 0.0
  %v1426 = vmax.f32 %v960, 0.0
  %v1427 = vmax.f32 %v963, 0.0
  %v1428 = vmax.f32 %v968, 0.0
  %v1429 = vmax.f32 %v971, 0.0
  %v1430 = vmax.f32 %v976, 0.0
  %v1431 = vmax.f32 %v979, 0.0
  %v1432 = vmax.f32 %v984, 0.0
  %v1433 = vmax.f32 %v987, 0.0
  %v1434 = vmax.f32 %v992, 0.0
  %v1435 = vmax.f32 %v995, 0.0
  %v1436 = vmax.f32 %v1000, 0.0
  %v1437 = vmax.f32 %v1003, 0.0
  %v1438 = vmax.f32 %v1008, 0.0
  %v1439 = vmax.f32 %v1011, 0.0
  %v1440 = vmax.f32 %v1016, 0.0
  %v1441 = vmax.f32 %v1019, 0.0
  %v1442 = vmax.f32 %v1024, 0.0
  %v1443 = vmax.f32 %v1027, 0.0
  %v1444 = vmax.f32 %v1032, 0.0
  %v1445 = vmax.f32 %v1035, 0.0
  %v1446 = vmax.f32 %v1040, 0.0
  %v1447 = vmax.f32 %v1043, 0.0
  %v1448 = vmax.f32 %v1048, 0.0
  %v1449 = vmax.f32 %v1051, 0.0
  %v1450 = vmax.f32 %v1056, 0.0
  %v1451 = vmax.f32 %v1059, 0.0
  %v1452 = vmax.f32 %v1064, 0.0
  %v1453 = vmax.f32 %v1067, 0.0
  %v1454 = vmax.f32 %v1072, 0.0
  %v1455 = vmax.f32 %v1075, 0.0
  %v1456 = vmax.f32 %v1080, 0.0
  %v1457 = vmax.f32 %v1083, 0.0
  %v1458 = vmax.f32 %v1088, 0.0
  %v1459 = vmax.f32 %v1091, 0.0
  %v1460 = vmax.f32 %v1096, 0.0
  %v1461 = vmax.f32 %v1099, 0.0
  %v1462 = vmax.f32 %v1104, 0.0
  %v1463 = vmax.f32 %v1107, 0.0
  %v1464 = vmax.f32 %v1112, 0.0
  %v1465 = vmax.f32 %v1115, 0.0
  %v1466 = vmax.f32 %v1120, 0.0
  %v1467 = vmax.f32 %v1123, 0.0
  %v1468 = vmax.f32 %v1128, 0.0
  %v1469 = vmax.f32 %v1131, 0.0
  %v1470 = vmax.f32 %v1136, 0.0
  %v1471 = vmax.f32 %v1139, 0.0
  %v1472 = vmax.f32 %v1144, 0.0
  %v1473 = vmax.f32 %v1147, 0.0
  %v1474 = vmax.f32 %v1152, 0.0
  %v1475 = vmax.f32 %v1155, 0.0
  %v1476 = vmax.f32 %v1160, 0.0
  %v1477 = vmax.f32 %v1163, 0.0
  %v1478 = vmax.f32 %v1168, 0.0
  %v1479 = vmax.f32 %v1171, 0.0
  %v1480 = vmax.f32 %v1176, 0.0
  %v1481 = vmax.f32 %v1179, 0.0
  %v1482 = vmax.f32 %v1184, 0.0
  %v1483 = vmax.f32 %v1187, 0.0
  %v1484 = vmax.f32 %v1192, 0.0
  %v1485 = vmax.f32 %v1195, 0.0
  %v1486 = vmax.f32 %v1200, 0.0
  %v1487 = vmax.f32 %v1203, 0.0
  %v1488 = vmax.f32 %v1208, 0.0
  %v1489 = vmax.f32 %v1211, 0.0
  %v1490 = vmax.f32 %v1216, 0.0
  %v1491 = vmax.f32 %v1219, 0.0
  %v1492 = vmax.f32 %v1224, 0.0
  %v1493 = vmax.f32 %v1227, 0.0
  %v1494 = vmax.f32 %v1232, 0.0
  %v1495 = vmax.f32 %v1235, 0.0
  %v1496 = vmax.f32 %v1240, 0.0
  %v1497 = vmax.f32 %v1243, 0.0
  %v1498 = vmax.f32 %v1248, 0.0
  %v1499 = vmax.f32 %v1251, 0.0
  %v1500 = vmax.f32 %v1256, 0.0
  %v1501 = vmax.f32 %v1259, 0.0
  %v1502 = vmax.f32 %v1264, 0.0
  %v1503 = vmax.f32 %v1267, 0.0
  %v1504 = vmax.f32 %v1272, 0.0
  %v1505 = vmax.f32 %v1275, 0.0
  %v1506 = vmax.f32 %v1280, 0.0
  %v1507 = vmax.f32 %v1283, 0.0
  %v1508 = vmax.f32 %v1288, 0.0
  %v1509 = vmax.f32 %v1291, 0.0
  %v1510 = vmax.f32 %v1296, 0.0
  %v1511 = vmax.f32 %v1299, 0.0
  %v1512 = vmax.f32 %v1304, 0.0
  %v1513 = vmax.f32 %v1307, 0.0
  %v1514 = vmax.f32 %v1312, 0.0
  %v1515 = vmax.f32 %v1315, 0.0
  %v1516 = vmax.f32 %v1320, 0.0
  %v1517 = vmax.f32 %v1323, 0.0
  %v1518 = vmax.f32 %v1328, 0.0
  %v1519 = vmax.f32 %v1331, 0.0
  %v1520 = vmax.f32 %v1336, 0.0
  %v1521 = vmax.f32 %v1339, 0.0
  %v1522 = vmax.f32 %v1344, 0.0
  %v1523 = vmax.f32 %v1347, 0.0
  %v1524 = vmax.f32 %v1352, 0.0
  %v1525 = vmax.f32 %v1355, 0.0
  %v1526 = vmax.f32 %v1360, 0.0
  %v1527 = vmax.f32 %v1363, 0.0
  %v1528 = vmax.f32 %v1368, 0.0
  %v1529 = vmax.f32 %v1371, 0.0
  %v1530 = vmax.f32 %v1376, 0.0
  %v1531 = vmax.f32 %v1379, 0.0
  %v1532 = vmax.f32 %v1384, 0.0
  %v1533 = vmax.f32 %v1387, 0.0
  %v1534 = vpack.c.bf16 %v1391, %v1390
  %v1535 = vpack.c.bf16 %v1393, %v1392
  %v1536 = vpack.c.bf16 %v1395, %v1394
  %v1537 = vpack.c.bf16 %v1397, %v1396
  %v1538 = vpack.c.bf16 %v1399, %v1398
  %v1539 = vpack.c.bf16 %v1401, %v1400
  %v1540 = vpack.c.bf16 %v1403, %v1402
  %v1541 = vpack.c.bf16 %v1405, %v1404
  %v1542 = vpack.c.bf16 %v1407, %v1406
  %v1543 = vpack.c.bf16 %v1409, %v1408
  %v1544 = vpack.c.bf16 %v1411, %v1410
  %v1545 = vpack.c.bf16 %v1413, %v1412
  %v1546 = vpack.c.bf16 %v1415, %v1414
  %v1547 = vpack.c.bf16 %v1417, %v1416
  %v1548 = vpack.c.bf16 %v1419, %v1418
  %v1549 = vpack.c.bf16 %v1421, %v1420
  %v1550 = vpack.c.bf16 %v1423, %v1422
  %v1551 = vpack.c.bf16 %v1425, %v1424
  %v1552 = vpack.c.bf16 %v1427, %v1426
  %v1553 = vpack.c.bf16 %v1429, %v1428
  %v1554 = vpack.c.bf16 %v1431, %v1430
  %v1555 = vpack.c.bf16 %v1433, %v1432
  %v1556 = vpack.c.bf16 %v1435, %v1434
  %v1557 = vpack.c.bf16 %v1437, %v1436
  %v1558 = vpack.c.bf16 %v1439, %v1438
  %v1559 = vpack.c.bf16 %v1441, %v1440
  %v1560 = vpack.c.bf16 %v1443, %v1442
  %v1561 = vpack.c.bf16 %v1445, %v1444
  %v1562 = vpack.c.bf16 %v1447, %v1446
  %v1563 = vpack.c.bf16 %v1449, %v1448
  %v1564 = vpack.c.bf16 %v1451, %v1450
  %v1565 = vpack.c.bf16 %v1453, %v1452
  %v1566 = vpack.c.bf16 %v1455, %v1454
  %v1567 = vpack.c.bf16 %v1457, %v1456
  %v1568 = vpack.c.bf16 %v1459, %v1458
  %v1569 = vpack.c.bf16 %v1461, %v1460
  %v1570 = vpack.c.bf16 %v1463, %v1462
  %v1571 = vpack.c.bf16 %v1465, %v1464
  %v1572 = vpack.c.bf16 %v1467, %v1466
  %v1573 = vpack.c.bf16 %v1469, %v1468
  %v1574 = vpack.c.bf16 %v1471, %v1470
  %v1575 = vpack.c.bf16 %v1473, %v1472
  %v1576 = vpack.c.bf16 %v1475, %v1474
  %v1577 = vpack.c.bf16 %v1477, %v1476
  %v1578 = vpack.c.bf16 %v1479, %v1478
  %v1579 = vpack.c.bf16 %v1481, %v1480
  %v1580 = vpack.c.bf16 %v1483, %v1482
  %v1581 = vpack.c.bf16 %v1485, %v1484
  %v1582 = vpack.c.bf16 %v1487, %v1486
  %v1583 = vpack.c.bf16 %v1489, %v1488
  %v1584 = vpack.c.bf16 %v1491, %v1490
  %v1585 = vpack.c.bf16 %v1493, %v1492
  %v1586 = vpack.c.bf16 %v1495, %v1494
  %v1587 = vpack.c.bf16 %v1497, %v1496
  %v1588 = vpack.c.bf16 %v1499, %v1498
  %v1589 = vpack.c.bf16 %v1501, %v1500
  %v1590 = vpack.c.bf16 %v1503, %v1502
  %v1591 = vpack.c.bf16 %v1505, %v1504
  %v1592 = vpack.c.bf16 %v1507, %v1506
  %v1593 = vpack.c.bf16 %v1509, %v1508
  %v1594 = vpack.c.bf16 %v1511, %v1510
  %v1595 = vpack.c.bf16 %v1513, %v1512
  %v1596 = vpack.c.bf16 %v1515, %v1514
  %v1597 = vpack.c.bf16 %v1517, %v1516
  %v1598 = vpack.c.bf16 %v1519, %v1518
  %v1599 = vpack.c.bf16 %v1521, %v1520
  %v1600 = vpack.c.bf16 %v1523, %v1522
  %v1601 = vpack.c.bf16 %v1525, %v1524
  %v1602 = vpack.c.bf16 %v1527, %v1526
  %v1603 = vpack.c.bf16 %v1529, %v1528
  %v1604 = vpack.c.bf16 %v1531, %v1530
  %v1605 = vpack.c.bf16 %v1533, %v1532
  %v1606 = vld [vmem:[%s3] sm:$0xf]
  %v1607 = vld [vmem:[%s3 + $0x4] sm:$0xf]
  %v1608 = vld [vmem:[%s3 + $0x8] sm:$0xf]
  %v1609 = vld [vmem:[%s3 + $0xc] sm:$0xf]
  %v1610 = vld [vmem:[%s3 + $0x10] sm:$0xf]
  %v1611 = vld [vmem:[%s3 + $0x14] sm:$0xf]
  %v1612 = vld [vmem:[%s3 + $0x18] sm:$0xf]
  %v1613 = vld [vmem:[%s3 + $0x1c] sm:$0xf]
  %v1614 = vld [vmem:[%s3 + $0x20] sm:$0xf]
  %v1615 = vld [vmem:[%s3 + $0x24] sm:$0xf]
  %v1616 = vld [vmem:[%s3 + $0x28] sm:$0xf]
  %v1617 = vld [vmem:[%s3 + $0x2c] sm:$0xf]
  %v1618 = vld [vmem:[%s3 + $0x30] sm:$0xf]
  %v1619 = vld [vmem:[%s3 + $0x34] sm:$0xf]
  %v1620 = vld [vmem:[%s3 + $0x38] sm:$0xf]
  %v1621 = vld [vmem:[%s3 + $0x3c] sm:$0xf]
  %v1622 = vld [vmem:[%s4] sm:$0x1]
  %v1624 = vlaneseq
  %v1625 = vshrl.u32 %v1624, 7
  %v1626 = vsub.s32 0, %v1625
  %v1627 = vrot.slane %v1622, %v1626
  %v1645 = vunpack.c.l.b16 %v1606
  %v1646 = vunpack.c.l.b16 %v1607
  %v1647 = vunpack.c.l.b16 %v1608
  %v1648 = vunpack.c.l.b16 %v1609
  %v1649 = vunpack.c.l.b16 %v1610
  %v1650 = vunpack.c.l.b16 %v1611
  %v1651 = vunpack.c.l.b16 %v1612
  %v1652 = vunpack.c.l.b16 %v1613
  %v1653 = vunpack.c.l.b16 %v1614
  %v1654 = vunpack.c.l.b16 %v1615
  %v1655 = vunpack.c.l.b16 %v1616
  %v1656 = vunpack.c.l.b16 %v1617
  %v1657 = vunpack.c.l.b16 %v1618
  %v1658 = vunpack.c.l.b16 %v1619
  %v1659 = vunpack.c.l.b16 %v1620
  %v1660 = vunpack.c.l.b16 %v1621
  %v1661 = vpack.c.b16 %v1646, %v1645
  %v1662 = vpack.c.b16 %v1648, %v1647
  %v1663 = vpack.c.b16 %v1650, %v1649
  %v1664 = vpack.c.b16 %v1652, %v1651
  %v1665 = vpack.c.b16 %v1654, %v1653
  %v1666 = vpack.c.b16 %v1656, %v1655
  %v1667 = vpack.c.b16 %v1658, %v1657
  %v1668 = vpack.c.b16 %v1660, %v1659
  %1677 = vmatprep.subr.bf16.mxu0 0
  %1678 = vmatpush1.bf16.msra.mxu0 %v1661
  %1679 = vmatprep.subr.bf16.mxu0 0
  %1680 = vmatpush1.bf16.msra.mxu0 %v1662
  %1681 = vmatprep.subr.bf16.mxu0 0
  %1682 = vmatpush1.bf16.msra.mxu0 %v1663
  %1683 = vmatprep.subr.bf16.mxu0 0
  %1684 = vmatpush1.bf16.msra.mxu0 %v1664
  %1685 = vmatprep.subr.bf16.mxu0 0
  %1686 = vmatpush1.bf16.msra.mxu0 %v1665
  %1687 = vmatprep.subr.bf16.mxu0 0
  %1688 = vmatpush1.bf16.msra.mxu0 %v1666
  %1689 = vmatprep.subr.bf16.mxu0 0
  %1690 = vmatpush1.bf16.msra.mxu0 %v1667
  %1691 = vmatprep.subr.bf16.mxu0 0
  %1692 = vmatpush1.bf16.msra.mxu0 %v1668
  %1693 = vmatprep.subr.bf16.mxu0 0
  %1694 = vmatpush1.bf16.msra.mxu0 0
  %1695 = vmatprep.subr.bf16.mxu0 0
  %1696 = vmatpush1.bf16.msra.mxu0 0
  %1697 = vmatprep.subr.bf16.mxu0 0
  %1698 = vmatpush1.bf16.msra.mxu0 0
  %1699 = vmatprep.subr.bf16.mxu0 0
  %1700 = vmatpush1.bf16.msra.mxu0 0
  %1701 = vmatprep.subr.bf16.mxu0 0
  %1702 = vmatpush1.bf16.msra.mxu0 0
  %1703 = vmatprep.subr.bf16.mxu0 0
  %1704 = vmatpush1.bf16.msra.mxu0 0
  %1705 = vmatprep.subr.bf16.mxu0 0
  %1706 = vmatpush1.bf16.msra.mxu0 0
  %1707 = vmatprep.subr.bf16.mxu0 0
  %1708 = vmatpush1.bf16.msra.mxu0 0
  %1709 = vmatprep.mubr.bf16.mxu0 0
  %1710 = vmatmul.mubr.bf16.gmra.mrb[0].mxu0 %v1534
  %v1711 = vpop.f32.mrb[0].mxu0
  %v1712 = vadd.f32 %v1627, %v1711
  %v1713 = vpop.f32.mrb[0].mxu0
  %v1714 = vpop.f32.mrb[0].mxu0
  %v1715 = vadd.f32 %v1627, %v1714
  %v1716 = vpop.f32.mrb[0].mxu0
  %1717 = vmatprep.mubr.bf16.mxu0 0
  %1718 = vmatmul.mubr.bf16.gmra.mrb[0].mxu0 %v1535
  %v1719 = vpop.f32.mrb[0].mxu0
  %v1720 = vadd.f32 %v1627, %v1719
  %v1721 = vpop.f32.mrb[0].mxu0
  %v1722 = vpop.f32.mrb[0].mxu0
  %v1723 = vadd.f32 %v1627, %v1722
  %v1724 = vpop.f32.mrb[0].mxu0
  %1725 = vmatprep.mubr.bf16.mxu0 0
  %1726 = vmatmul.mubr.bf16.gmra.mrb[0].mxu0 %v1536
  %v1727 = vpop.f32.mrb[0].mxu0
  %v1728 = vadd.f32 %v1627, %v1727
  %v1729 = vpop.f32.mrb[0].mxu0
  %v1730 = vpop.f32.mrb[0].mxu0
  %v1731 = vadd.f32 %v1627, %v1730
  %v1732 = vpop.f32.mrb[0].mxu0
  %1733 = vmatprep.mubr.bf16.mxu0 0
  %1734 = vmatmul.mubr.bf16.gmra.mrb[0].mxu0 %v1537
  %v1735 = vpop.f32.mrb[0].mxu0
  %v1736 = vadd.f32 %v1627, %v1735
  %v1737 = vpop.f32.mrb[0].mxu0
  %v1738 = vpop.f32.mrb[0].mxu0
  %v1739 = vadd.f32 %v1627, %v1738
  %v1740 = vpop.f32.mrb[0].mxu0
  %1741 = vmatprep.mubr.bf16.mxu0 0
  %1742 = vmatmul.mubr.bf16.gmra.mrb[0].mxu0 %v1538
  %v1743 = vpop.f32.mrb[0].mxu0
  %v1744 = vadd.f32 %v1627, %v1743
  %v1745 = vpop.f32.mrb[0].mxu0
  %v1746 = vpop.f32.mrb[0].mxu0
  %v1747 = vadd.f32 %v1627, %v1746
  %v1748 = vpop.f32.mrb[0].mxu0
  %1749 = vmatprep.mubr.bf16.mxu0 0
  %1750 = vmatmul.mubr.bf16.gmra.mrb[0].mxu0 %v1539
  %v1751 = vpop.f32.mrb[0].mxu0
  %v1752 = vadd.f32 %v1627, %v1751
  %v1753 = vpop.f32.mrb[0].mxu0
  %v1754 = vpop.f32.mrb[0].mxu0
  %v1755 = vadd.f32 %v1627, %v1754
  %v1756 = vpop.f32.mrb[0].mxu0
  %1757 = vmatprep.mubr.bf16.mxu0 0
  %1758 = vmatmul.mubr.bf16.gmra.mrb[0].mxu0 %v1540
  %v1759 = vpop.f32.mrb[0].mxu0
  %v1760 = vadd.f32 %v1627, %v1759
  %v1761 = vpop.f32.mrb[0].mxu0
  %v1762 = vpop.f32.mrb[0].mxu0
  %v1763 = vadd.f32 %v1627, %v1762
  %v1764 = vpop.f32.mrb[0].mxu0
  %1765 = vmatprep.mubr.bf16.mxu0 0
  %1766 = vmatmul.mubr.bf16.gmra.mrb[0].mxu0 %v1541
  %v1767 = vpop.f32.mrb[0].mxu0
  %v1768 = vadd.f32 %v1627, %v1767
  %v1769 = vpop.f32.mrb[0].mxu0
  %v1770 = vpop.f32.mrb[0].mxu0
  %v1771 = vadd.f32 %v1627, %v1770
  %v1772 = vpop.f32.mrb[0].mxu0
  %1773 = vmatprep.mubr.bf16.mxu0 0
  %1774 = vmatmul.mubr.bf16.gmra.mrb[0].mxu0 %v1542
  %v1775 = vpop.f32.mrb[0].mxu0
  %v1776 = vadd.f32 %v1627, %v1775
  %v1777 = vpop.f32.mrb[0].mxu0
  %v1778 = vpop.f32.mrb[0].mxu0
  %v1779 = vadd.f32 %v1627, %v1778
  %v1780 = vpop.f32.mrb[0].mxu0
  %1781 = vmatprep.mubr.bf16.mxu0 0
  %1782 = vmatmul.mubr.bf16.gmra.mrb[0].mxu0 %v1543
  %v1783 = vpop.f32.mrb[0].mxu0
  %v1784 = vadd.f32 %v1627, %v1783
  %v1785 = vpop.f32.mrb[0].mxu0
  %v1786 = vpop.f32.mrb[0].mxu0
  %v1787 = vadd.f32 %v1627, %v1786
  %v1788 = vpop.f32.mrb[0].mxu0
  %1789 = vmatprep.mubr.bf16.mxu0 0
  %1790 = vmatmul.mubr.bf16.gmra.mrb[0].mxu0 %v1544
  %v1791 = vpop.f32.mrb[0].mxu0
  %v1792 = vadd.f32 %v1627, %v1791
  %v1793 = vpop.f32.mrb[0].mxu0
  %v1794 = vpop.f32.mrb[0].mxu0
  %v1795 = vadd.f32 %v1627, %v1794
  %v1796 = vpop.f32.mrb[0].mxu0
  %1797 = vmatprep.mubr.bf16.mxu0 0
  %1798 = vmatmul.mubr.bf16.gmra.mrb[0].mxu0 %v1545
  %v1799 = vpop.f32.mrb[0].mxu0
  %v1800 = vadd.f32 %v1627, %v1799
  %v1801 = vpop.f32.mrb[0].mxu0
  %v1802 = vpop.f32.mrb[0].mxu0
  %v1803 = vadd.f32 %v1627, %v1802
  %v1804 = vpop.f32.mrb[0].mxu0
  %1805 = vmatprep.mubr.bf16.mxu0 0
  %1806 = vmatmul.mubr.bf16.gmra.mrb[0].mxu0 %v1546
  %v1807 = vpop.f32.mrb[0].mxu0
  %v1808 = vadd.f32 %v1627, %v1807
  %v1809 = vpop.f32.mrb[0].mxu0
  %v1810 = vpop.f32.mrb[0].mxu0
  %v1811 = vadd.f32 %v1627, %v1810
  %v1812 = vpop.f32.mrb[0].mxu0
  %1813 = vmatprep.mubr.bf16.mxu0 0
  %1814 = vmatmul.mubr.bf16.gmra.mrb[0].mxu0 %v1547
  %v1815 = vpop.f32.mrb[0].mxu0
  %v1816 = vadd.f32 %v1627, %v1815
  %v1817 = vpop.f32.mrb[0].mxu0
  %v1818 = vpop.f32.mrb[0].mxu0
  %v1819 = vadd.f32 %v1627, %v1818
  %v1820 = vpop.f32.mrb[0].mxu0
  %1821 = vmatprep.mubr.bf16.mxu0 0
  %1822 = vmatmul.mubr.bf16.gmra.mrb[0].mxu0 %v1548
  %v1823 = vpop.f32.mrb[0].mxu0
  %v1824 = vadd.f32 %v1627, %v1823
  %v1825 = vpop.f32.mrb[0].mxu0
  %v1826 = vpop.f32.mrb[0].mxu0
  %v1827 = vadd.f32 %v1627, %v1826
  %v1828 = vpop.f32.mrb[0].mxu0
  %1829 = vmatprep.mubr.bf16.mxu0 0
  %1830 = vmatmul.mubr.bf16.gmra.mrb[0].mxu0 %v1549
  %v1831 = vpop.f32.mrb[0].mxu0
  %v1832 = vadd.f32 %v1627, %v1831
  %v1833 = vpop.f32.mrb[0].mxu0
  %v1834 = vpop.f32.mrb[0].mxu0
  %v1835 = vadd.f32 %v1627, %v1834
  %v1836 = vpop.f32.mrb[0].mxu0
  %1837 = vmatprep.mubr.bf16.mxu0 0
  %1838 = vmatmul.mubr.bf16.gmra.mrb[0].mxu0 %v1550
  %v1839 = vpop.f32.mrb[0].mxu0
  %v1840 = vadd.f32 %v1627, %v1839
  %v1841 = vpop.f32.mrb[0].mxu0
  %v1842 = vpop.f32.mrb[0].mxu0
  %v1843 = vadd.f32 %v1627, %v1842
  %v1844 = vpop.f32.mrb[0].mxu0
  %1845 = vmatprep.mubr.bf16.mxu0 0
  %1846 = vmatmul.mubr.bf16.gmra.mrb[0].mxu0 %v1551
  %v1847 = vpop.f32.mrb[0].mxu0
  %v1848 = vadd.f32 %v1627, %v1847
  %v1849 = vpop.f32.mrb[0].mxu0
  %v1850 = vpop.f32.mrb[0].mxu0
  %v1851 = vadd.f32 %v1627, %v1850
  %v1852 = vpop.f32.mrb[0].mxu0
  %1853 = vmatprep.mubr.bf16.mxu0 0
  %1854 = vmatmul.mubr.bf16.gmra.mrb[0].mxu0 %v1552
  %v1855 = vpop.f32.mrb[0].mxu0
  %v1856 = vadd.f32 %v1627, %v1855
  %v1857 = vpop.f32.mrb[0].mxu0
  %v1858 = vpop.f32.mrb[0].mxu0
  %v1859 = vadd.f32 %v1627, %v1858
  %v1860 = vpop.f32.mrb[0].mxu0
  %1861 = vmatprep.mubr.bf16.mxu0 0
  %1862 = vmatmul.mubr.bf16.gmra.mrb[0].mxu0 %v1553
  %v1863 = vpop.f32.mrb[0].mxu0
  %v1864 = vadd.f32 %v1627, %v1863
  %v1865 = vpop.f32.mrb[0].mxu0
  %v1866 = vpop.f32.mrb[0].mxu0
  %v1867 = vadd.f32 %v1627, %v1866
  %v1868 = vpop.f32.mrb[0].mxu0
  %1869 = vmatprep.mubr.bf16.mxu0 0
  %1870 = vmatmul.mubr.bf16.gmra.mrb[0].mxu0 %v1554
  %v1871 = vpop.f32.mrb[0].mxu0
  %v1872 = vadd.f32 %v1627, %v1871
  %v1873 = vpop.f32.mrb[0].mxu0
  %v1874 = vpop.f32.mrb[0].mxu0
  %v1875 = vadd.f32 %v1627, %v1874
  %v1876 = vpop.f32.mrb[0].mxu0
  %1877 = vmatprep.mubr.bf16.mxu0 0
  %1878 = vmatmul.mubr.bf16.gmra.mrb[0].mxu0 %v1555
  %v1879 = vpop.f32.mrb[0].mxu0
  %v1880 = vadd.f32 %v1627, %v1879
  %v1881 = vpop.f32.mrb[0].mxu0
  %v1882 = vpop.f32.mrb[0].mxu0
  %v1883 = vadd.f32 %v1627, %v1882
  %v1884 = vpop.f32.mrb[0].mxu0
  %1885 = vmatprep.mubr.bf16.mxu0 0
  %1886 = vmatmul.mubr.bf16.gmra.mrb[0].mxu0 %v1556
  %v1887 = vpop.f32.mrb[0].mxu0
  %v1888 = vadd.f32 %v1627, %v1887
  %v1889 = vpop.f32.mrb[0].mxu0
  %v1890 = vpop.f32.mrb[0].mxu0
  %v1891 = vadd.f32 %v1627, %v1890
  %v1892 = vpop.f32.mrb[0].mxu0
  %1893 = vmatprep.mubr.bf16.mxu0 0
  %1894 = vmatmul.mubr.bf16.gmra.mrb[0].mxu0 %v1557
  %v1895 = vpop.f32.mrb[0].mxu0
  %v1896 = vadd.f32 %v1627, %v1895
  %v1897 = vpop.f32.mrb[0].mxu0
  %v1898 = vpop.f32.mrb[0].mxu0
  %v1899 = vadd.f32 %v1627, %v1898
  %v1900 = vpop.f32.mrb[0].mxu0
  %1901 = vmatprep.mubr.bf16.mxu0 0
  %1902 = vmatmul.mubr.bf16.gmra.mrb[0].mxu0 %v1558
  %v1903 = vpop.f32.mrb[0].mxu0
  %v1904 = vadd.f32 %v1627, %v1903
  %v1905 = vpop.f32.mrb[0].mxu0
  %v1906 = vpop.f32.mrb[0].mxu0
  %v1907 = vadd.f32 %v1627, %v1906
  %v1908 = vpop.f32.mrb[0].mxu0
  %1909 = vmatprep.mubr.bf16.mxu0 0
  %1910 = vmatmul.mubr.bf16.gmra.mrb[0].mxu0 %v1559
  %v1911 = vpop.f32.mrb[0].mxu0
  %v1912 = vadd.f32 %v1627, %v1911
  %v1913 = vpop.f32.mrb[0].mxu0
  %v1914 = vpop.f32.mrb[0].mxu0
  %v1915 = vadd.f32 %v1627, %v1914
  %v1916 = vpop.f32.mrb[0].mxu0
  %1917 = vmatprep.mubr.bf16.mxu0 0
  %1918 = vmatmul.mubr.bf16.gmra.mrb[0].mxu0 %v1560
  %v1919 = vpop.f32.mrb[0].mxu0
  %v1920 = vadd.f32 %v1627, %v1919
  %v1921 = vpop.f32.mrb[0].mxu0
  %v1922 = vpop.f32.mrb[0].mxu0
  %v1923 = vadd.f32 %v1627, %v1922
  %v1924 = vpop.f32.mrb[0].mxu0
  %1925 = vmatprep.mubr.bf16.mxu0 0
  %1926 = vmatmul.mubr.bf16.gmra.mrb[0].mxu0 %v1561
  %v1927 = vpop.f32.mrb[0].mxu0
  %v1928 = vadd.f32 %v1627, %v1927
  %v1929 = vpop.f32.mrb[0].mxu0
  %v1930 = vpop.f32.mrb[0].mxu0
  %v1931 = vadd.f32 %v1627, %v1930
  %v1932 = vpop.f32.mrb[0].mxu0
  %1933 = vmatprep.mubr.bf16.mxu0 0
  %1934 = vmatmul.mubr.bf16.gmra.mrb[0].mxu0 %v1562
  %v1935 = vpop.f32.mrb[0].mxu0
  %v1936 = vadd.f32 %v1627, %v1935
  %v1937 = vpop.f32.mrb[0].mxu0
  %v1938 = vpop.f32.mrb[0].mxu0
  %v1939 = vadd.f32 %v1627, %v1938
  %v1940 = vpop.f32.mrb[0].mxu0
  %1941 = vmatprep.mubr.bf16.mxu0 0
  %1942 = vmatmul.mubr.bf16.gmra.mrb[0].mxu0 %v1563
  %v1943 = vpop.f32.mrb[0].mxu0
  %v1944 = vadd.f32 %v1627, %v1943
  %v1945 = vpop.f32.mrb[0].mxu0
  %v1946 = vpop.f32.mrb[0].mxu0
  %v1947 = vadd.f32 %v1627, %v1946
  %v1948 = vpop.f32.mrb[0].mxu0
  %1949 = vmatprep.mubr.bf16.mxu0 0
  %1950 = vmatmul.mubr.bf16.gmra.mrb[0].mxu0 %v1564
  %v1951 = vpop.f32.mrb[0].mxu0
  %v1952 = vadd.f32 %v1627, %v1951
  %v1953 = vpop.f32.mrb[0].mxu0
  %v1954 = vpop.f32.mrb[0].mxu0
  %v1955 = vadd.f32 %v1627, %v1954
  %v1956 = vpop.f32.mrb[0].mxu0
  %1957 = vmatprep.mubr.bf16.mxu0 0
  %1958 = vmatmul.mubr.bf16.gmra.mrb[0].mxu0 %v1565
  %v1959 = vpop.f32.mrb[0].mxu0
  %v1960 = vadd.f32 %v1627, %v1959
  %v1961 = vpop.f32.mrb[0].mxu0
  %v1962 = vpop.f32.mrb[0].mxu0
  %v1963 = vadd.f32 %v1627, %v1962
  %v1964 = vpop.f32.mrb[0].mxu0
  %1965 = vmatprep.mubr.bf16.mxu0 0
  %1966 = vmatmul.mubr.bf16.gmra.mrb[0].mxu0 %v1566
  %v1967 = vpop.f32.mrb[0].mxu0
  %v1968 = vadd.f32 %v1627, %v1967
  %v1969 = vpop.f32.mrb[0].mxu0
  %v1970 = vpop.f32.mrb[0].mxu0
  %v1971 = vadd.f32 %v1627, %v1970
  %v1972 = vpop.f32.mrb[0].mxu0
  %1973 = vmatprep.mubr.bf16.mxu0 0
  %1974 = vmatmul.mubr.bf16.gmra.mrb[0].mxu0 %v1567
  %v1975 = vpop.f32.mrb[0].mxu0
  %v1976 = vadd.f32 %v1627, %v1975
  %v1977 = vpop.f32.mrb[0].mxu0
  %v1978 = vpop.f32.mrb[0].mxu0
  %v1979 = vadd.f32 %v1627, %v1978
  %v1980 = vpop.f32.mrb[0].mxu0
  %1981 = vmatprep.mubr.bf16.mxu0 0
  %1982 = vmatmul.mubr.bf16.gmra.mrb[0].mxu0 %v1568
  %v1983 = vpop.f32.mrb[0].mxu0
  %v1984 = vadd.f32 %v1627, %v1983
  %v1985 = vpop.f32.mrb[0].mxu0
  %v1986 = vpop.f32.mrb[0].mxu0
  %v1987 = vadd.f32 %v1627, %v1986
  %v1988 = vpop.f32.mrb[0].mxu0
  %1989 = vmatprep.mubr.bf16.mxu0 0
  %1990 = vmatmul.mubr.bf16.gmra.mrb[0].mxu0 %v1569
  %v1991 = vpop.f32.mrb[0].mxu0
  %v1992 = vadd.f32 %v1627, %v1991
  %v1993 = vpop.f32.mrb[0].mxu0
  %v1994 = vpop.f32.mrb[0].mxu0
  %v1995 = vadd.f32 %v1627, %v1994
  %v1996 = vpop.f32.mrb[0].mxu0
  %1997 = vmatprep.mubr.bf16.mxu0 0
  %1998 = vmatmul.mubr.bf16.gmra.mrb[0].mxu0 %v1570
  %v1999 = vpop.f32.mrb[0].mxu0
  %v2000 = vadd.f32 %v1627, %v1999
  %v2001 = vpop.f32.mrb[0].mxu0
  %v2002 = vpop.f32.mrb[0].mxu0
  %v2003 = vadd.f32 %v1627, %v2002
  %v2004 = vpop.f32.mrb[0].mxu0
  %2005 = vmatprep.mubr.bf16.mxu0 0
  %2006 = vmatmul.mubr.bf16.gmra.mrb[0].mxu0 %v1571
  %v2007 = vpop.f32.mrb[0].mxu0
  %v2008 = vadd.f32 %v1627, %v2007
  %v2009 = vpop.f32.mrb[0].mxu0
  %v2010 = vpop.f32.mrb[0].mxu0
  %v2011 = vadd.f32 %v1627, %v2010
  %v2012 = vpop.f32.mrb[0].mxu0
  %2013 = vmatprep.mubr.bf16.mxu0 0
  %2014 = vmatmul.mubr.bf16.gmra.mrb[0].mxu0 %v1572
  %v2015 = vpop.f32.mrb[0].mxu0
  %v2016 = vadd.f32 %v1627, %v2015
  %v2017 = vpop.f32.mrb[0].mxu0
  %v2018 = vpop.f32.mrb[0].mxu0
  %v2019 = vadd.f32 %v1627, %v2018
  %v2020 = vpop.f32.mrb[0].mxu0
  %2021 = vmatprep.mubr.bf16.mxu0 0
  %2022 = vmatmul.mubr.bf16.gmra.mrb[0].mxu0 %v1573
  %v2023 = vpop.f32.mrb[0].mxu0
  %v2024 = vadd.f32 %v1627, %v2023
  %v2025 = vpop.f32.mrb[0].mxu0
  %v2026 = vpop.f32.mrb[0].mxu0
  %v2027 = vadd.f32 %v1627, %v2026
  %v2028 = vpop.f32.mrb[0].mxu0
  %2029 = vmatprep.mubr.bf16.mxu0 0
  %2030 = vmatmul.mubr.bf16.gmra.mrb[0].mxu0 %v1574
  %v2031 = vpop.f32.mrb[0].mxu0
  %v2032 = vadd.f32 %v1627, %v2031
  %v2033 = vpop.f32.mrb[0].mxu0
  %v2034 = vpop.f32.mrb[0].mxu0
  %v2035 = vadd.f32 %v1627, %v2034
  %v2036 = vpop.f32.mrb[0].mxu0
  %2037 = vmatprep.mubr.bf16.mxu0 0
  %2038 = vmatmul.mubr.bf16.gmra.mrb[0].mxu0 %v1575
  %v2039 = vpop.f32.mrb[0].mxu0
  %v2040 = vadd.f32 %v1627, %v2039
  %v2041 = vpop.f32.mrb[0].mxu0
  %v2042 = vpop.f32.mrb[0].mxu0
  %v2043 = vadd.f32 %v1627, %v2042
  %v2044 = vpop.f32.mrb[0].mxu0
  %2045 = vmatprep.mubr.bf16.mxu0 0
  %2046 = vmatmul.mubr.bf16.gmra.mrb[0].mxu0 %v1576
  %v2047 = vpop.f32.mrb[0].mxu0
  %v2048 = vadd.f32 %v1627, %v2047
  %v2049 = vpop.f32.mrb[0].mxu0
  %v2050 = vpop.f32.mrb[0].mxu0
  %v2051 = vadd.f32 %v1627, %v2050
  %v2052 = vpop.f32.mrb[0].mxu0
  %2053 = vmatprep.mubr.bf16.mxu0 0
  %2054 = vmatmul.mubr.bf16.gmra.mrb[0].mxu0 %v1577
  %v2055 = vpop.f32.mrb[0].mxu0
  %v2056 = vadd.f32 %v1627, %v2055
  %v2057 = vpop.f32.mrb[0].mxu0
  %v2058 = vpop.f32.mrb[0].mxu0
  %v2059 = vadd.f32 %v1627, %v2058
  %v2060 = vpop.f32.mrb[0].mxu0
  %2061 = vmatprep.mubr.bf16.mxu0 0
  %2062 = vmatmul.mubr.bf16.gmra.mrb[0].mxu0 %v1578
  %v2063 = vpop.f32.mrb[0].mxu0
  %v2064 = vadd.f32 %v1627, %v2063
  %v2065 = vpop.f32.mrb[0].mxu0
  %v2066 = vpop.f32.mrb[0].mxu0
  %v2067 = vadd.f32 %v1627, %v2066
  %v2068 = vpop.f32.mrb[0].mxu0
  %2069 = vmatprep.mubr.bf16.mxu0 0
  %2070 = vmatmul.mubr.bf16.gmra.mrb[0].mxu0 %v1579
  %v2071 = vpop.f32.mrb[0].mxu0
  %v2072 = vadd.f32 %v1627, %v2071
  %v2073 = vpop.f32.mrb[0].mxu0
  %v2074 = vpop.f32.mrb[0].mxu0
  %v2075 = vadd.f32 %v1627, %v2074
  %v2076 = vpop.f32.mrb[0].mxu0
  %2077 = vmatprep.mubr.bf16.mxu0 0
  %2078 = vmatmul.mubr.bf16.gmra.mrb[0].mxu0 %v1580
  %v2079 = vpop.f32.mrb[0].mxu0
  %v2080 = vadd.f32 %v1627, %v2079
  %v2081 = vpop.f32.mrb[0].mxu0
  %v2082 = vpop.f32.mrb[0].mxu0
  %v2083 = vadd.f32 %v1627, %v2082
  %v2084 = vpop.f32.mrb[0].mxu0
  %2085 = vmatprep.mubr.bf16.mxu0 0
  %2086 = vmatmul.mubr.bf16.gmra.mrb[0].mxu0 %v1581
  %v2087 = vpop.f32.mrb[0].mxu0
  %v2088 = vadd.f32 %v1627, %v2087
  %v2089 = vpop.f32.mrb[0].mxu0
  %v2090 = vpop.f32.mrb[0].mxu0
  %v2091 = vadd.f32 %v1627, %v2090
  %v2092 = vpop.f32.mrb[0].mxu0
  %2093 = vmatprep.mubr.bf16.mxu0 0
  %2094 = vmatmul.mubr.bf16.gmra.mrb[0].mxu0 %v1582
  %v2095 = vpop.f32.mrb[0].mxu0
  %v2096 = vadd.f32 %v1627, %v2095
  %v2097 = vpop.f32.mrb[0].mxu0
  %v2098 = vpop.f32.mrb[0].mxu0
  %v2099 = vadd.f32 %v1627, %v2098
  %v2100 = vpop.f32.mrb[0].mxu0
  %2101 = vmatprep.mubr.bf16.mxu0 0
  %2102 = vmatmul.mubr.bf16.gmra.mrb[0].mxu0 %v1583
  %v2103 = vpop.f32.mrb[0].mxu0
  %v2104 = vadd.f32 %v1627, %v2103
  %v2105 = vpop.f32.mrb[0].mxu0
  %v2106 = vpop.f32.mrb[0].mxu0
  %v2107 = vadd.f32 %v1627, %v2106
  %v2108 = vpop.f32.mrb[0].mxu0
  %2109 = vmatprep.mubr.bf16.mxu0 0
  %2110 = vmatmul.mubr.bf16.gmra.mrb[0].mxu0 %v1584
  %v2111 = vpop.f32.mrb[0].mxu0
  %v2112 = vadd.f32 %v1627, %v2111
  %v2113 = vpop.f32.mrb[0].mxu0
  %v2114 = vpop.f32.mrb[0].mxu0
  %v2115 = vadd.f32 %v1627, %v2114
  %v2116 = vpop.f32.mrb[0].mxu0
  %2117 = vmatprep.mubr.bf16.mxu0 0
  %2118 = vmatmul.mubr.bf16.gmra.mrb[0].mxu0 %v1585
  %v2119 = vpop.f32.mrb[0].mxu0
  %v2120 = vadd.f32 %v1627, %v2119
  %v2121 = vpop.f32.mrb[0].mxu0
  %v2122 = vpop.f32.mrb[0].mxu0
  %v2123 = vadd.f32 %v1627, %v2122
  %v2124 = vpop.f32.mrb[0].mxu0
  %2125 = vmatprep.mubr.bf16.mxu0 0
  %2126 = vmatmul.mubr.bf16.gmra.mrb[0].mxu0 %v1586
  %v2127 = vpop.f32.mrb[0].mxu0
  %v2128 = vadd.f32 %v1627, %v2127
  %v2129 = vpop.f32.mrb[0].mxu0
  %v2130 = vpop.f32.mrb[0].mxu0
  %v2131 = vadd.f32 %v1627, %v2130
  %v2132 = vpop.f32.mrb[0].mxu0
  %2133 = vmatprep.mubr.bf16.mxu0 0
  %2134 = vmatmul.mubr.bf16.gmra.mrb[0].mxu0 %v1587
  %v2135 = vpop.f32.mrb[0].mxu0
  %v2136 = vadd.f32 %v1627, %v2135
  %v2137 = vpop.f32.mrb[0].mxu0
  %v2138 = vpop.f32.mrb[0].mxu0
  %v2139 = vadd.f32 %v1627, %v2138
  %v2140 = vpop.f32.mrb[0].mxu0
  %2141 = vmatprep.mubr.bf16.mxu0 0
  %2142 = vmatmul.mubr.bf16.gmra.mrb[0].mxu0 %v1588
  %v2143 = vpop.f32.mrb[0].mxu0
  %v2144 = vadd.f32 %v1627, %v2143
  %v2145 = vpop.f32.mrb[0].mxu0
  %v2146 = vpop.f32.mrb[0].mxu0
  %v2147 = vadd.f32 %v1627, %v2146
  %v2148 = vpop.f32.mrb[0].mxu0
  %2149 = vmatprep.mubr.bf16.mxu0 0
  %2150 = vmatmul.mubr.bf16.gmra.mrb[0].mxu0 %v1589
  %v2151 = vpop.f32.mrb[0].mxu0
  %v2152 = vadd.f32 %v1627, %v2151
  %v2153 = vpop.f32.mrb[0].mxu0
  %v2154 = vpop.f32.mrb[0].mxu0
  %v2155 = vadd.f32 %v1627, %v2154
  %v2156 = vpop.f32.mrb[0].mxu0
  %2157 = vmatprep.mubr.bf16.mxu0 0
  %2158 = vmatmul.mubr.bf16.gmra.mrb[0].mxu0 %v1590
  %v2159 = vpop.f32.mrb[0].mxu0
  %v2160 = vadd.f32 %v1627, %v2159
  %v2161 = vpop.f32.mrb[0].mxu0
  %v2162 = vpop.f32.mrb[0].mxu0
  %v2163 = vadd.f32 %v1627, %v2162
  %v2164 = vpop.f32.mrb[0].mxu0
  %2165 = vmatprep.mubr.bf16.mxu0 0
  %2166 = vmatmul.mubr.bf16.gmra.mrb[0].mxu0 %v1591
  %v2167 = vpop.f32.mrb[0].mxu0
  %v2168 = vadd.f32 %v1627, %v2167
  %v2169 = vpop.f32.mrb[0].mxu0
  %v2170 = vpop.f32.mrb[0].mxu0
  %v2171 = vadd.f32 %v1627, %v2170
  %v2172 = vpop.f32.mrb[0].mxu0
  %2173 = vmatprep.mubr.bf16.mxu0 0
  %2174 = vmatmul.mubr.bf16.gmra.mrb[0].mxu0 %v1592
  %v2175 = vpop.f32.mrb[0].mxu0
  %v2176 = vadd.f32 %v1627, %v2175
  %v2177 = vpop.f32.mrb[0].mxu0
  %v2178 = vpop.f32.mrb[0].mxu0
  %v2179 = vadd.f32 %v1627, %v2178
  %v2180 = vpop.f32.mrb[0].mxu0
  %2181 = vmatprep.mubr.bf16.mxu0 0
  %2182 = vmatmul.mubr.bf16.gmra.mrb[0].mxu0 %v1593
  %v2183 = vpop.f32.mrb[0].mxu0
  %v2184 = vadd.f32 %v1627, %v2183
  %v2185 = vpop.f32.mrb[0].mxu0
  %v2186 = vpop.f32.mrb[0].mxu0
  %v2187 = vadd.f32 %v1627, %v2186
  %v2188 = vpop.f32.mrb[0].mxu0
  %2189 = vmatprep.mubr.bf16.mxu0 0
  %2190 = vmatmul.mubr.bf16.gmra.mrb[0].mxu0 %v1594
  %v2191 = vpop.f32.mrb[0].mxu0
  %v2192 = vadd.f32 %v1627, %v2191
  %v2193 = vpop.f32.mrb[0].mxu0
  %v2194 = vpop.f32.mrb[0].mxu0
  %v2195 = vadd.f32 %v1627, %v2194
  %v2196 = vpop.f32.mrb[0].mxu0
  %2197 = vmatprep.mubr.bf16.mxu0 0
  %2198 = vmatmul.mubr.bf16.gmra.mrb[0].mxu0 %v1595
  %v2199 = vpop.f32.mrb[0].mxu0
  %v2200 = vadd.f32 %v1627, %v2199
  %v2201 = vpop.f32.mrb[0].mxu0
  %v2202 = vpop.f32.mrb[0].mxu0
  %v2203 = vadd.f32 %v1627, %v2202
  %v2204 = vpop.f32.mrb[0].mxu0
  %2205 = vmatprep.mubr.bf16.mxu0 0
  %2206 = vmatmul.mubr.bf16.gmra.mrb[0].mxu0 %v1596
  %v2207 = vpop.f32.mrb[0].mxu0
  %v2208 = vadd.f32 %v1627, %v2207
  %v2209 = vpop.f32.mrb[0].mxu0
  %v2210 = vpop.f32.mrb[0].mxu0
  %v2211 = vadd.f32 %v1627, %v2210
  %v2212 = vpop.f32.mrb[0].mxu0
  %2213 = vmatprep.mubr.bf16.mxu0 0
  %2214 = vmatmul.mubr.bf16.gmra.mrb[0].mxu0 %v1597
  %v2215 = vpop.f32.mrb[0].mxu0
  %v2216 = vadd.f32 %v1627, %v2215
  %v2217 = vpop.f32.mrb[0].mxu0
  %v2218 = vpop.f32.mrb[0].mxu0
  %v2219 = vadd.f32 %v1627, %v2218
  %v2220 = vpop.f32.mrb[0].mxu0
  %2221 = vmatprep.mubr.bf16.mxu0 0
  %2222 = vmatmul.mubr.bf16.gmra.mrb[0].mxu0 %v1598
  %v2223 = vpop.f32.mrb[0].mxu0
  %v2224 = vadd.f32 %v1627, %v2223
  %v2225 = vpop.f32.mrb[0].mxu0
  %v2226 = vpop.f32.mrb[0].mxu0
  %v2227 = vadd.f32 %v1627, %v2226
  %v2228 = vpop.f32.mrb[0].mxu0
  %2229 = vmatprep.mubr.bf16.mxu0 0
  %2230 = vmatmul.mubr.bf16.gmra.mrb[0].mxu0 %v1599
  %v2231 = vpop.f32.mrb[0].mxu0
  %v2232 = vadd.f32 %v1627, %v2231
  %v2233 = vpop.f32.mrb[0].mxu0
  %v2234 = vpop.f32.mrb[0].mxu0
  %v2235 = vadd.f32 %v1627, %v2234
  %v2236 = vpop.f32.mrb[0].mxu0
  %2237 = vmatprep.mubr.bf16.mxu0 0
  %2238 = vmatmul.mubr.bf16.gmra.mrb[0].mxu0 %v1600
  %v2239 = vpop.f32.mrb[0].mxu0
  %v2240 = vadd.f32 %v1627, %v2239
  %v2241 = vpop.f32.mrb[0].mxu0
  %v2242 = vpop.f32.mrb[0].mxu0
  %v2243 = vadd.f32 %v1627, %v2242
  %v2244 = vpop.f32.mrb[0].mxu0
  %2245 = vmatprep.mubr.bf16.mxu0 0
  %2246 = vmatmul.mubr.bf16.gmra.mrb[0].mxu0 %v1601
  %v2247 = vpop.f32.mrb[0].mxu0
  %v2248 = vadd.f32 %v1627, %v2247
  %v2249 = vpop.f32.mrb[0].mxu0
  %v2250 = vpop.f32.mrb[0].mxu0
  %v2251 = vadd.f32 %v1627, %v2250
  %v2252 = vpop.f32.mrb[0].mxu0
  %2253 = vmatprep.mubr.bf16.mxu0 0
  %2254 = vmatmul.mubr.bf16.gmra.mrb[0].mxu0 %v1602
  %v2255 = vpop.f32.mrb[0].mxu0
  %v2256 = vadd.f32 %v1627, %v2255
  %v2257 = vpop.f32.mrb[0].mxu0
  %v2258 = vpop.f32.mrb[0].mxu0
  %v2259 = vadd.f32 %v1627, %v2258
  %v2260 = vpop.f32.mrb[0].mxu0
  %2261 = vmatprep.mubr.bf16.mxu0 0
  %2262 = vmatmul.mubr.bf16.gmra.mrb[0].mxu0 %v1603
  %v2263 = vpop.f32.mrb[0].mxu0
  %v2264 = vadd.f32 %v1627, %v2263
  %v2265 = vpop.f32.mrb[0].mxu0
  %v2266 = vpop.f32.mrb[0].mxu0
  %v2267 = vadd.f32 %v1627, %v2266
  %v2268 = vpop.f32.mrb[0].mxu0
  %2269 = vmatprep.mubr.bf16.mxu0 0
  %2270 = vmatmul.mubr.bf16.gmra.mrb[0].mxu0 %v1604
  %v2271 = vpop.f32.mrb[0].mxu0
  %v2272 = vadd.f32 %v1627, %v2271
  %v2273 = vpop.f32.mrb[0].mxu0
  %v2274 = vpop.f32.mrb[0].mxu0
  %v2275 = vadd.f32 %v1627, %v2274
  %v2276 = vpop.f32.mrb[0].mxu0
  %2277 = vmatprep.mubr.bf16.mxu0 0
  %2278 = vmatmul.mubr.bf16.gmra.mrb[0].mxu0 %v1605
  %v2279 = vpop.f32.mrb[0].mxu0
  %v2280 = vadd.f32 %v1627, %v2279
  %v2281 = vpop.f32.mrb[0].mxu0
  %v2282 = vpop.f32.mrb[0].mxu0
  %v2283 = vadd.f32 %v1627, %v2282
  %v2284 = vpop.f32.mrb[0].mxu0
  %2285 = vdwg.mxu0
  %v2286 = vmax.f32 %v1712, 0.0
  %v2287 = vmax.f32 %v1715, 0.0
  %v2288 = vmax.f32 %v1720, 0.0
  %v2289 = vmax.f32 %v1723, 0.0
  %v2290 = vmax.f32 %v1728, 0.0
  %v2291 = vmax.f32 %v1731, 0.0
  %v2292 = vmax.f32 %v1736, 0.0
  %v2293 = vmax.f32 %v1739, 0.0
  %v2294 = vmax.f32 %v1744, 0.0
  %v2295 = vmax.f32 %v1747, 0.0
  %v2296 = vmax.f32 %v1752, 0.0
  %v2297 = vmax.f32 %v1755, 0.0
  %v2298 = vmax.f32 %v1760, 0.0
  %v2299 = vmax.f32 %v1763, 0.0
  %v2300 = vmax.f32 %v1768, 0.0
  %v2301 = vmax.f32 %v1771, 0.0
  %v2302 = vmax.f32 %v1776, 0.0
  %v2303 = vmax.f32 %v1779, 0.0
  %v2304 = vmax.f32 %v1784, 0.0
  %v2305 = vmax.f32 %v1787, 0.0
  %v2306 = vmax.f32 %v1792, 0.0
  %v2307 = vmax.f32 %v1795, 0.0
  %v2308 = vmax.f32 %v1800, 0.0
  %v2309 = vmax.f32 %v1803, 0.0
  %v2310 = vmax.f32 %v1808, 0.0
  %v2311 = vmax.f32 %v1811, 0.0
  %v2312 = vmax.f32 %v1816, 0.0
  %v2313 = vmax.f32 %v1819, 0.0
  %v2314 = vmax.f32 %v1824, 0.0
  %v2315 = vmax.f32 %v1827, 0.0
  %v2316 = vmax.f32 %v1832, 0.0
  %v2317 = vmax.f32 %v1835, 0.0
  %v2318 = vmax.f32 %v1840, 0.0
  %v2319 = vmax.f32 %v1843, 0.0
  %v2320 = vmax.f32 %v1848, 0.0
  %v2321 = vmax.f32 %v1851, 0.0
  %v2322 = vmax.f32 %v1856, 0.0
  %v2323 = vmax.f32 %v1859, 0.0
  %v2324 = vmax.f32 %v1864, 0.0
  %v2325 = vmax.f32 %v1867, 0.0
  %v2326 = vmax.f32 %v1872, 0.0
  %v2327 = vmax.f32 %v1875, 0.0
  %v2328 = vmax.f32 %v1880, 0.0
  %v2329 = vmax.f32 %v1883, 0.0
  %v2330 = vmax.f32 %v1888, 0.0
  %v2331 = vmax.f32 %v1891, 0.0
  %v2332 = vmax.f32 %v1896, 0.0
  %v2333 = vmax.f32 %v1899, 0.0
  %v2334 = vmax.f32 %v1904, 0.0
  %v2335 = vmax.f32 %v1907, 0.0
  %v2336 = vmax.f32 %v1912, 0.0
  %v2337 = vmax.f32 %v1915, 0.0
  %v2338 = vmax.f32 %v1920, 0.0
  %v2339 = vmax.f32 %v1923, 0.0
  %v2340 = vmax.f32 %v1928, 0.0
  %v2341 = vmax.f32 %v1931, 0.0
  %v2342 = vmax.f32 %v1936, 0.0
  %v2343 = vmax.f32 %v1939, 0.0
  %v2344 = vmax.f32 %v1944, 0.0
  %v2345 = vmax.f32 %v1947, 0.0
  %v2346 = vmax.f32 %v1952, 0.0
  %v2347 = vmax.f32 %v1955, 0.0
  %v2348 = vmax.f32 %v1960, 0.0
  %v2349 = vmax.f32 %v1963, 0.0
  %v2350 = vmax.f32 %v1968, 0.0
  %v2351 = vmax.f32 %v1971, 0.0
  %v2352 = vmax.f32 %v1976, 0.0
  %v2353 = vmax.f32 %v1979, 0.0
  %v2354 = vmax.f32 %v1984, 0.0
  %v2355 = vmax.f32 %v1987, 0.0
  %v2356 = vmax.f32 %v1992, 0.0
  %v2357 = vmax.f32 %v1995, 0.0
  %v2358 = vmax.f32 %v2000, 0.0
  %v2359 = vmax.f32 %v2003, 0.0
  %v2360 = vmax.f32 %v2008, 0.0
  %v2361 = vmax.f32 %v2011, 0.0
  %v2362 = vmax.f32 %v2016, 0.0
  %v2363 = vmax.f32 %v2019, 0.0
  %v2364 = vmax.f32 %v2024, 0.0
  %v2365 = vmax.f32 %v2027, 0.0
  %v2366 = vmax.f32 %v2032, 0.0
  %v2367 = vmax.f32 %v2035, 0.0
  %v2368 = vmax.f32 %v2040, 0.0
  %v2369 = vmax.f32 %v2043, 0.0
  %v2370 = vmax.f32 %v2048, 0.0
  %v2371 = vmax.f32 %v2051, 0.0
  %v2372 = vmax.f32 %v2056, 0.0
  %v2373 = vmax.f32 %v2059, 0.0
  %v2374 = vmax.f32 %v2064, 0.0
  %v2375 = vmax.f32 %v2067, 0.0
  %v2376 = vmax.f32 %v2072, 0.0
  %v2377 = vmax.f32 %v2075, 0.0
  %v2378 = vmax.f32 %v2080, 0.0
  %v2379 = vmax.f32 %v2083, 0.0
  %v2380 = vmax.f32 %v2088, 0.0
  %v2381 = vmax.f32 %v2091, 0.0
  %v2382 = vmax.f32 %v2096, 0.0
  %v2383 = vmax.f32 %v2099, 0.0
  %v2384 = vmax.f32 %v2104, 0.0
  %v2385 = vmax.f32 %v2107, 0.0
  %v2386 = vmax.f32 %v2112, 0.0
  %v2387 = vmax.f32 %v2115, 0.0
  %v2388 = vmax.f32 %v2120, 0.0
  %v2389 = vmax.f32 %v2123, 0.0
  %v2390 = vmax.f32 %v2128, 0.0
  %v2391 = vmax.f32 %v2131, 0.0
  %v2392 = vmax.f32 %v2136, 0.0
  %v2393 = vmax.f32 %v2139, 0.0
  %v2394 = vmax.f32 %v2144, 0.0
  %v2395 = vmax.f32 %v2147, 0.0
  %v2396 = vmax.f32 %v2152, 0.0
  %v2397 = vmax.f32 %v2155, 0.0
  %v2398 = vmax.f32 %v2160, 0.0
  %v2399 = vmax.f32 %v2163, 0.0
  %v2400 = vmax.f32 %v2168, 0.0
  %v2401 = vmax.f32 %v2171, 0.0
  %v2402 = vmax.f32 %v2176, 0.0
  %v2403 = vmax.f32 %v2179, 0.0
  %v2404 = vmax.f32 %v2184, 0.0
  %v2405 = vmax.f32 %v2187, 0.0
  %v2406 = vmax.f32 %v2192, 0.0
  %v2407 = vmax.f32 %v2195, 0.0
  %v2408 = vmax.f32 %v2200, 0.0
  %v2409 = vmax.f32 %v2203, 0.0
  %v2410 = vmax.f32 %v2208, 0.0
  %v2411 = vmax.f32 %v2211, 0.0
  %v2412 = vmax.f32 %v2216, 0.0
  %v2413 = vmax.f32 %v2219, 0.0
  %v2414 = vmax.f32 %v2224, 0.0
  %v2415 = vmax.f32 %v2227, 0.0
  %v2416 = vmax.f32 %v2232, 0.0
  %v2417 = vmax.f32 %v2235, 0.0
  %v2418 = vmax.f32 %v2240, 0.0
  %v2419 = vmax.f32 %v2243, 0.0
  %v2420 = vmax.f32 %v2248, 0.0
  %v2421 = vmax.f32 %v2251, 0.0
  %v2422 = vmax.f32 %v2256, 0.0
  %v2423 = vmax.f32 %v2259, 0.0
  %v2424 = vmax.f32 %v2264, 0.0
  %v2425 = vmax.f32 %v2267, 0.0
  %v2426 = vmax.f32 %v2272, 0.0
  %v2427 = vmax.f32 %v2275, 0.0
  %v2428 = vmax.f32 %v2280, 0.0
  %v2429 = vmax.f32 %v2283, 0.0
  %v2430 = vpack.c.bf16 %v2287, %v2286
  %v2431 = vpack.c.bf16 %v2289, %v2288
  %v2432 = vpack.c.bf16 %v2291, %v2290
  %v2433 = vpack.c.bf16 %v2293, %v2292
  %v2434 = vpack.c.bf16 %v2295, %v2294
  %v2435 = vpack.c.bf16 %v2297, %v2296
  %v2436 = vpack.c.bf16 %v2299, %v2298
  %v2437 = vpack.c.bf16 %v2301, %v2300
  %v2438 = vpack.c.bf16 %v2303, %v2302
  %v2439 = vpack.c.bf16 %v2305, %v2304
  %v2440 = vpack.c.bf16 %v2307, %v2306
  %v2441 = vpack.c.bf16 %v2309, %v2308
  %v2442 = vpack.c.bf16 %v2311, %v2310
  %v2443 = vpack.c.bf16 %v2313, %v2312
  %v2444 = vpack.c.bf16 %v2315, %v2314
  %v2445 = vpack.c.bf16 %v2317, %v2316
  %v2446 = vpack.c.bf16 %v2319, %v2318
  %v2447 = vpack.c.bf16 %v2321, %v2320
  %v2448 = vpack.c.bf16 %v2323, %v2322
  %v2449 = vpack.c.bf16 %v2325, %v2324
  %v2450 = vpack.c.bf16 %v2327, %v2326
  %v2451 = vpack.c.bf16 %v2329, %v2328
  %v2452 = vpack.c.bf16 %v2331, %v2330
  %v2453 = vpack.c.bf16 %v2333, %v2332
  %v2454 = vpack.c.bf16 %v2335, %v2334
  %v2455 = vpack.c.bf16 %v2337, %v2336
  %v2456 = vpack.c.bf16 %v2339, %v2338
  %v2457 = vpack.c.bf16 %v2341, %v2340
  %v2458 = vpack.c.bf16 %v2343, %v2342
  %v2459 = vpack.c.bf16 %v2345, %v2344
  %v2460 = vpack.c.bf16 %v2347, %v2346
  %v2461 = vpack.c.bf16 %v2349, %v2348
  %v2462 = vpack.c.bf16 %v2351, %v2350
  %v2463 = vpack.c.bf16 %v2353, %v2352
  %v2464 = vpack.c.bf16 %v2355, %v2354
  %v2465 = vpack.c.bf16 %v2357, %v2356
  %v2466 = vpack.c.bf16 %v2359, %v2358
  %v2467 = vpack.c.bf16 %v2361, %v2360
  %v2468 = vpack.c.bf16 %v2363, %v2362
  %v2469 = vpack.c.bf16 %v2365, %v2364
  %v2470 = vpack.c.bf16 %v2367, %v2366
  %v2471 = vpack.c.bf16 %v2369, %v2368
  %v2472 = vpack.c.bf16 %v2371, %v2370
  %v2473 = vpack.c.bf16 %v2373, %v2372
  %v2474 = vpack.c.bf16 %v2375, %v2374
  %v2475 = vpack.c.bf16 %v2377, %v2376
  %v2476 = vpack.c.bf16 %v2379, %v2378
  %v2477 = vpack.c.bf16 %v2381, %v2380
  %v2478 = vpack.c.bf16 %v2383, %v2382
  %v2479 = vpack.c.bf16 %v2385, %v2384
  %v2480 = vpack.c.bf16 %v2387, %v2386
  %v2481 = vpack.c.bf16 %v2389, %v2388
  %v2482 = vpack.c.bf16 %v2391, %v2390
  %v2483 = vpack.c.bf16 %v2393, %v2392
  %v2484 = vpack.c.bf16 %v2395, %v2394
  %v2485 = vpack.c.bf16 %v2397, %v2396
  %v2486 = vpack.c.bf16 %v2399, %v2398
  %v2487 = vpack.c.bf16 %v2401, %v2400
  %v2488 = vpack.c.bf16 %v2403, %v2402
  %v2489 = vpack.c.bf16 %v2405, %v2404
  %v2490 = vpack.c.bf16 %v2407, %v2406
  %v2491 = vpack.c.bf16 %v2409, %v2408
  %v2492 = vpack.c.bf16 %v2411, %v2410
  %v2493 = vpack.c.bf16 %v2413, %v2412
  %v2494 = vpack.c.bf16 %v2415, %v2414
  %v2495 = vpack.c.bf16 %v2417, %v2416
  %v2496 = vpack.c.bf16 %v2419, %v2418
  %v2497 = vpack.c.bf16 %v2421, %v2420
  %v2498 = vpack.c.bf16 %v2423, %v2422
  %v2499 = vpack.c.bf16 %v2425, %v2424
  %v2500 = vpack.c.bf16 %v2427, %v2426
  %v2501 = vpack.c.bf16 %v2429, %v2428
  %v2502 = vlaneseq
  %v2503 = vshrl.u32 %v2502, 7
  %v2504 = vadd.s32 %v2503, 8
  %v2505 = vadd.s32 %v2503, 16
  %v2506 = vadd.s32 %v2503, 24
  %v2507 = vadd.s32 %v2503, 32
  %v2508 = vadd.s32 %v2503, 40
  %v2509 = vadd.s32 %v2503, 48
  %v2510 = vadd.s32 %v2503, 56
  %v2511 = vadd.s32 %v2503, 64
  %v2512 = vadd.s32 %v2503, 72
  %v2513 = vadd.s32 %v2503, 80
  %v2514 = vadd.s32 %v2503, 88
  %v2515 = vadd.s32 %v2503, 96
  %v2516 = vadd.s32 %v2503, 104
  %v2517 = vadd.s32 %v2503, 112
  %v2518 = vadd.s32 %v2503, 120
  %v2519 = vadd.s32 %v2503, 128
  %v2520 = vadd.s32 %v2503, 136
  %v2521 = vadd.s32 %v2503, 144
  %v2522 = vadd.s32 %v2503, 152
  %v2523 = vadd.s32 %v2503, 160
  %v2524 = vadd.s32 %v2503, 168
  %v2525 = vadd.s32 %v2503, 176
  %v2526 = vadd.s32 %v2503, 184
  %v2527 = vadd.s32 %v2503, 192
  %v2528 = vadd.s32 %v2503, 200
  %v2529 = vadd.s32 %v2503, 208
  %v2530 = vadd.s32 %v2503, 216
  %v2531 = vadd.s32 %v2503, 224
  %v2532 = vadd.s32 %v2503, 232
  %v2533 = vadd.s32 %v2503, 240
  %v2534 = vadd.s32 %v2503, 248
  %v2535 = vadd.s32 %v2503, 256
  %v2536 = vadd.s32 %v2503, 264
  %v2537 = vadd.s32 %v2503, 272
  %v2538 = vadd.s32 %v2503, 280
  %v2539 = vadd.s32 %v2503, 288
  %v2540 = vadd.s32 %v2503, 296
  %v2541 = vadd.s32 %v2503, 304
  %v2542 = vadd.s32 %v2503, 312
  %v2543 = vadd.s32 %v2503, 320
  %v2544 = vadd.s32 %v2503, 328
  %v2545 = vadd.s32 %v2503, 336
  %v2546 = vadd.s32 %v2503, 344
  %v2547 = vadd.s32 %v2503, 352
  %v2548 = vadd.s32 %v2503, 360
  %v2549 = vadd.s32 %v2503, 368
  %v2550 = vadd.s32 %v2503, 376
  %v2551 = vadd.s32 %v2503, 384
  %v2552 = vadd.s32 %v2503, 392
  %v2553 = vadd.s32 %v2503, 400
  %v2554 = vadd.s32 %v2503, 408
  %v2555 = vadd.s32 %v2503, 416
  %v2556 = vadd.s32 %v2503, 424
  %v2557 = vadd.s32 %v2503, 432
  %v2558 = vadd.s32 %v2503, 440
  %v2559 = vadd.s32 %v2503, 448
  %v2560 = vadd.s32 %v2503, 456
  %v2561 = vadd.s32 %v2503, 464
  %v2562 = vadd.s32 %v2503, 472
  %v2563 = vadd.s32 %v2503, 480
  %v2564 = vadd.s32 %v2503, 488
  %v2565 = vadd.s32 %v2503, 496
  %v2566 = vadd.s32 %v2503, 504
  %v2567 = vadd.s32 %v2503, 512
  %v2568 = vadd.s32 %v2503, 520
  %v2569 = vadd.s32 %v2503, 528
  %v2570 = vadd.s32 %v2503, 536
  %v2571 = vadd.s32 %v2503, 544
  %v2572 = vadd.s32 %v2503, 552
  %v2573 = vadd.s32 %v2503, 560
  %v2574 = vadd.s32 %v2503, 568
  %v2575 = vshra.s32 %v2503, 5
  %v2576 = vshra.s32 %v2504, 5
  %v2577 = vshra.s32 %v2505, 5
  %v2578 = vshra.s32 %v2506, 5
  %v2579 = vshra.s32 %v2507, 5
  %v2580 = vshra.s32 %v2508, 5
  %v2581 = vshra.s32 %v2509, 5
  %v2582 = vshra.s32 %v2510, 5
  %v2583 = vshra.s32 %v2511, 5
  %v2584 = vshra.s32 %v2512, 5
  %v2585 = vshra.s32 %v2513, 5
  %v2586 = vshra.s32 %v2514, 5
  %v2587 = vshra.s32 %v2515, 5
  %v2588 = vshra.s32 %v2516, 5
  %v2589 = vshra.s32 %v2517, 5
  %v2590 = vshra.s32 %v2518, 5
  %v2591 = vshra.s32 %v2519, 5
  %v2592 = vshra.s32 %v2520, 5
  %v2593 = vshra.s32 %v2521, 5
  %v2594 = vshra.s32 %v2522, 5
  %v2595 = vshra.s32 %v2523, 5
  %v2596 = vshra.s32 %v2524, 5
  %v2597 = vshra.s32 %v2525, 5
  %v2598 = vshra.s32 %v2526, 5
  %v2599 = vshra.s32 %v2527, 5
  %v2600 = vshra.s32 %v2528, 5
  %v2601 = vshra.s32 %v2529, 5
  %v2602 = vshra.s32 %v2530, 5
  %v2603 = vshra.s32 %v2531, 5
  %v2604 = vshra.s32 %v2532, 5
  %v2605 = vshra.s32 %v2533, 5
  %v2606 = vshra.s32 %v2534, 5
  %v2607 = vshra.s32 %v2535, 5
  %v2608 = vshra.s32 %v2536, 5
  %v2609 = vshra.s32 %v2537, 5
  %v2610 = vshra.s32 %v2538, 5
  %v2611 = vshra.s32 %v2539, 5
  %v2612 = vshra.s32 %v2540, 5
  %v2613 = vshra.s32 %v2541, 5
  %v2614 = vshra.s32 %v2542, 5
  %v2615 = vshra.s32 %v2543, 5
  %v2616 = vshra.s32 %v2544, 5
  %v2617 = vshra.s32 %v2545, 5
  %v2618 = vshra.s32 %v2546, 5
  %v2619 = vshra.s32 %v2547, 5
  %v2620 = vshra.s32 %v2548, 5
  %v2621 = vshra.s32 %v2549, 5
  %v2622 = vshra.s32 %v2550, 5
  %v2623 = vshra.s32 %v2551, 5
  %v2624 = vshra.s32 %v2552, 5
  %v2625 = vshra.s32 %v2553, 5
  %v2626 = vshra.s32 %v2554, 5
  %v2627 = vshra.s32 %v2555, 5
  %v2628 = vshra.s32 %v2556, 5
  %v2629 = vshra.s32 %v2557, 5
  %v2630 = vshra.s32 %v2558, 5
  %v2631 = vshra.s32 %v2559, 5
  %v2632 = vshra.s32 %v2560, 5
  %v2633 = vshra.s32 %v2561, 5
  %v2634 = vshra.s32 %v2562, 5
  %v2635 = vshra.s32 %v2563, 5
  %v2636 = vshra.s32 %v2564, 5
  %v2637 = vshra.s32 %v2565, 5
  %v2638 = vshra.s32 %v2566, 5
  %v2639 = vshra.s32 %v2567, 5
  %v2640 = vshra.s32 %v2568, 5
  %v2641 = vshra.s32 %v2569, 5
  %v2642 = vshra.s32 %v2570, 5
  %v2643 = vshra.s32 %v2571, 5
  %v2644 = vshra.s32 %v2572, 5
  %v2645 = vshra.s32 %v2573, 5
  %v2646 = vshra.s32 %v2574, 5
  %v2647 = vand.u32 %v2503, 31
  %v2648 = vand.u32 %v2504, 31
  %v2649 = vand.u32 %v2505, 31
  %v2650 = vand.u32 %v2506, 31
  %v2651 = vand.u32 %v2507, 31
  %v2652 = vand.u32 %v2508, 31
  %v2653 = vand.u32 %v2509, 31
  %v2654 = vand.u32 %v2510, 31
  %v2655 = vand.u32 %v2511, 31
  %v2656 = vand.u32 %v2512, 31
  %v2657 = vand.u32 %v2513, 31
  %v2658 = vand.u32 %v2514, 31
  %v2659 = vand.u32 %v2515, 31
  %v2660 = vand.u32 %v2516, 31
  %v2661 = vand.u32 %v2517, 31
  %v2662 = vand.u32 %v2518, 31
  %v2663 = vand.u32 %v2519, 31
  %v2664 = vand.u32 %v2520, 31
  %v2665 = vand.u32 %v2521, 31
  %v2666 = vand.u32 %v2522, 31
  %v2667 = vand.u32 %v2523, 31
  %v2668 = vand.u32 %v2524, 31
  %v2669 = vand.u32 %v2525, 31
  %v2670 = vand.u32 %v2526, 31
  %v2671 = vand.u32 %v2527, 31
  %v2672 = vand.u32 %v2528, 31
  %v2673 = vand.u32 %v2529, 31
  %v2674 = vand.u32 %v2530, 31
  %v2675 = vand.u32 %v2531, 31
  %v2676 = vand.u32 %v2532, 31
  %v2677 = vand.u32 %v2533, 31
  %v2678 = vand.u32 %v2534, 31
  %v2679 = vand.u32 %v2535, 31
  %v2680 = vand.u32 %v2536, 31
  %v2681 = vand.u32 %v2537, 31
  %v2682 = vand.u32 %v2538, 31
  %v2683 = vand.u32 %v2539, 31
  %v2684 = vand.u32 %v2540, 31
  %v2685 = vand.u32 %v2541, 31
  %v2686 = vand.u32 %v2542, 31
  %v2687 = vand.u32 %v2543, 31
  %v2688 = vand.u32 %v2544, 31
  %v2689 = vand.u32 %v2545, 31
  %v2690 = vand.u32 %v2546, 31
  %v2691 = vand.u32 %v2547, 31
  %v2692 = vand.u32 %v2548, 31
  %v2693 = vand.u32 %v2549, 31
  %v2694 = vand.u32 %v2550, 31
  %v2695 = vand.u32 %v2551, 31
  %v2696 = vand.u32 %v2552, 31
  %v2697 = vand.u32 %v2553, 31
  %v2698 = vand.u32 %v2554, 31
  %v2699 = vand.u32 %v2555, 31
  %v2700 = vand.u32 %v2556, 31
  %v2701 = vand.u32 %v2557, 31
  %v2702 = vand.u32 %v2558, 31
  %v2703 = vand.u32 %v2559, 31
  %v2704 = vand.u32 %v2560, 31
  %v2705 = vand.u32 %v2561, 31
  %v2706 = vand.u32 %v2562, 31
  %v2707 = vand.u32 %v2563, 31
  %v2708 = vand.u32 %v2564, 31
  %v2709 = vand.u32 %v2565, 31
  %v2710 = vand.u32 %v2566, 31
  %v2711 = vand.u32 %v2567, 31
  %v2712 = vand.u32 %v2568, 31
  %v2713 = vand.u32 %v2569, 31
  %v2714 = vand.u32 %v2570, 31
  %v2715 = vand.u32 %v2571, 31
  %v2716 = vand.u32 %v2572, 31
  %v2717 = vand.u32 %v2573, 31
  %v2718 = vand.u32 %v2574, 31
  %vm2719 = vcmp.ge.s32.totalorder %v2575, 1
  %vm2720 = vcmp.ge.s32.totalorder %v2576, 1
  %vm2721 = vcmp.ge.s32.totalorder %v2577, 1
  %vm2722 = vcmp.ge.s32.totalorder %v2578, 1
  %vm2723 = vcmp.ge.s32.totalorder %v2579, 1
  %vm2724 = vcmp.ge.s32.totalorder %v2580, 1
  %vm2725 = vcmp.ge.s32.totalorder %v2581, 1
  %vm2726 = vcmp.ge.s32.totalorder %v2582, 1
  %vm2727 = vcmp.ge.s32.totalorder %v2583, 1
  %vm2728 = vcmp.ge.s32.totalorder %v2584, 1
  %vm2729 = vcmp.ge.s32.totalorder %v2585, 1
  %vm2730 = vcmp.ge.s32.totalorder %v2586, 1
  %vm2731 = vcmp.ge.s32.totalorder %v2587, 1
  %vm2732 = vcmp.ge.s32.totalorder %v2588, 1
  %vm2733 = vcmp.ge.s32.totalorder %v2589, 1
  %vm2734 = vcmp.ge.s32.totalorder %v2590, 1
  %vm2735 = vcmp.ge.s32.totalorder %v2591, 1
  %vm2736 = vcmp.ge.s32.totalorder %v2592, 1
  %vm2737 = vcmp.ge.s32.totalorder %v2593, 1
  %vm2738 = vcmp.ge.s32.totalorder %v2594, 1
  %vm2739 = vcmp.ge.s32.totalorder %v2595, 1
  %vm2740 = vcmp.ge.s32.totalorder %v2596, 1
  %vm2741 = vcmp.ge.s32.totalorder %v2597, 1
  %vm2742 = vcmp.ge.s32.totalorder %v2598, 1
  %vm2743 = vcmp.ge.s32.totalorder %v2599, 1
  %vm2744 = vcmp.ge.s32.totalorder %v2600, 1
  %vm2745 = vcmp.ge.s32.totalorder %v2601, 1
  %vm2746 = vcmp.ge.s32.totalorder %v2602, 1
  %vm2747 = vcmp.ge.s32.totalorder %v2603, 1
  %vm2748 = vcmp.ge.s32.totalorder %v2604, 1
  %vm2749 = vcmp.ge.s32.totalorder %v2605, 1
  %vm2750 = vcmp.ge.s32.totalorder %v2606, 1
  %vm2751 = vcmp.ge.s32.totalorder %v2607, 1
  %vm2752 = vcmp.ge.s32.totalorder %v2608, 1
  %vm2753 = vcmp.ge.s32.totalorder %v2609, 1
  %vm2754 = vcmp.ge.s32.totalorder %v2610, 1
  %vm2755 = vcmp.ge.s32.totalorder %v2611, 1
  %vm2756 = vcmp.ge.s32.totalorder %v2612, 1
  %vm2757 = vcmp.ge.s32.totalorder %v2613, 1
  %vm2758 = vcmp.ge.s32.totalorder %v2614, 1
  %vm2759 = vcmp.ge.s32.totalorder %v2615, 1
  %vm2760 = vcmp.ge.s32.totalorder %v2616, 1
  %vm2761 = vcmp.ge.s32.totalorder %v2617, 1
  %vm2762 = vcmp.ge.s32.totalorder %v2618, 1
  %vm2763 = vcmp.ge.s32.totalorder %v2619, 1
  %vm2764 = vcmp.ge.s32.totalorder %v2620, 1
  %vm2765 = vcmp.ge.s32.totalorder %v2621, 1
  %vm2766 = vcmp.ge.s32.totalorder %v2622, 1
  %vm2767 = vcmp.ge.s32.totalorder %v2623, 1
  %vm2768 = vcmp.ge.s32.totalorder %v2624, 1
  %vm2769 = vcmp.ge.s32.totalorder %v2625, 1
  %vm2770 = vcmp.ge.s32.totalorder %v2626, 1
  %vm2771 = vcmp.ge.s32.totalorder %v2627, 1
  %vm2772 = vcmp.ge.s32.totalorder %v2628, 1
  %vm2773 = vcmp.ge.s32.totalorder %v2629, 1
  %vm2774 = vcmp.ge.s32.totalorder %v2630, 1
  %vm2775 = vcmp.ge.s32.totalorder %v2631, 1
  %vm2776 = vcmp.ge.s32.totalorder %v2632, 1
  %vm2777 = vcmp.ge.s32.totalorder %v2633, 1
  %vm2778 = vcmp.ge.s32.totalorder %v2634, 1
  %vm2779 = vcmp.ge.s32.totalorder %v2635, 1
  %vm2780 = vcmp.ge.s32.totalorder %v2636, 1
  %vm2781 = vcmp.ge.s32.totalorder %v2637, 1
  %vm2782 = vcmp.ge.s32.totalorder %v2638, 1
  %vm2783 = vcmp.ge.s32.totalorder %v2639, 1
  %vm2784 = vcmp.ge.s32.totalorder %v2640, 1
  %vm2785 = vcmp.ge.s32.totalorder %v2641, 1
  %vm2786 = vcmp.ge.s32.totalorder %v2642, 1
  %vm2787 = vcmp.ge.s32.totalorder %v2643, 1
  %vm2788 = vcmp.ge.s32.totalorder %v2644, 1
  %vm2789 = vcmp.ge.s32.totalorder %v2645, 1
  %vm2790 = vcmp.ge.s32.totalorder %v2646, 1
  %vm2791 = vcmp.le.s32.totalorder %v2575, 16
  %vm2792 = vcmp.le.s32.totalorder %v2576, 16
  %vm2793 = vcmp.le.s32.totalorder %v2577, 16
  %vm2794 = vcmp.le.s32.totalorder %v2578, 16
  %vm2795 = vcmp.le.s32.totalorder %v2579, 16
  %vm2796 = vcmp.le.s32.totalorder %v2580, 16
  %vm2797 = vcmp.le.s32.totalorder %v2581, 16
  %vm2798 = vcmp.le.s32.totalorder %v2582, 16
  %vm2799 = vcmp.le.s32.totalorder %v2583, 16
  %vm2800 = vcmp.le.s32.totalorder %v2584, 16
  %vm2801 = vcmp.le.s32.totalorder %v2585, 16
  %vm2802 = vcmp.le.s32.totalorder %v2586, 16
  %vm2803 = vcmp.le.s32.totalorder %v2587, 16
  %vm2804 = vcmp.le.s32.totalorder %v2588, 16
  %vm2805 = vcmp.le.s32.totalorder %v2589, 16
  %vm2806 = vcmp.le.s32.totalorder %v2590, 16
  %vm2807 = vcmp.le.s32.totalorder %v2591, 16
  %vm2808 = vcmp.le.s32.totalorder %v2592, 16
  %vm2809 = vcmp.le.s32.totalorder %v2593, 16
  %vm2810 = vcmp.le.s32.totalorder %v2594, 16
  %vm2811 = vcmp.le.s32.totalorder %v2595, 16
  %vm2812 = vcmp.le.s32.totalorder %v2596, 16
  %vm2813 = vcmp.le.s32.totalorder %v2597, 16
  %vm2814 = vcmp.le.s32.totalorder %v2598, 16
  %vm2815 = vcmp.le.s32.totalorder %v2599, 16
  %vm2816 = vcmp.le.s32.totalorder %v2600, 16
  %vm2817 = vcmp.le.s32.totalorder %v2601, 16
  %vm2818 = vcmp.le.s32.totalorder %v2602, 16
  %vm2819 = vcmp.le.s32.totalorder %v2603, 16
  %vm2820 = vcmp.le.s32.totalorder %v2604, 16
  %vm2821 = vcmp.le.s32.totalorder %v2605, 16
  %vm2822 = vcmp.le.s32.totalorder %v2606, 16
  %vm2823 = vcmp.le.s32.totalorder %v2607, 16
  %vm2824 = vcmp.le.s32.totalorder %v2608, 16
  %vm2825 = vcmp.le.s32.totalorder %v2609, 16
  %vm2826 = vcmp.le.s32.totalorder %v2610, 16
  %vm2827 = vcmp.le.s32.totalorder %v2611, 16
  %vm2828 = vcmp.le.s32.totalorder %v2612, 16
  %vm2829 = vcmp.le.s32.totalorder %v2613, 16
  %vm2830 = vcmp.le.s32.totalorder %v2614, 16
  %vm2831 = vcmp.le.s32.totalorder %v2615, 16
  %vm2832 = vcmp.le.s32.totalorder %v2616, 16
  %vm2833 = vcmp.le.s32.totalorder %v2617, 16
  %vm2834 = vcmp.le.s32.totalorder %v2618, 16
  %vm2835 = vcmp.le.s32.totalorder %v2619, 16
  %vm2836 = vcmp.le.s32.totalorder %v2620, 16
  %vm2837 = vcmp.le.s32.totalorder %v2621, 16
  %vm2838 = vcmp.le.s32.totalorder %v2622, 16
  %vm2839 = vcmp.le.s32.totalorder %v2623, 16
  %vm2840 = vcmp.le.s32.totalorder %v2624, 16
  %vm2841 = vcmp.le.s32.totalorder %v2625, 16
  %vm2842 = vcmp.le.s32.totalorder %v2626, 16
  %vm2843 = vcmp.le.s32.totalorder %v2627, 16
  %vm2844 = vcmp.le.s32.totalorder %v2628, 16
  %vm2845 = vcmp.le.s32.totalorder %v2629, 16
  %vm2846 = vcmp.le.s32.totalorder %v2630, 16
  %vm2847 = vcmp.le.s32.totalorder %v2631, 16
  %vm2848 = vcmp.le.s32.totalorder %v2632, 16
  %vm2849 = vcmp.le.s32.totalorder %v2633, 16
  %vm2850 = vcmp.le.s32.totalorder %v2634, 16
  %vm2851 = vcmp.le.s32.totalorder %v2635, 16
  %vm2852 = vcmp.le.s32.totalorder %v2636, 16
  %vm2853 = vcmp.le.s32.totalorder %v2637, 16
  %vm2854 = vcmp.le.s32.totalorder %v2638, 16
  %vm2855 = vcmp.le.s32.totalorder %v2639, 16
  %vm2856 = vcmp.le.s32.totalorder %v2640, 16
  %vm2857 = vcmp.le.s32.totalorder %v2641, 16
  %vm2858 = vcmp.le.s32.totalorder %v2642, 16
  %vm2859 = vcmp.le.s32.totalorder %v2643, 16
  %vm2860 = vcmp.le.s32.totalorder %v2644, 16
  %vm2861 = vcmp.le.s32.totalorder %v2645, 16
  %vm2862 = vcmp.le.s32.totalorder %v2646, 16
  %vm2863 = vmand %vm2719, %vm2791
  %vm2864 = vmand %vm2720, %vm2792
  %vm2865 = vmand %vm2721, %vm2793
  %vm2866 = vmand %vm2722, %vm2794
  %vm2867 = vmand %vm2723, %vm2795
  %vm2868 = vmand %vm2724, %vm2796
  %vm2869 = vmand %vm2725, %vm2797
  %vm2870 = vmand %vm2726, %vm2798
  %vm2871 = vmand %vm2727, %vm2799
  %vm2872 = vmand %vm2728, %vm2800
  %vm2873 = vmand %vm2729, %vm2801
  %vm2874 = vmand %vm2730, %vm2802
  %vm2875 = vmand %vm2731, %vm2803
  %vm2876 = vmand %vm2732, %vm2804
  %vm2877 = vmand %vm2733, %vm2805
  %vm2878 = vmand %vm2734, %vm2806
  %vm2879 = vmand %vm2735, %vm2807
  %vm2880 = vmand %vm2736, %vm2808
  %vm2881 = vmand %vm2737, %vm2809
  %vm2882 = vmand %vm2738, %vm2810
  %vm2883 = vmand %vm2739, %vm2811
  %vm2884 = vmand %vm2740, %vm2812
  %vm2885 = vmand %vm2741, %vm2813
  %vm2886 = vmand %vm2742, %vm2814
  %vm2887 = vmand %vm2743, %vm2815
  %vm2888 = vmand %vm2744, %vm2816
  %vm2889 = vmand %vm2745, %vm2817
  %vm2890 = vmand %vm2746, %vm2818
  %vm2891 = vmand %vm2747, %vm2819
  %vm2892 = vmand %vm2748, %vm2820
  %vm2893 = vmand %vm2749, %vm2821
  %vm2894 = vmand %vm2750, %vm2822
  %vm2895 = vmand %vm2751, %vm2823
  %vm2896 = vmand %vm2752, %vm2824
  %vm2897 = vmand %vm2753, %vm2825
  %vm2898 = vmand %vm2754, %vm2826
  %vm2899 = vmand %vm2755, %vm2827
  %vm2900 = vmand %vm2756, %vm2828
  %vm2901 = vmand %vm2757, %vm2829
  %vm2902 = vmand %vm2758, %vm2830
  %vm2903 = vmand %vm2759, %vm2831
  %vm2904 = vmand %vm2760, %vm2832
  %vm2905 = vmand %vm2761, %vm2833
  %vm2906 = vmand %vm2762, %vm2834
  %vm2907 = vmand %vm2763, %vm2835
  %vm2908 = vmand %vm2764, %vm2836
  %vm2909 = vmand %vm2765, %vm2837
  %vm2910 = vmand %vm2766, %vm2838
  %vm2911 = vmand %vm2767, %vm2839
  %vm2912 = vmand %vm2768, %vm2840
  %vm2913 = vmand %vm2769, %vm2841
  %vm2914 = vmand %vm2770, %vm2842
  %vm2915 = vmand %vm2771, %vm2843
  %vm2916 = vmand %vm2772, %vm2844
  %vm2917 = vmand %vm2773, %vm2845
  %vm2918 = vmand %vm2774, %vm2846
  %vm2919 = vmand %vm2775, %vm2847
  %vm2920 = vmand %vm2776, %vm2848
  %vm2921 = vmand %vm2777, %vm2849
  %vm2922 = vmand %vm2778, %vm2850
  %vm2923 = vmand %vm2779, %vm2851
  %vm2924 = vmand %vm2780, %vm2852
  %vm2925 = vmand %vm2781, %vm2853
  %vm2926 = vmand %vm2782, %vm2854
  %vm2927 = vmand %vm2783, %vm2855
  %vm2928 = vmand %vm2784, %vm2856
  %vm2929 = vmand %vm2785, %vm2857
  %vm2930 = vmand %vm2786, %vm2858
  %vm2931 = vmand %vm2787, %vm2859
  %vm2932 = vmand %vm2788, %vm2860
  %vm2933 = vmand %vm2789, %vm2861
  %vm2934 = vmand %vm2790, %vm2862
  %vm2935 = vcmp.ge.s32.totalorder %v2647, 1
  %vm2936 = vcmp.ge.s32.totalorder %v2648, 1
  %vm2937 = vcmp.ge.s32.totalorder %v2649, 1
  %vm2938 = vcmp.ge.s32.totalorder %v2650, 1
  %vm2939 = vcmp.ge.s32.totalorder %v2651, 1
  %vm2940 = vcmp.ge.s32.totalorder %v2652, 1
  %vm2941 = vcmp.ge.s32.totalorder %v2653, 1
  %vm2942 = vcmp.ge.s32.totalorder %v2654, 1
  %vm2943 = vcmp.ge.s32.totalorder %v2655, 1
  %vm2944 = vcmp.ge.s32.totalorder %v2656, 1
  %vm2945 = vcmp.ge.s32.totalorder %v2657, 1
  %vm2946 = vcmp.ge.s32.totalorder %v2658, 1
  %vm2947 = vcmp.ge.s32.totalorder %v2659, 1
  %vm2948 = vcmp.ge.s32.totalorder %v2660, 1
  %vm2949 = vcmp.ge.s32.totalorder %v2661, 1
  %vm2950 = vcmp.ge.s32.totalorder %v2662, 1
  %vm2951 = vcmp.ge.s32.totalorder %v2663, 1
  %vm2952 = vcmp.ge.s32.totalorder %v2664, 1
  %vm2953 = vcmp.ge.s32.totalorder %v2665, 1
  %vm2954 = vcmp.ge.s32.totalorder %v2666, 1
  %vm2955 = vcmp.ge.s32.totalorder %v2667, 1
  %vm2956 = vcmp.ge.s32.totalorder %v2668, 1
  %vm2957 = vcmp.ge.s32.totalorder %v2669, 1
  %vm2958 = vcmp.ge.s32.totalorder %v2670, 1
  %vm2959 = vcmp.ge.s32.totalorder %v2671, 1
  %vm2960 = vcmp.ge.s32.totalorder %v2672, 1
  %vm2961 = vcmp.ge.s32.totalorder %v2673, 1
  %vm2962 = vcmp.ge.s32.totalorder %v2674, 1
  %vm2963 = vcmp.ge.s32.totalorder %v2675, 1
  %vm2964 = vcmp.ge.s32.totalorder %v2676, 1
  %vm2965 = vcmp.ge.s32.totalorder %v2677, 1
  %vm2966 = vcmp.ge.s32.totalorder %v2678, 1
  %vm2967 = vcmp.ge.s32.totalorder %v2679, 1
  %vm2968 = vcmp.ge.s32.totalorder %v2680, 1
  %vm2969 = vcmp.ge.s32.totalorder %v2681, 1
  %vm2970 = vcmp.ge.s32.totalorder %v2682, 1
  %vm2971 = vcmp.ge.s32.totalorder %v2683, 1
  %vm2972 = vcmp.ge.s32.totalorder %v2684, 1
  %vm2973 = vcmp.ge.s32.totalorder %v2685, 1
  %vm2974 = vcmp.ge.s32.totalorder %v2686, 1
  %vm2975 = vcmp.ge.s32.totalorder %v2687, 1
  %vm2976 = vcmp.ge.s32.totalorder %v2688, 1
  %vm2977 = vcmp.ge.s32.totalorder %v2689, 1
  %vm2978 = vcmp.ge.s32.totalorder %v2690, 1
  %vm2979 = vcmp.ge.s32.totalorder %v2691, 1
  %vm2980 = vcmp.ge.s32.totalorder %v2692, 1
  %vm2981 = vcmp.ge.s32.totalorder %v2693, 1
  %vm2982 = vcmp.ge.s32.totalorder %v2694, 1
  %vm2983 = vcmp.ge.s32.totalorder %v2695, 1
  %vm2984 = vcmp.ge.s32.totalorder %v2696, 1
  %vm2985 = vcmp.ge.s32.totalorder %v2697, 1
  %vm2986 = vcmp.ge.s32.totalorder %v2698, 1
  %vm2987 = vcmp.ge.s32.totalorder %v2699, 1
  %vm2988 = vcmp.ge.s32.totalorder %v2700, 1
  %vm2989 = vcmp.ge.s32.totalorder %v2701, 1
  %vm2990 = vcmp.ge.s32.totalorder %v2702, 1
  %vm2991 = vcmp.ge.s32.totalorder %v2703, 1
  %vm2992 = vcmp.ge.s32.totalorder %v2704, 1
  %vm2993 = vcmp.ge.s32.totalorder %v2705, 1
  %vm2994 = vcmp.ge.s32.totalorder %v2706, 1
  %vm2995 = vcmp.ge.s32.totalorder %v2707, 1
  %vm2996 = vcmp.ge.s32.totalorder %v2708, 1
  %vm2997 = vcmp.ge.s32.totalorder %v2709, 1
  %vm2998 = vcmp.ge.s32.totalorder %v2710, 1
  %vm2999 = vcmp.ge.s32.totalorder %v2711, 1
  %vm3000 = vcmp.ge.s32.totalorder %v2712, 1
  %vm3001 = vcmp.ge.s32.totalorder %v2713, 1
  %vm3002 = vcmp.ge.s32.totalorder %v2714, 1
  %vm3003 = vcmp.ge.s32.totalorder %v2715, 1
  %vm3004 = vcmp.ge.s32.totalorder %v2716, 1
  %vm3005 = vcmp.ge.s32.totalorder %v2717, 1
  %vm3006 = vcmp.ge.s32.totalorder %v2718, 1
  %vm3007 = vmand %vm2863, %vm2935
  %vm3008 = vmand %vm2864, %vm2936
  %vm3009 = vmand %vm2865, %vm2937
  %vm3010 = vmand %vm2866, %vm2938
  %vm3011 = vmand %vm2867, %vm2939
  %vm3012 = vmand %vm2868, %vm2940
  %vm3013 = vmand %vm2869, %vm2941
  %vm3014 = vmand %vm2870, %vm2942
  %vm3015 = vmand %vm2871, %vm2943
  %vm3016 = vmand %vm2872, %vm2944
  %vm3017 = vmand %vm2873, %vm2945
  %vm3018 = vmand %vm2874, %vm2946
  %vm3019 = vmand %vm2875, %vm2947
  %vm3020 = vmand %vm2876, %vm2948
  %vm3021 = vmand %vm2877, %vm2949
  %vm3022 = vmand %vm2878, %vm2950
  %vm3023 = vmand %vm2879, %vm2951
  %vm3024 = vmand %vm2880, %vm2952
  %vm3025 = vmand %vm2881, %vm2953
  %vm3026 = vmand %vm2882, %vm2954
  %vm3027 = vmand %vm2883, %vm2955
  %vm3028 = vmand %vm2884, %vm2956
  %vm3029 = vmand %vm2885, %vm2957
  %vm3030 = vmand %vm2886, %vm2958
  %vm3031 = vmand %vm2887, %vm2959
  %vm3032 = vmand %vm2888, %vm2960
  %vm3033 = vmand %vm2889, %vm2961
  %vm3034 = vmand %vm2890, %vm2962
  %vm3035 = vmand %vm2891, %vm2963
  %vm3036 = vmand %vm2892, %vm2964
  %vm3037 = vmand %vm2893, %vm2965
  %vm3038 = vmand %vm2894, %vm2966
  %vm3039 = vmand %vm2895, %vm2967
  %vm3040 = vmand %vm2896, %vm2968
  %vm3041 = vmand %vm2897, %vm2969
  %vm3042 = vmand %vm2898, %vm2970
  %vm3043 = vmand %vm2899, %vm2971
  %vm3044 = vmand %vm2900, %vm2972
  %vm3045 = vmand %vm2901, %vm2973
  %vm3046 = vmand %vm2902, %vm2974
  %vm3047 = vmand %vm2903, %vm2975
  %vm3048 = vmand %vm2904, %vm2976
  %vm3049 = vmand %vm2905, %vm2977
  %vm3050 = vmand %vm2906, %vm2978
  %vm3051 = vmand %vm2907, %vm2979
  %vm3052 = vmand %vm2908, %vm2980
  %vm3053 = vmand %vm2909, %vm2981
  %vm3054 = vmand %vm2910, %vm2982
  %vm3055 = vmand %vm2911, %vm2983
  %vm3056 = vmand %vm2912, %vm2984
  %vm3057 = vmand %vm2913, %vm2985
  %vm3058 = vmand %vm2914, %vm2986
  %vm3059 = vmand %vm2915, %vm2987
  %vm3060 = vmand %vm2916, %vm2988
  %vm3061 = vmand %vm2917, %vm2989
  %vm3062 = vmand %vm2918, %vm2990
  %vm3063 = vmand %vm2919, %vm2991
  %vm3064 = vmand %vm2920, %vm2992
  %vm3065 = vmand %vm2921, %vm2993
  %vm3066 = vmand %vm2922, %vm2994
  %vm3067 = vmand %vm2923, %vm2995
  %vm3068 = vmand %vm2924, %vm2996
  %vm3069 = vmand %vm2925, %vm2997
  %vm3070 = vmand %vm2926, %vm2998
  %vm3071 = vmand %vm2927, %vm2999
  %vm3072 = vmand %vm2928, %vm3000
  %vm3073 = vmand %vm2929, %vm3001
  %vm3074 = vmand %vm2930, %vm3002
  %vm3075 = vmand %vm2931, %vm3003
  %vm3076 = vmand %vm2932, %vm3004
  %vm3077 = vmand %vm2933, %vm3005
  %vm3078 = vmand %vm2934, %vm3006
  %vm3079 = vcmp.le.s32.totalorder %v2647, 16
  %vm3080 = vcmp.le.s32.totalorder %v2648, 16
  %vm3081 = vcmp.le.s32.totalorder %v2649, 16
  %vm3082 = vcmp.le.s32.totalorder %v2650, 16
  %vm3083 = vcmp.le.s32.totalorder %v2651, 16
  %vm3084 = vcmp.le.s32.totalorder %v2652, 16
  %vm3085 = vcmp.le.s32.totalorder %v2653, 16
  %vm3086 = vcmp.le.s32.totalorder %v2654, 16
  %vm3087 = vcmp.le.s32.totalorder %v2655, 16
  %vm3088 = vcmp.le.s32.totalorder %v2656, 16
  %vm3089 = vcmp.le.s32.totalorder %v2657, 16
  %vm3090 = vcmp.le.s32.totalorder %v2658, 16
  %vm3091 = vcmp.le.s32.totalorder %v2659, 16
  %vm3092 = vcmp.le.s32.totalorder %v2660, 16
  %vm3093 = vcmp.le.s32.totalorder %v2661, 16
  %vm3094 = vcmp.le.s32.totalorder %v2662, 16
  %vm3095 = vcmp.le.s32.totalorder %v2663, 16
  %vm3096 = vcmp.le.s32.totalorder %v2664, 16
  %vm3097 = vcmp.le.s32.totalorder %v2665, 16
  %vm3098 = vcmp.le.s32.totalorder %v2666, 16
  %vm3099 = vcmp.le.s32.totalorder %v2667, 16
  %vm3100 = vcmp.le.s32.totalorder %v2668, 16
  %vm3101 = vcmp.le.s32.totalorder %v2669, 16
  %vm3102 = vcmp.le.s32.totalorder %v2670, 16
  %vm3103 = vcmp.le.s32.totalorder %v2671, 16
  %vm3104 = vcmp.le.s32.totalorder %v2672, 16
  %vm3105 = vcmp.le.s32.totalorder %v2673, 16
  %vm3106 = vcmp.le.s32.totalorder %v2674, 16
  %vm3107 = vcmp.le.s32.totalorder %v2675, 16
  %vm3108 = vcmp.le.s32.totalorder %v2676, 16
  %vm3109 = vcmp.le.s32.totalorder %v2677, 16
  %vm3110 = vcmp.le.s32.totalorder %v2678, 16
  %vm3111 = vcmp.le.s32.totalorder %v2679, 16
  %vm3112 = vcmp.le.s32.totalorder %v2680, 16
  %vm3113 = vcmp.le.s32.totalorder %v2681, 16
  %vm3114 = vcmp.le.s32.totalorder %v2682, 16
  %vm3115 = vcmp.le.s32.totalorder %v2683, 16
  %vm3116 = vcmp.le.s32.totalorder %v2684, 16
  %vm3117 = vcmp.le.s32.totalorder %v2685, 16
  %vm3118 = vcmp.le.s32.totalorder %v2686, 16
  %vm3119 = vcmp.le.s32.totalorder %v2687, 16
  %vm3120 = vcmp.le.s32.totalorder %v2688, 16
  %vm3121 = vcmp.le.s32.totalorder %v2689, 16
  %vm3122 = vcmp.le.s32.totalorder %v2690, 16
  %vm3123 = vcmp.le.s32.totalorder %v2691, 16
  %vm3124 = vcmp.le.s32.totalorder %v2692, 16
  %vm3125 = vcmp.le.s32.totalorder %v2693, 16
  %vm3126 = vcmp.le.s32.totalorder %v2694, 16
  %vm3127 = vcmp.le.s32.totalorder %v2695, 16
  %vm3128 = vcmp.le.s32.totalorder %v2696, 16
  %vm3129 = vcmp.le.s32.totalorder %v2697, 16
  %vm3130 = vcmp.le.s32.totalorder %v2698, 16
  %vm3131 = vcmp.le.s32.totalorder %v2699, 16
  %vm3132 = vcmp.le.s32.totalorder %v2700, 16
  %vm3133 = vcmp.le.s32.totalorder %v2701, 16
  %vm3134 = vcmp.le.s32.totalorder %v2702, 16
  %vm3135 = vcmp.le.s32.totalorder %v2703, 16
  %vm3136 = vcmp.le.s32.totalorder %v2704, 16
  %vm3137 = vcmp.le.s32.totalorder %v2705, 16
  %vm3138 = vcmp.le.s32.totalorder %v2706, 16
  %vm3139 = vcmp.le.s32.totalorder %v2707, 16
  %vm3140 = vcmp.le.s32.totalorder %v2708, 16
  %vm3141 = vcmp.le.s32.totalorder %v2709, 16
  %vm3142 = vcmp.le.s32.totalorder %v2710, 16
  %vm3143 = vcmp.le.s32.totalorder %v2711, 16
  %vm3144 = vcmp.le.s32.totalorder %v2712, 16
  %vm3145 = vcmp.le.s32.totalorder %v2713, 16
  %vm3146 = vcmp.le.s32.totalorder %v2714, 16
  %vm3147 = vcmp.le.s32.totalorder %v2715, 16
  %vm3148 = vcmp.le.s32.totalorder %v2716, 16
  %vm3149 = vcmp.le.s32.totalorder %v2717, 16
  %vm3150 = vcmp.le.s32.totalorder %v2718, 16
  %vm3151 = vmand %vm3007, %vm3079
  %vm3152 = vmand %vm3008, %vm3080
  %vm3153 = vmand %vm3009, %vm3081
  %vm3154 = vmand %vm3010, %vm3082
  %vm3155 = vmand %vm3011, %vm3083
  %vm3156 = vmand %vm3012, %vm3084
  %vm3157 = vmand %vm3013, %vm3085
  %vm3158 = vmand %vm3014, %vm3086
  %vm3159 = vmand %vm3015, %vm3087
  %vm3160 = vmand %vm3016, %vm3088
  %vm3161 = vmand %vm3017, %vm3089
  %vm3162 = vmand %vm3018, %vm3090
  %vm3163 = vmand %vm3019, %vm3091
  %vm3164 = vmand %vm3020, %vm3092
  %vm3165 = vmand %vm3021, %vm3093
  %vm3166 = vmand %vm3022, %vm3094
  %vm3167 = vmand %vm3023, %vm3095
  %vm3168 = vmand %vm3024, %vm3096
  %vm3169 = vmand %vm3025, %vm3097
  %vm3170 = vmand %vm3026, %vm3098
  %vm3171 = vmand %vm3027, %vm3099
  %vm3172 = vmand %vm3028, %vm3100
  %vm3173 = vmand %vm3029, %vm3101
  %vm3174 = vmand %vm3030, %vm3102
  %vm3175 = vmand %vm3031, %vm3103
  %vm3176 = vmand %vm3032, %vm3104
  %vm3177 = vmand %vm3033, %vm3105
  %vm3178 = vmand %vm3034, %vm3106
  %vm3179 = vmand %vm3035, %vm3107
  %vm3180 = vmand %vm3036, %vm3108
  %vm3181 = vmand %vm3037, %vm3109
  %vm3182 = vmand %vm3038, %vm3110
  %vm3183 = vmand %vm3039, %vm3111
  %vm3184 = vmand %vm3040, %vm3112
  %vm3185 = vmand %vm3041, %vm3113
  %vm3186 = vmand %vm3042, %vm3114
  %vm3187 = vmand %vm3043, %vm3115
  %vm3188 = vmand %vm3044, %vm3116
  %vm3189 = vmand %vm3045, %vm3117
  %vm3190 = vmand %vm3046, %vm3118
  %vm3191 = vmand %vm3047, %vm3119
  %vm3192 = vmand %vm3048, %vm3120
  %vm3193 = vmand %vm3049, %vm3121
  %vm3194 = vmand %vm3050, %vm3122
  %vm3195 = vmand %vm3051, %vm3123
  %vm3196 = vmand %vm3052, %vm3124
  %vm3197 = vmand %vm3053, %vm3125
  %vm3198 = vmand %vm3054, %vm3126
  %vm3199 = vmand %vm3055, %vm3127
  %vm3200 = vmand %vm3056, %vm3128
  %vm3201 = vmand %vm3057, %vm3129
  %vm3202 = vmand %vm3058, %vm3130
  %vm3203 = vmand %vm3059, %vm3131
  %vm3204 = vmand %vm3060, %vm3132
  %vm3205 = vmand %vm3061, %vm3133
  %vm3206 = vmand %vm3062, %vm3134
  %vm3207 = vmand %vm3063, %vm3135
  %vm3208 = vmand %vm3064, %vm3136
  %vm3209 = vmand %vm3065, %vm3137
  %vm3210 = vmand %vm3066, %vm3138
  %vm3211 = vmand %vm3067, %vm3139
  %vm3212 = vmand %vm3068, %vm3140
  %vm3213 = vmand %vm3069, %vm3141
  %vm3214 = vmand %vm3070, %vm3142
  %vm3215 = vmand %vm3071, %vm3143
  %vm3216 = vmand %vm3072, %vm3144
  %vm3217 = vmand %vm3073, %vm3145
  %vm3218 = vmand %vm3074, %vm3146
  %vm3219 = vmand %vm3075, %vm3147
  %vm3220 = vmand %vm3076, %vm3148
  %vm3221 = vmand %vm3077, %vm3149
  %vm3222 = vmand %vm3078, %vm3150
  %v3223 = vld [vmem:[%s5] sm:$0xff]
  %v3224 = vld [vmem:[%s5 + $0x8] sm:$0xff]
  %v3225 = vld [vmem:[%s5 + $0x10] sm:$0xff]
  %v3226 = vld [vmem:[%s5 + $0x18] sm:$0xff]
  %v3227 = vld [vmem:[%s5 + $0x20] sm:$0xff]
  %v3228 = vld [vmem:[%s5 + $0x28] sm:$0xff]
  %v3229 = vld [vmem:[%s5 + $0x30] sm:$0xff]
  %v3230 = vld [vmem:[%s5 + $0x38] sm:$0xff]
  %v3231 = vld [vmem:[%s5 + $0x40] sm:$0xff]
  %3232 = vxpose.xlu0.b32.start [1/16] %v3223, 128
  %3233 = vxpose.xlu0.b32.cont [2/16] 0.0, 128
  %3234 = vxpose.xlu0.b32.cont [3/16] 0.0, 128
  %3235 = vxpose.xlu0.b32.cont [4/16] 0.0, 128
  %3236 = vxpose.xlu0.b32.cont [5/16] 0.0, 128
  %3237 = vxpose.xlu0.b32.cont [6/16] 0.0, 128
  %3238 = vxpose.xlu0.b32.cont [7/16] 0.0, 128
  %3239 = vxpose.xlu0.b32.cont [8/16] 0.0, 128
  %3240 = vxpose.xlu0.b32.cont [9/16] 0.0, 128
  %3241 = vxpose.xlu0.b32.cont [10/16] 0.0, 128
  %3242 = vxpose.xlu0.b32.cont [11/16] 0.0, 128
  %3243 = vxpose.xlu0.b32.cont [12/16] 0.0, 128
  %3244 = vxpose.xlu0.b32.cont [13/16] 0.0, 128
  %3245 = vxpose.xlu0.b32.cont [14/16] 0.0, 128
  %3246 = vxpose.xlu0.b32.cont [15/16] 0.0, 128
  %3247 = vxpose.xlu0.b32.end [16/16] 0.0, 128
  %v3248 = vpop.trf.xlu0
  %v3249 = vpop.trf.xlu0
  %v3250 = vpop.trf.xlu0
  %v3251 = vpop.trf.xlu0
  %v3252 = vpop.trf.xlu0
  %v3253 = vpop.trf.xlu0
  %v3254 = vpop.trf.xlu0
  %v3255 = vpop.trf.xlu0
  %v3256 = vpop.trf.xlu0
  %v3257 = vpop.trf.xlu0
  %v3258 = vpop.trf.xlu0
  %v3259 = vpop.trf.xlu0
  %v3260 = vpop.trf.xlu0
  %v3261 = vpop.trf.xlu0
  %v3262 = vpop.trf.xlu0
  %v3263 = vpop.trf.xlu0
  %3264 = vxpose.xlu0.b32.start [1/16] %v3224, 128
  %3265 = vxpose.xlu0.b32.cont [2/16] 0.0, 128
  %3266 = vxpose.xlu0.b32.cont [3/16] 0.0, 128
  %3267 = vxpose.xlu0.b32.cont [4/16] 0.0, 128
  %3268 = vxpose.xlu0.b32.cont [5/16] 0.0, 128
  %3269 = vxpose.xlu0.b32.cont [6/16] 0.0, 128
  %3270 = vxpose.xlu0.b32.cont [7/16] 0.0, 128
  %3271 = vxpose.xlu0.b32.cont [8/16] 0.0, 128
  %3272 = vxpose.xlu0.b32.cont [9/16] 0.0, 128
  %3273 = vxpose.xlu0.b32.cont [10/16] 0.0, 128
  %3274 = vxpose.xlu0.b32.cont [11/16] 0.0, 128
  %3275 = vxpose.xlu0.b32.cont [12/16] 0.0, 128
  %3276 = vxpose.xlu0.b32.cont [13/16] 0.0, 128
  %3277 = vxpose.xlu0.b32.cont [14/16] 0.0, 128
  %3278 = vxpose.xlu0.b32.cont [15/16] 0.0, 128
  %3279 = vxpose.xlu0.b32.end [16/16] 0.0, 128
  %v3280 = vpop.trf.xlu0
  %v3281 = vpop.trf.xlu0
  %v3282 = vpop.trf.xlu0
  %v3283 = vpop.trf.xlu0
  %v3284 = vpop.trf.xlu0
  %v3285 = vpop.trf.xlu0
  %v3286 = vpop.trf.xlu0
  %v3287 = vpop.trf.xlu0
  %v3288 = vpop.trf.xlu0
  %v3289 = vpop.trf.xlu0
  %v3290 = vpop.trf.xlu0
  %v3291 = vpop.trf.xlu0
  %v3292 = vpop.trf.xlu0
  %v3293 = vpop.trf.xlu0
  %v3294 = vpop.trf.xlu0
  %v3295 = vpop.trf.xlu0
  %3296 = vxpose.xlu0.b32.start [1/16] %v3225, 128
  %3297 = vxpose.xlu0.b32.cont [2/16] 0.0, 128
  %3298 = vxpose.xlu0.b32.cont [3/16] 0.0, 128
  %3299 = vxpose.xlu0.b32.cont [4/16] 0.0, 128
  %3300 = vxpose.xlu0.b32.cont [5/16] 0.0, 128
  %3301 = vxpose.xlu0.b32.cont [6/16] 0.0, 128
  %3302 = vxpose.xlu0.b32.cont [7/16] 0.0, 128
  %3303 = vxpose.xlu0.b32.cont [8/16] 0.0, 128
  %3304 = vxpose.xlu0.b32.cont [9/16] 0.0, 128
  %3305 = vxpose.xlu0.b32.cont [10/16] 0.0, 128
  %3306 = vxpose.xlu0.b32.cont [11/16] 0.0, 128
  %3307 = vxpose.xlu0.b32.cont [12/16] 0.0, 128
  %3308 = vxpose.xlu0.b32.cont [13/16] 0.0, 128
  %3309 = vxpose.xlu0.b32.cont [14/16] 0.0, 128
  %3310 = vxpose.xlu0.b32.cont [15/16] 0.0, 128
  %3311 = vxpose.xlu0.b32.end [16/16] 0.0, 128
  %v3312 = vpop.trf.xlu0
  %v3313 = vpop.trf.xlu0
  %v3314 = vpop.trf.xlu0
  %v3315 = vpop.trf.xlu0
  %v3316 = vpop.trf.xlu0
  %v3317 = vpop.trf.xlu0
  %v3318 = vpop.trf.xlu0
  %v3319 = vpop.trf.xlu0
  %v3320 = vpop.trf.xlu0
  %v3321 = vpop.trf.xlu0
  %v3322 = vpop.trf.xlu0
  %v3323 = vpop.trf.xlu0
  %v3324 = vpop.trf.xlu0
  %v3325 = vpop.trf.xlu0
  %v3326 = vpop.trf.xlu0
  %v3327 = vpop.trf.xlu0
  %3328 = vxpose.xlu0.b32.start [1/16] %v3226, 128
  %3329 = vxpose.xlu0.b32.cont [2/16] 0.0, 128
  %3330 = vxpose.xlu0.b32.cont [3/16] 0.0, 128
  %3331 = vxpose.xlu0.b32.cont [4/16] 0.0, 128
  %3332 = vxpose.xlu0.b32.cont [5/16] 0.0, 128
  %3333 = vxpose.xlu0.b32.cont [6/16] 0.0, 128
  %3334 = vxpose.xlu0.b32.cont [7/16] 0.0, 128
  %3335 = vxpose.xlu0.b32.cont [8/16] 0.0, 128
  %3336 = vxpose.xlu0.b32.cont [9/16] 0.0, 128
  %3337 = vxpose.xlu0.b32.cont [10/16] 0.0, 128
  %3338 = vxpose.xlu0.b32.cont [11/16] 0.0, 128
  %3339 = vxpose.xlu0.b32.cont [12/16] 0.0, 128
  %3340 = vxpose.xlu0.b32.cont [13/16] 0.0, 128
  %3341 = vxpose.xlu0.b32.cont [14/16] 0.0, 128
  %3342 = vxpose.xlu0.b32.cont [15/16] 0.0, 128
  %3343 = vxpose.xlu0.b32.end [16/16] 0.0, 128
  %v3344 = vpop.trf.xlu0
  %v3345 = vpop.trf.xlu0
  %v3346 = vpop.trf.xlu0
  %v3347 = vpop.trf.xlu0
  %v3348 = vpop.trf.xlu0
  %v3349 = vpop.trf.xlu0
  %v3350 = vpop.trf.xlu0
  %v3351 = vpop.trf.xlu0
  %v3352 = vpop.trf.xlu0
  %v3353 = vpop.trf.xlu0
  %v3354 = vpop.trf.xlu0
  %v3355 = vpop.trf.xlu0
  %v3356 = vpop.trf.xlu0
  %v3357 = vpop.trf.xlu0
  %v3358 = vpop.trf.xlu0
  %v3359 = vpop.trf.xlu0
  %3360 = vxpose.xlu0.b32.start [1/16] %v3227, 128
  %3361 = vxpose.xlu0.b32.cont [2/16] 0.0, 128
  %3362 = vxpose.xlu0.b32.cont [3/16] 0.0, 128
  %3363 = vxpose.xlu0.b32.cont [4/16] 0.0, 128
  %3364 = vxpose.xlu0.b32.cont [5/16] 0.0, 128
  %3365 = vxpose.xlu0.b32.cont [6/16] 0.0, 128
  %3366 = vxpose.xlu0.b32.cont [7/16] 0.0, 128
  %3367 = vxpose.xlu0.b32.cont [8/16] 0.0, 128
  %3368 = vxpose.xlu0.b32.cont [9/16] 0.0, 128
  %3369 = vxpose.xlu0.b32.cont [10/16] 0.0, 128
  %3370 = vxpose.xlu0.b32.cont [11/16] 0.0, 128
  %3371 = vxpose.xlu0.b32.cont [12/16] 0.0, 128
  %3372 = vxpose.xlu0.b32.cont [13/16] 0.0, 128
  %3373 = vxpose.xlu0.b32.cont [14/16] 0.0, 128
  %3374 = vxpose.xlu0.b32.cont [15/16] 0.0, 128
  %3375 = vxpose.xlu0.b32.end [16/16] 0.0, 128
  %v3376 = vpop.trf.xlu0
  %v3377 = vpop.trf.xlu0
  %v3378 = vpop.trf.xlu0
  %v3379 = vpop.trf.xlu0
  %v3380 = vpop.trf.xlu0
  %v3381 = vpop.trf.xlu0
  %v3382 = vpop.trf.xlu0
  %v3383 = vpop.trf.xlu0
  %v3384 = vpop.trf.xlu0
  %v3385 = vpop.trf.xlu0
  %v3386 = vpop.trf.xlu0
  %v3387 = vpop.trf.xlu0
  %v3388 = vpop.trf.xlu0
  %v3389 = vpop.trf.xlu0
  %v3390 = vpop.trf.xlu0
  %v3391 = vpop.trf.xlu0
  %3392 = vxpose.xlu0.b32.start [1/16] %v3228, 128
  %3393 = vxpose.xlu0.b32.cont [2/16] 0.0, 128
  %3394 = vxpose.xlu0.b32.cont [3/16] 0.0, 128
  %3395 = vxpose.xlu0.b32.cont [4/16] 0.0, 128
  %3396 = vxpose.xlu0.b32.cont [5/16] 0.0, 128
  %3397 = vxpose.xlu0.b32.cont [6/16] 0.0, 128
  %3398 = vxpose.xlu0.b32.cont [7/16] 0.0, 128
  %3399 = vxpose.xlu0.b32.cont [8/16] 0.0, 128
  %3400 = vxpose.xlu0.b32.cont [9/16] 0.0, 128
  %3401 = vxpose.xlu0.b32.cont [10/16] 0.0, 128
  %3402 = vxpose.xlu0.b32.cont [11/16] 0.0, 128
  %3403 = vxpose.xlu0.b32.cont [12/16] 0.0, 128
  %3404 = vxpose.xlu0.b32.cont [13/16] 0.0, 128
  %3405 = vxpose.xlu0.b32.cont [14/16] 0.0, 128
  %3406 = vxpose.xlu0.b32.cont [15/16] 0.0, 128
  %3407 = vxpose.xlu0.b32.end [16/16] 0.0, 128
  %v3408 = vpop.trf.xlu0
  %v3409 = vpop.trf.xlu0
  %v3410 = vpop.trf.xlu0
  %v3411 = vpop.trf.xlu0
  %v3412 = vpop.trf.xlu0
  %v3413 = vpop.trf.xlu0
  %v3414 = vpop.trf.xlu0
  %v3415 = vpop.trf.xlu0
  %v3416 = vpop.trf.xlu0
  %v3417 = vpop.trf.xlu0
  %v3418 = vpop.trf.xlu0
  %v3419 = vpop.trf.xlu0
  %v3420 = vpop.trf.xlu0
  %v3421 = vpop.trf.xlu0
  %v3422 = vpop.trf.xlu0
  %v3423 = vpop.trf.xlu0
  %3424 = vxpose.xlu0.b32.start [1/16] %v3229, 128
  %3425 = vxpose.xlu0.b32.cont [2/16] 0.0, 128
  %3426 = vxpose.xlu0.b32.cont [3/16] 0.0, 128
  %3427 = vxpose.xlu0.b32.cont [4/16] 0.0, 128
  %3428 = vxpose.xlu0.b32.cont [5/16] 0.0, 128
  %3429 = vxpose.xlu0.b32.cont [6/16] 0.0, 128
  %3430 = vxpose.xlu0.b32.cont [7/16] 0.0, 128
  %3431 = vxpose.xlu0.b32.cont [8/16] 0.0, 128
  %3432 = vxpose.xlu0.b32.cont [9/16] 0.0, 128
  %3433 = vxpose.xlu0.b32.cont [10/16] 0.0, 128
  %3434 = vxpose.xlu0.b32.cont [11/16] 0.0, 128
  %3435 = vxpose.xlu0.b32.cont [12/16] 0.0, 128
  %3436 = vxpose.xlu0.b32.cont [13/16] 0.0, 128
  %3437 = vxpose.xlu0.b32.cont [14/16] 0.0, 128
  %3438 = vxpose.xlu0.b32.cont [15/16] 0.0, 128
  %3439 = vxpose.xlu0.b32.end [16/16] 0.0, 128
  %v3440 = vpop.trf.xlu0
  %v3441 = vpop.trf.xlu0
  %v3442 = vpop.trf.xlu0
  %v3443 = vpop.trf.xlu0
  %v3444 = vpop.trf.xlu0
  %v3445 = vpop.trf.xlu0
  %v3446 = vpop.trf.xlu0
  %v3447 = vpop.trf.xlu0
  %v3448 = vpop.trf.xlu0
  %v3449 = vpop.trf.xlu0
  %v3450 = vpop.trf.xlu0
  %v3451 = vpop.trf.xlu0
  %v3452 = vpop.trf.xlu0
  %v3453 = vpop.trf.xlu0
  %v3454 = vpop.trf.xlu0
  %v3455 = vpop.trf.xlu0
  %3456 = vxpose.xlu0.b32.start [1/16] %v3230, 128
  %3457 = vxpose.xlu0.b32.cont [2/16] 0.0, 128
  %3458 = vxpose.xlu0.b32.cont [3/16] 0.0, 128
  %3459 = vxpose.xlu0.b32.cont [4/16] 0.0, 128
  %3460 = vxpose.xlu0.b32.cont [5/16] 0.0, 128
  %3461 = vxpose.xlu0.b32.cont [6/16] 0.0, 128
  %3462 = vxpose.xlu0.b32.cont [7/16] 0.0, 128
  %3463 = vxpose.xlu0.b32.cont [8/16] 0.0, 128
  %3464 = vxpose.xlu0.b32.cont [9/16] 0.0, 128
  %3465 = vxpose.xlu0.b32.cont [10/16] 0.0, 128
  %3466 = vxpose.xlu0.b32.cont [11/16] 0.0, 128
  %3467 = vxpose.xlu0.b32.cont [12/16] 0.0, 128
  %3468 = vxpose.xlu0.b32.cont [13/16] 0.0, 128
  %3469 = vxpose.xlu0.b32.cont [14/16] 0.0, 128
  %3470 = vxpose.xlu0.b32.cont [15/16] 0.0, 128
  %3471 = vxpose.xlu0.b32.end [16/16] 0.0, 128
  %v3472 = vpop.trf.xlu0
  %v3473 = vpop.trf.xlu0
  %v3474 = vpop.trf.xlu0
  %v3475 = vpop.trf.xlu0
  %v3476 = vpop.trf.xlu0
  %v3477 = vpop.trf.xlu0
  %v3478 = vpop.trf.xlu0
  %v3479 = vpop.trf.xlu0
  %v3480 = vpop.trf.xlu0
  %v3481 = vpop.trf.xlu0
  %v3482 = vpop.trf.xlu0
  %v3483 = vpop.trf.xlu0
  %v3484 = vpop.trf.xlu0
  %v3485 = vpop.trf.xlu0
  %v3486 = vpop.trf.xlu0
  %v3487 = vpop.trf.xlu0
  %3488 = vxpose.xlu0.b32.start [1/16] %v3231, 128
  %3489 = vxpose.xlu0.b32.cont [2/16] 0.0, 128
  %3490 = vxpose.xlu0.b32.cont [3/16] 0.0, 128
  %3491 = vxpose.xlu0.b32.cont [4/16] 0.0, 128
  %3492 = vxpose.xlu0.b32.cont [5/16] 0.0, 128
  %3493 = vxpose.xlu0.b32.cont [6/16] 0.0, 128
  %3494 = vxpose.xlu0.b32.cont [7/16] 0.0, 128
  %3495 = vxpose.xlu0.b32.cont [8/16] 0.0, 128
  %3496 = vxpose.xlu0.b32.cont [9/16] 0.0, 128
  %3497 = vxpose.xlu0.b32.cont [10/16] 0.0, 128
  %3498 = vxpose.xlu0.b32.cont [11/16] 0.0, 128
  %3499 = vxpose.xlu0.b32.cont [12/16] 0.0, 128
  %3500 = vxpose.xlu0.b32.cont [13/16] 0.0, 128
  %3501 = vxpose.xlu0.b32.cont [14/16] 0.0, 128
  %3502 = vxpose.xlu0.b32.cont [15/16] 0.0, 128
  %3503 = vxpose.xlu0.b32.end [16/16] 0.0, 128
  %v3504 = vpop.trf.xlu0
  %v3505 = vpop.trf.xlu0
  %v3506 = vpop.trf.xlu0
  %v3507 = vpop.trf.xlu0
  %v3508 = vpop.trf.xlu0
  %v3509 = vpop.trf.xlu0
  %v3510 = vpop.trf.xlu0
  %v3511 = vpop.trf.xlu0
  %v3512 = vpop.trf.xlu0
  %v3513 = vpop.trf.xlu0
  %v3514 = vpop.trf.xlu0
  %v3515 = vpop.trf.xlu0
  %v3516 = vpop.trf.xlu0
  %v3517 = vpop.trf.xlu0
  %v3518 = vpop.trf.xlu0
  %v3519 = vpop.trf.xlu0
  %v3520 = vpack.c.bf16 %v3249, %v3248
  %v3521 = vpack.c.bf16 %v3251, %v3250
  %v3522 = vpack.c.bf16 %v3253, %v3252
  %v3523 = vpack.c.bf16 %v3255, %v3254
  %v3524 = vpack.c.bf16 %v3257, %v3256
  %v3525 = vpack.c.bf16 %v3259, %v3258
  %v3526 = vpack.c.bf16 %v3261, %v3260
  %v3527 = vpack.c.bf16 %v3263, %v3262
  %v3528 = vpack.c.bf16 %v3281, %v3280
  %v3529 = vpack.c.bf16 %v3283, %v3282
  %v3530 = vpack.c.bf16 %v3285, %v3284
  %v3531 = vpack.c.bf16 %v3287, %v3286
  %v3532 = vpack.c.bf16 %v3289, %v3288
  %v3533 = vpack.c.bf16 %v3291, %v3290
  %v3534 = vpack.c.bf16 %v3293, %v3292
  %v3535 = vpack.c.bf16 %v3295, %v3294
  %v3536 = vpack.c.bf16 %v3313, %v3312
  %v3537 = vpack.c.bf16 %v3315, %v3314
  %v3538 = vpack.c.bf16 %v3317, %v3316
  %v3539 = vpack.c.bf16 %v3319, %v3318
  %v3540 = vpack.c.bf16 %v3321, %v3320
  %v3541 = vpack.c.bf16 %v3323, %v3322
  %v3542 = vpack.c.bf16 %v3325, %v3324
  %v3543 = vpack.c.bf16 %v3327, %v3326
  %v3544 = vpack.c.bf16 %v3345, %v3344
  %v3545 = vpack.c.bf16 %v3347, %v3346
  %v3546 = vpack.c.bf16 %v3349, %v3348
  %v3547 = vpack.c.bf16 %v3351, %v3350
  %v3548 = vpack.c.bf16 %v3353, %v3352
  %v3549 = vpack.c.bf16 %v3355, %v3354
  %v3550 = vpack.c.bf16 %v3357, %v3356
  %v3551 = vpack.c.bf16 %v3359, %v3358
  %v3552 = vpack.c.bf16 %v3377, %v3376
  %v3553 = vpack.c.bf16 %v3379, %v3378
  %v3554 = vpack.c.bf16 %v3381, %v3380
  %v3555 = vpack.c.bf16 %v3383, %v3382
  %v3556 = vpack.c.bf16 %v3385, %v3384
  %v3557 = vpack.c.bf16 %v3387, %v3386
  %v3558 = vpack.c.bf16 %v3389, %v3388
  %v3559 = vpack.c.bf16 %v3391, %v3390
  %v3560 = vpack.c.bf16 %v3409, %v3408
  %v3561 = vpack.c.bf16 %v3411, %v3410
  %v3562 = vpack.c.bf16 %v3413, %v3412
  %v3563 = vpack.c.bf16 %v3415, %v3414
  %v3564 = vpack.c.bf16 %v3417, %v3416
  %v3565 = vpack.c.bf16 %v3419, %v3418
  %v3566 = vpack.c.bf16 %v3421, %v3420
  %v3567 = vpack.c.bf16 %v3423, %v3422
  %v3568 = vpack.c.bf16 %v3441, %v3440
  %v3569 = vpack.c.bf16 %v3443, %v3442
  %v3570 = vpack.c.bf16 %v3445, %v3444
  %v3571 = vpack.c.bf16 %v3447, %v3446
  %v3572 = vpack.c.bf16 %v3449, %v3448
  %v3573 = vpack.c.bf16 %v3451, %v3450
  %v3574 = vpack.c.bf16 %v3453, %v3452
  %v3575 = vpack.c.bf16 %v3455, %v3454
  %v3576 = vpack.c.bf16 %v3473, %v3472
  %v3577 = vpack.c.bf16 %v3475, %v3474
  %v3578 = vpack.c.bf16 %v3477, %v3476
  %v3579 = vpack.c.bf16 %v3479, %v3478
  %v3580 = vpack.c.bf16 %v3481, %v3480
  %v3581 = vpack.c.bf16 %v3483, %v3482
  %v3582 = vpack.c.bf16 %v3485, %v3484
  %v3583 = vpack.c.bf16 %v3487, %v3486
  %v3584 = vpack.c.bf16 %v3505, %v3504
  %v3585 = vpack.c.bf16 %v3507, %v3506
  %v3586 = vpack.c.bf16 %v3509, %v3508
  %v3587 = vpack.c.bf16 %v3511, %v3510
  %v3588 = vpack.c.bf16 %v3513, %v3512
  %v3589 = vpack.c.bf16 %v3515, %v3514
  %v3590 = vpack.c.bf16 %v3517, %v3516
  %v3591 = vpack.c.bf16 %v3519, %v3518
  %vm3592 = vmpackc.low %vm3151, %vm3151
  %vm3593 = vmpackc.low %vm3152, %vm3152
  %vm3594 = vmpackc.low %vm3153, %vm3153
  %vm3595 = vmpackc.low %vm3154, %vm3154
  %vm3596 = vmpackc.low %vm3155, %vm3155
  %vm3597 = vmpackc.low %vm3156, %vm3156
  %vm3598 = vmpackc.low %vm3157, %vm3157
  %vm3599 = vmpackc.low %vm3158, %vm3158
  %vm3600 = vmpackc.low %vm3159, %vm3159
  %vm3601 = vmpackc.low %vm3160, %vm3160
  %vm3602 = vmpackc.low %vm3161, %vm3161
  %vm3603 = vmpackc.low %vm3162, %vm3162
  %vm3604 = vmpackc.low %vm3163, %vm3163
  %vm3605 = vmpackc.low %vm3164, %vm3164
  %vm3606 = vmpackc.low %vm3165, %vm3165
  %vm3607 = vmpackc.low %vm3166, %vm3166
  %vm3608 = vmpackc.low %vm3167, %vm3167
  %vm3609 = vmpackc.low %vm3168, %vm3168
  %vm3610 = vmpackc.low %vm3169, %vm3169
  %vm3611 = vmpackc.low %vm3170, %vm3170
  %vm3612 = vmpackc.low %vm3171, %vm3171
  %vm3613 = vmpackc.low %vm3172, %vm3172
  %vm3614 = vmpackc.low %vm3173, %vm3173
  %vm3615 = vmpackc.low %vm3174, %vm3174
  %vm3616 = vmpackc.low %vm3175, %vm3175
  %vm3617 = vmpackc.low %vm3176, %vm3176
  %vm3618 = vmpackc.low %vm3177, %vm3177
  %vm3619 = vmpackc.low %vm3178, %vm3178
  %vm3620 = vmpackc.low %vm3179, %vm3179
  %vm3621 = vmpackc.low %vm3180, %vm3180
  %vm3622 = vmpackc.low %vm3181, %vm3181
  %vm3623 = vmpackc.low %vm3182, %vm3182
  %vm3624 = vmpackc.low %vm3183, %vm3183
  %vm3625 = vmpackc.low %vm3184, %vm3184
  %vm3626 = vmpackc.low %vm3185, %vm3185
  %vm3627 = vmpackc.low %vm3186, %vm3186
  %vm3628 = vmpackc.low %vm3187, %vm3187
  %vm3629 = vmpackc.low %vm3188, %vm3188
  %vm3630 = vmpackc.low %vm3189, %vm3189
  %vm3631 = vmpackc.low %vm3190, %vm3190
  %vm3632 = vmpackc.low %vm3191, %vm3191
  %vm3633 = vmpackc.low %vm3192, %vm3192
  %vm3634 = vmpackc.low %vm3193, %vm3193
  %vm3635 = vmpackc.low %vm3194, %vm3194
  %vm3636 = vmpackc.low %vm3195, %vm3195
  %vm3637 = vmpackc.low %vm3196, %vm3196
  %vm3638 = vmpackc.low %vm3197, %vm3197
  %vm3639 = vmpackc.low %vm3198, %vm3198
  %vm3640 = vmpackc.low %vm3199, %vm3199
  %vm3641 = vmpackc.low %vm3200, %vm3200
  %vm3642 = vmpackc.low %vm3201, %vm3201
  %vm3643 = vmpackc.low %vm3202, %vm3202
  %vm3644 = vmpackc.low %vm3203, %vm3203
  %vm3645 = vmpackc.low %vm3204, %vm3204
  %vm3646 = vmpackc.low %vm3205, %vm3205
  %vm3647 = vmpackc.low %vm3206, %vm3206
  %vm3648 = vmpackc.low %vm3207, %vm3207
  %vm3649 = vmpackc.low %vm3208, %vm3208
  %vm3650 = vmpackc.low %vm3209, %vm3209
  %vm3651 = vmpackc.low %vm3210, %vm3210
  %vm3652 = vmpackc.low %vm3211, %vm3211
  %vm3653 = vmpackc.low %vm3212, %vm3212
  %vm3654 = vmpackc.low %vm3213, %vm3213
  %vm3655 = vmpackc.low %vm3214, %vm3214
  %vm3656 = vmpackc.low %vm3215, %vm3215
  %vm3657 = vmpackc.low %vm3216, %vm3216
  %vm3658 = vmpackc.low %vm3217, %vm3217
  %vm3659 = vmpackc.low %vm3218, %vm3218
  %vm3660 = vmpackc.low %vm3219, %vm3219
  %vm3661 = vmpackc.low %vm3220, %vm3220
  %vm3662 = vmpackc.low %vm3221, %vm3221
  %vm3663 = vmpackc.low %vm3222, %vm3222
  %v3664 = vsel %vm3592, 65537, 0
  %v3665 = vsel %vm3593, 65537, 0
  %v3666 = vsel %vm3594, 65537, 0
  %v3667 = vsel %vm3595, 65537, 0
  %v3668 = vsel %vm3596, 65537, 0
  %v3669 = vsel %vm3597, 65537, 0
  %v3670 = vsel %vm3598, 65537, 0
  %v3671 = vsel %vm3599, 65537, 0
  %v3672 = vsel %vm3600, 65537, 0
  %v3673 = vsel %vm3601, 65537, 0
  %v3674 = vsel %vm3602, 65537, 0
  %v3675 = vsel %vm3603, 65537, 0
  %v3676 = vsel %vm3604, 65537, 0
  %v3677 = vsel %vm3605, 65537, 0
  %v3678 = vsel %vm3606, 65537, 0
  %v3679 = vsel %vm3607, 65537, 0
  %v3680 = vsel %vm3608, 65537, 0
  %v3681 = vsel %vm3609, 65537, 0
  %v3682 = vsel %vm3610, 65537, 0
  %v3683 = vsel %vm3611, 65537, 0
  %v3684 = vsel %vm3612, 65537, 0
  %v3685 = vsel %vm3613, 65537, 0
  %v3686 = vsel %vm3614, 65537, 0
  %v3687 = vsel %vm3615, 65537, 0
  %v3688 = vsel %vm3616, 65537, 0
  %v3689 = vsel %vm3617, 65537, 0
  %v3690 = vsel %vm3618, 65537, 0
  %v3691 = vsel %vm3619, 65537, 0
  %v3692 = vsel %vm3620, 65537, 0
  %v3693 = vsel %vm3621, 65537, 0
  %v3694 = vsel %vm3622, 65537, 0
  %v3695 = vsel %vm3623, 65537, 0
  %v3696 = vsel %vm3624, 65537, 0
  %v3697 = vsel %vm3625, 65537, 0
  %v3698 = vsel %vm3626, 65537, 0
  %v3699 = vsel %vm3627, 65537, 0
  %v3700 = vsel %vm3628, 65537, 0
  %v3701 = vsel %vm3629, 65537, 0
  %v3702 = vsel %vm3630, 65537, 0
  %v3703 = vsel %vm3631, 65537, 0
  %v3704 = vsel %vm3632, 65537, 0
  %v3705 = vsel %vm3633, 65537, 0
  %v3706 = vsel %vm3634, 65537, 0
  %v3707 = vsel %vm3635, 65537, 0
  %v3708 = vsel %vm3636, 65537, 0
  %v3709 = vsel %vm3637, 65537, 0
  %v3710 = vsel %vm3638, 65537, 0
  %v3711 = vsel %vm3639, 65537, 0
  %v3712 = vsel %vm3640, 65537, 0
  %v3713 = vsel %vm3641, 65537, 0
  %v3714 = vsel %vm3642, 65537, 0
  %v3715 = vsel %vm3643, 65537, 0
  %v3716 = vsel %vm3644, 65537, 0
  %v3717 = vsel %vm3645, 65537, 0
  %v3718 = vsel %vm3646, 65537, 0
  %v3719 = vsel %vm3647, 65537, 0
  %v3720 = vsel %vm3648, 65537, 0
  %v3721 = vsel %vm3649, 65537, 0
  %v3722 = vsel %vm3650, 65537, 0
  %v3723 = vsel %vm3651, 65537, 0
  %v3724 = vsel %vm3652, 65537, 0
  %v3725 = vsel %vm3653, 65537, 0
  %v3726 = vsel %vm3654, 65537, 0
  %v3727 = vsel %vm3655, 65537, 0
  %v3728 = vsel %vm3656, 65537, 0
  %v3729 = vsel %vm3657, 65537, 0
  %v3730 = vsel %vm3658, 65537, 0
  %v3731 = vsel %vm3659, 65537, 0
  %v3732 = vsel %vm3660, 65537, 0
  %v3733 = vsel %vm3661, 65537, 0
  %v3734 = vsel %vm3662, 65537, 0
  %v3735 = vsel %vm3663, 65537, 0
  %v3736 = vunpack.c.l.b16 %v3664
  %v3737 = vunpack.c.l.b16 %v3665
  %v3738 = vunpack.c.l.b16 %v3666
  %v3739 = vunpack.c.l.b16 %v3667
  %v3740 = vunpack.c.l.b16 %v3668
  %v3741 = vunpack.c.l.b16 %v3669
  %v3742 = vunpack.c.l.b16 %v3670
  %v3743 = vunpack.c.l.b16 %v3671
  %v3744 = vunpack.c.l.b16 %v3672
  %v3745 = vunpack.c.l.b16 %v3673
  %v3746 = vunpack.c.l.b16 %v3674
  %v3747 = vunpack.c.l.b16 %v3675
  %v3748 = vunpack.c.l.b16 %v3676
  %v3749 = vunpack.c.l.b16 %v3677
  %v3750 = vunpack.c.l.b16 %v3678
  %v3751 = vunpack.c.l.b16 %v3679
  %v3752 = vunpack.c.l.b16 %v3680
  %v3753 = vunpack.c.l.b16 %v3681
  %v3754 = vunpack.c.l.b16 %v3682
  %v3755 = vunpack.c.l.b16 %v3683
  %v3756 = vunpack.c.l.b16 %v3684
  %v3757 = vunpack.c.l.b16 %v3685
  %v3758 = vunpack.c.l.b16 %v3686
  %v3759 = vunpack.c.l.b16 %v3687
  %v3760 = vunpack.c.l.b16 %v3688
  %v3761 = vunpack.c.l.b16 %v3689
  %v3762 = vunpack.c.l.b16 %v3690
  %v3763 = vunpack.c.l.b16 %v3691
  %v3764 = vunpack.c.l.b16 %v3692
  %v3765 = vunpack.c.l.b16 %v3693
  %v3766 = vunpack.c.l.b16 %v3694
  %v3767 = vunpack.c.l.b16 %v3695
  %v3768 = vunpack.c.l.b16 %v3696
  %v3769 = vunpack.c.l.b16 %v3697
  %v3770 = vunpack.c.l.b16 %v3698
  %v3771 = vunpack.c.l.b16 %v3699
  %v3772 = vunpack.c.l.b16 %v3700
  %v3773 = vunpack.c.l.b16 %v3701
  %v3774 = vunpack.c.l.b16 %v3702
  %v3775 = vunpack.c.l.b16 %v3703
  %v3776 = vunpack.c.l.b16 %v3704
  %v3777 = vunpack.c.l.b16 %v3705
  %v3778 = vunpack.c.l.b16 %v3706
  %v3779 = vunpack.c.l.b16 %v3707
  %v3780 = vunpack.c.l.b16 %v3708
  %v3781 = vunpack.c.l.b16 %v3709
  %v3782 = vunpack.c.l.b16 %v3710
  %v3783 = vunpack.c.l.b16 %v3711
  %v3784 = vunpack.c.l.b16 %v3712
  %v3785 = vunpack.c.l.b16 %v3713
  %v3786 = vunpack.c.l.b16 %v3714
  %v3787 = vunpack.c.l.b16 %v3715
  %v3788 = vunpack.c.l.b16 %v3716
  %v3789 = vunpack.c.l.b16 %v3717
  %v3790 = vunpack.c.l.b16 %v3718
  %v3791 = vunpack.c.l.b16 %v3719
  %v3792 = vunpack.c.l.b16 %v3720
  %v3793 = vunpack.c.l.b16 %v3721
  %v3794 = vunpack.c.l.b16 %v3722
  %v3795 = vunpack.c.l.b16 %v3723
  %v3796 = vunpack.c.l.b16 %v3724
  %v3797 = vunpack.c.l.b16 %v3725
  %v3798 = vunpack.c.l.b16 %v3726
  %v3799 = vunpack.c.l.b16 %v3727
  %v3800 = vunpack.c.l.b16 %v3728
  %v3801 = vunpack.c.l.b16 %v3729
  %v3802 = vunpack.c.l.b16 %v3730
  %v3803 = vunpack.c.l.b16 %v3731
  %v3804 = vunpack.c.l.b16 %v3732
  %v3805 = vunpack.c.l.b16 %v3733
  %v3806 = vunpack.c.l.b16 %v3734
  %v3807 = vunpack.c.l.b16 %v3735
  %v3808 = vpack.c.b16 %v3737, %v3736
  %v3809 = vpack.c.b16 %v3739, %v3738
  %v3810 = vpack.c.b16 %v3741, %v3740
  %v3811 = vpack.c.b16 %v3743, %v3742
  %v3812 = vpack.c.b16 %v3745, %v3744
  %v3813 = vpack.c.b16 %v3747, %v3746
  %v3814 = vpack.c.b16 %v3749, %v3748
  %v3815 = vpack.c.b16 %v3751, %v3750
  %v3816 = vpack.c.b16 %v3753, %v3752
  %v3817 = vpack.c.b16 %v3755, %v3754
  %v3818 = vpack.c.b16 %v3757, %v3756
  %v3819 = vpack.c.b16 %v3759, %v3758
  %v3820 = vpack.c.b16 %v3761, %v3760
  %v3821 = vpack.c.b16 %v3763, %v3762
  %v3822 = vpack.c.b16 %v3765, %v3764
  %v3823 = vpack.c.b16 %v3767, %v3766
  %v3824 = vpack.c.b16 %v3769, %v3768
  %v3825 = vpack.c.b16 %v3771, %v3770
  %v3826 = vpack.c.b16 %v3773, %v3772
  %v3827 = vpack.c.b16 %v3775, %v3774
  %v3828 = vpack.c.b16 %v3777, %v3776
  %v3829 = vpack.c.b16 %v3779, %v3778
  %v3830 = vpack.c.b16 %v3781, %v3780
  %v3831 = vpack.c.b16 %v3783, %v3782
  %v3832 = vpack.c.b16 %v3785, %v3784
  %v3833 = vpack.c.b16 %v3787, %v3786
  %v3834 = vpack.c.b16 %v3789, %v3788
  %v3835 = vpack.c.b16 %v3791, %v3790
  %v3836 = vpack.c.b16 %v3793, %v3792
  %v3837 = vpack.c.b16 %v3795, %v3794
  %v3838 = vpack.c.b16 %v3797, %v3796
  %v3839 = vpack.c.b16 %v3799, %v3798
  %v3840 = vpack.c.b16 %v3801, %v3800
  %v3841 = vpack.c.b16 %v3803, %v3802
  %v3842 = vpack.c.b16 %v3805, %v3804
  %v3843 = vpack.c.b16 %v3807, %v3806
  %vm3844 = vcmp.ne.s16.totalorder %v3808, 0
  %vm3845 = vcmp.ne.s16.totalorder %v3809, 0
  %vm3846 = vcmp.ne.s16.totalorder %v3810, 0
  %vm3847 = vcmp.ne.s16.totalorder %v3811, 0
  %vm3848 = vcmp.ne.s16.totalorder %v3812, 0
  %vm3849 = vcmp.ne.s16.totalorder %v3813, 0
  %vm3850 = vcmp.ne.s16.totalorder %v3814, 0
  %vm3851 = vcmp.ne.s16.totalorder %v3815, 0
  %vm3852 = vcmp.ne.s16.totalorder %v3816, 0
  %vm3853 = vcmp.ne.s16.totalorder %v3817, 0
  %vm3854 = vcmp.ne.s16.totalorder %v3818, 0
  %vm3855 = vcmp.ne.s16.totalorder %v3819, 0
  %vm3856 = vcmp.ne.s16.totalorder %v3820, 0
  %vm3857 = vcmp.ne.s16.totalorder %v3821, 0
  %vm3858 = vcmp.ne.s16.totalorder %v3822, 0
  %vm3859 = vcmp.ne.s16.totalorder %v3823, 0
  %vm3860 = vcmp.ne.s16.totalorder %v3824, 0
  %vm3861 = vcmp.ne.s16.totalorder %v3825, 0
  %vm3862 = vcmp.ne.s16.totalorder %v3826, 0
  %vm3863 = vcmp.ne.s16.totalorder %v3827, 0
  %vm3864 = vcmp.ne.s16.totalorder %v3828, 0
  %vm3865 = vcmp.ne.s16.totalorder %v3829, 0
  %vm3866 = vcmp.ne.s16.totalorder %v3830, 0
  %vm3867 = vcmp.ne.s16.totalorder %v3831, 0
  %vm3868 = vcmp.ne.s16.totalorder %v3832, 0
  %vm3869 = vcmp.ne.s16.totalorder %v3833, 0
  %vm3870 = vcmp.ne.s16.totalorder %v3834, 0
  %vm3871 = vcmp.ne.s16.totalorder %v3835, 0
  %vm3872 = vcmp.ne.s16.totalorder %v3836, 0
  %vm3873 = vcmp.ne.s16.totalorder %v3837, 0
  %vm3874 = vcmp.ne.s16.totalorder %v3838, 0
  %vm3875 = vcmp.ne.s16.totalorder %v3839, 0
  %vm3876 = vcmp.ne.s16.totalorder %v3840, 0
  %vm3877 = vcmp.ne.s16.totalorder %v3841, 0
  %vm3878 = vcmp.ne.s16.totalorder %v3842, 0
  %vm3879 = vcmp.ne.s16.totalorder %v3843, 0
  %v3880 = vsel %vm3844, %v2430, 0
  %v3881 = vsel %vm3845, %v2431, 0
  %v3882 = vsel %vm3846, %v2432, 0
  %v3883 = vsel %vm3847, %v2433, 0
  %v3884 = vsel %vm3848, %v2434, 0
  %v3885 = vsel %vm3849, %v2435, 0
  %v3886 = vsel %vm3850, %v2436, 0
  %v3887 = vsel %vm3851, %v2437, 0
  %v3888 = vsel %vm3852, %v2438, 0
  %v3889 = vsel %vm3853, %v2439, 0
  %v3890 = vsel %vm3854, %v2440, 0
  %v3891 = vsel %vm3855, %v2441, 0
  %v3892 = vsel %vm3856, %v2442, 0
  %v3893 = vsel %vm3857, %v2443, 0
  %v3894 = vsel %vm3858, %v2444, 0
  %v3895 = vsel %vm3859, %v2445, 0
  %v3896 = vsel %vm3860, %v2446, 0
  %v3897 = vsel %vm3861, %v2447, 0
  %v3898 = vsel %vm3862, %v2448, 0
  %v3899 = vsel %vm3863, %v2449, 0
  %v3900 = vsel %vm3864, %v2450, 0
  %v3901 = vsel %vm3865, %v2451, 0
  %v3902 = vsel %vm3866, %v2452, 0
  %v3903 = vsel %vm3867, %v2453, 0
  %v3904 = vsel %vm3868, %v2454, 0
  %v3905 = vsel %vm3869, %v2455, 0
  %v3906 = vsel %vm3870, %v2456, 0
  %v3907 = vsel %vm3871, %v2457, 0
  %v3908 = vsel %vm3872, %v2458, 0
  %v3909 = vsel %vm3873, %v2459, 0
  %v3910 = vsel %vm3874, %v2460, 0
  %v3911 = vsel %vm3875, %v2461, 0
  %v3912 = vsel %vm3876, %v2462, 0
  %v3913 = vsel %vm3877, %v2463, 0
  %v3914 = vsel %vm3878, %v2464, 0
  %v3915 = vsel %vm3879, %v2465, 0
  %vm3916 = vsmask.f32 7424
  %v3918 = vshrl.u32 %v3880, 16
  %v3920 = vshll.u32 %v3880, 16
  %v3922 = vrot.slane %v3920, 1
  %v3923 = vor.u32 %v3918, %v3922
  %v3925 = vshll.u32 %v3881, 16
  %v3927 = vrot.slane %v3925, 1
  %v3928 = vsel %vm3916, %v3923, %v3927
  %v3930 = vshrl.u32 %v3882, 16
  %v3932 = vshll.u32 %v3882, 16
  %v3934 = vrot.slane %v3932, 1
  %v3935 = vor.u32 %v3930, %v3934
  %v3937 = vshll.u32 %v3883, 16
  %v3939 = vrot.slane %v3937, 1
  %v3940 = vsel %vm3916, %v3935, %v3939
  %v3942 = vshrl.u32 %v3884, 16
  %v3944 = vshll.u32 %v3884, 16
  %v3946 = vrot.slane %v3944, 1
  %v3947 = vor.u32 %v3942, %v3946
  %v3949 = vshll.u32 %v3885, 16
  %v3951 = vrot.slane %v3949, 1
  %v3952 = vsel %vm3916, %v3947, %v3951
  %v3954 = vshrl.u32 %v3886, 16
  %v3956 = vshll.u32 %v3886, 16
  %v3958 = vrot.slane %v3956, 1
  %v3959 = vor.u32 %v3954, %v3958
  %v3961 = vshll.u32 %v3887, 16
  %v3963 = vrot.slane %v3961, 1
  %v3964 = vsel %vm3916, %v3959, %v3963
  %v3966 = vshrl.u32 %v3888, 16
  %v3968 = vshll.u32 %v3888, 16
  %v3970 = vrot.slane %v3968, 1
  %v3971 = vor.u32 %v3966, %v3970
  %v3973 = vshll.u32 %v3889, 16
  %v3975 = vrot.slane %v3973, 1
  %v3976 = vsel %vm3916, %v3971, %v3975
  %v3978 = vshrl.u32 %v3890, 16
  %v3980 = vshll.u32 %v3890, 16
  %v3982 = vrot.slane %v3980, 1
  %v3983 = vor.u32 %v3978, %v3982
  %v3985 = vshll.u32 %v3891, 16
  %v3987 = vrot.slane %v3985, 1
  %v3988 = vsel %vm3916, %v3983, %v3987
  %v3990 = vshrl.u32 %v3892, 16
  %v3992 = vshll.u32 %v3892, 16
  %v3994 = vrot.slane %v3992, 1
  %v3995 = vor.u32 %v3990, %v3994
  %v3997 = vshll.u32 %v3893, 16
  %v3999 = vrot.slane %v3997, 1
  %v4000 = vsel %vm3916, %v3995, %v3999
  %v4002 = vshrl.u32 %v3894, 16
  %v4004 = vshll.u32 %v3894, 16
  %v4006 = vrot.slane %v4004, 1
  %v4007 = vor.u32 %v4002, %v4006
  %v4009 = vshll.u32 %v3895, 16
  %v4011 = vrot.slane %v4009, 1
  %v4012 = vsel %vm3916, %v4007, %v4011
  %v4014 = vshrl.u32 %v3896, 16
  %v4016 = vshll.u32 %v3896, 16
  %v4018 = vrot.slane %v4016, 1
  %v4019 = vor.u32 %v4014, %v4018
  %v4021 = vshll.u32 %v3897, 16
  %v4023 = vrot.slane %v4021, 1
  %v4024 = vsel %vm3916, %v4019, %v4023
  %v4026 = vshrl.u32 %v3898, 16
  %v4028 = vshll.u32 %v3898, 16
  %v4030 = vrot.slane %v4028, 1
  %v4031 = vor.u32 %v4026, %v4030
  %v4033 = vshll.u32 %v3899, 16
  %v4035 = vrot.slane %v4033, 1
  %v4036 = vsel %vm3916, %v4031, %v4035
  %v4038 = vshrl.u32 %v3900, 16
  %v4040 = vshll.u32 %v3900, 16
  %v4042 = vrot.slane %v4040, 1
  %v4043 = vor.u32 %v4038, %v4042
  %v4045 = vshll.u32 %v3901, 16
  %v4047 = vrot.slane %v4045, 1
  %v4048 = vsel %vm3916, %v4043, %v4047
  %v4050 = vshrl.u32 %v3902, 16
  %v4052 = vshll.u32 %v3902, 16
  %v4054 = vrot.slane %v4052, 1
  %v4055 = vor.u32 %v4050, %v4054
  %v4057 = vshll.u32 %v3903, 16
  %v4059 = vrot.slane %v4057, 1
  %v4060 = vsel %vm3916, %v4055, %v4059
  %v4062 = vshrl.u32 %v3904, 16
  %v4064 = vshll.u32 %v3904, 16
  %v4066 = vrot.slane %v4064, 1
  %v4067 = vor.u32 %v4062, %v4066
  %v4069 = vshll.u32 %v3905, 16
  %v4071 = vrot.slane %v4069, 1
  %v4072 = vsel %vm3916, %v4067, %v4071
  %v4074 = vshrl.u32 %v3906, 16
  %v4076 = vshll.u32 %v3906, 16
  %v4078 = vrot.slane %v4076, 1
  %v4079 = vor.u32 %v4074, %v4078
  %v4081 = vshll.u32 %v3907, 16
  %v4083 = vrot.slane %v4081, 1
  %v4084 = vsel %vm3916, %v4079, %v4083
  %v4086 = vshrl.u32 %v3908, 16
  %v4088 = vshll.u32 %v3908, 16
  %v4090 = vrot.slane %v4088, 1
  %v4091 = vor.u32 %v4086, %v4090
  %v4093 = vshll.u32 %v3909, 16
  %v4095 = vrot.slane %v4093, 1
  %v4096 = vsel %vm3916, %v4091, %v4095
  %v4098 = vshrl.u32 %v3910, 16
  %v4100 = vshll.u32 %v3910, 16
  %v4102 = vrot.slane %v4100, 1
  %v4103 = vor.u32 %v4098, %v4102
  %v4105 = vshll.u32 %v3911, 16
  %v4107 = vrot.slane %v4105, 1
  %v4108 = vsel %vm3916, %v4103, %v4107
  %vm4157 = vcmask 1046528
  %v4158 = vrot.slane %v3880, 1
  %v4159 = vrot.slane %v3881, 1
  %v4160 = vsel %vm4157, %v4158, %v4159
  %v4161 = vrot.slane %v3882, 1
  %v4162 = vrot.slane %v3883, 1
  %v4163 = vsel %vm4157, %v4161, %v4162
  %v4164 = vrot.slane %v3884, 1
  %v4165 = vrot.slane %v3885, 1
  %v4166 = vsel %vm4157, %v4164, %v4165
  %v4167 = vrot.slane %v3886, 1
  %v4168 = vrot.slane %v3887, 1
  %v4169 = vsel %vm4157, %v4167, %v4168
  %v4170 = vrot.slane %v3888, 1
  %v4171 = vrot.slane %v3889, 1
  %v4172 = vsel %vm4157, %v4170, %v4171
  %v4173 = vrot.slane %v3890, 1
  %v4174 = vrot.slane %v3891, 1
  %v4175 = vsel %vm4157, %v4173, %v4174
  %v4176 = vrot.slane %v3892, 1
  %v4177 = vrot.slane %v3893, 1
  %v4178 = vsel %vm4157, %v4176, %v4177
  %v4179 = vrot.slane %v3894, 1
  %v4180 = vrot.slane %v3895, 1
  %v4181 = vsel %vm4157, %v4179, %v4180
  %v4182 = vrot.slane %v3896, 1
  %v4183 = vrot.slane %v3897, 1
  %v4184 = vsel %vm4157, %v4182, %v4183
  %v4185 = vrot.slane %v3898, 1
  %v4186 = vrot.slane %v3899, 1
  %v4187 = vsel %vm4157, %v4185, %v4186
  %v4188 = vrot.slane %v3900, 1
  %v4189 = vrot.slane %v3901, 1
  %v4190 = vsel %vm4157, %v4188, %v4189
  %v4191 = vrot.slane %v3902, 1
  %v4192 = vrot.slane %v3903, 1
  %v4193 = vsel %vm4157, %v4191, %v4192
  %v4194 = vrot.slane %v3904, 1
  %v4195 = vrot.slane %v3905, 1
  %v4196 = vsel %vm4157, %v4194, %v4195
  %v4197 = vrot.slane %v3906, 1
  %v4198 = vrot.slane %v3907, 1
  %v4199 = vsel %vm4157, %v4197, %v4198
  %v4200 = vrot.slane %v3908, 1
  %v4201 = vrot.slane %v3909, 1
  %v4202 = vsel %vm4157, %v4200, %v4201
  %v4203 = vrot.slane %v3910, 1
  %v4204 = vrot.slane %v3911, 1
  %v4205 = vsel %vm4157, %v4203, %v4204
  %v4223 = vshrl.u32 %v3912, 16
  %v4225 = vshll.u32 %v3912, 16
  %v4227 = vrot.slane %v4225, 1
  %v4228 = vor.u32 %v4223, %v4227
  %v4230 = vshll.u32 %v3913, 16
  %v4232 = vrot.slane %v4230, 1
  %v4233 = vsel %vm3916, %v4228, %v4232
  %v4237 = vrot.slane %v3912, 1
  %v4238 = vrot.slane %v3913, 1
  %v4239 = vsel %vm4157, %v4237, %v4238
  %v4242 = vshrl.u32 %v3914, 16
  %v4244 = vshll.u32 %v3914, 16
  %v4246 = vrot.slane %v4244, 1
  %v4247 = vor.u32 %v4242, %v4246
  %v4249 = vshll.u32 %v3915, 16
  %v4251 = vrot.slane %v4249, 1
  %v4252 = vsel %vm3916, %v4247, %v4251
  %v4256 = vrot.slane %v3914, 1
  %v4257 = vrot.slane %v3915, 1
  %v4258 = vsel %vm4157, %v4256, %v4257
  %v4260 = vsel %vm3844, %v2466, 0
  %v4261 = vsel %vm3845, %v2467, 0
  %v4262 = vsel %vm3846, %v2468, 0
  %v4263 = vsel %vm3847, %v2469, 0
  %v4264 = vsel %vm3848, %v2470, 0
  %v4265 = vsel %vm3849, %v2471, 0
  %v4266 = vsel %vm3850, %v2472, 0
  %v4267 = vsel %vm3851, %v2473, 0
  %v4268 = vsel %vm3852, %v2474, 0
  %v4269 = vsel %vm3853, %v2475, 0
  %v4270 = vsel %vm3854, %v2476, 0
  %v4271 = vsel %vm3855, %v2477, 0
  %v4272 = vsel %vm3856, %v2478, 0
  %v4273 = vsel %vm3857, %v2479, 0
  %v4274 = vsel %vm3858, %v2480, 0
  %v4275 = vsel %vm3859, %v2481, 0
  %v4276 = vsel %vm3860, %v2482, 0
  %v4277 = vsel %vm3861, %v2483, 0
  %v4278 = vsel %vm3862, %v2484, 0
  %v4279 = vsel %vm3863, %v2485, 0
  %v4280 = vsel %vm3864, %v2486, 0
  %v4281 = vsel %vm3865, %v2487, 0
  %v4282 = vsel %vm3866, %v2488, 0
  %v4283 = vsel %vm3867, %v2489, 0
  %v4284 = vsel %vm3868, %v2490, 0
  %v4285 = vsel %vm3869, %v2491, 0
  %v4286 = vsel %vm3870, %v2492, 0
  %v4287 = vsel %vm3871, %v2493, 0
  %v4288 = vsel %vm3872, %v2494, 0
  %v4289 = vsel %vm3873, %v2495, 0
  %v4290 = vsel %vm3874, %v2496, 0
  %v4291 = vsel %vm3875, %v2497, 0
  %v4292 = vsel %vm3876, %v2498, 0
  %v4293 = vsel %vm3877, %v2499, 0
  %v4294 = vsel %vm3878, %v2500, 0
  %v4295 = vsel %vm3879, %v2501, 0
  %v4297 = vshrl.u32 %v4260, 16
  %v4299 = vshll.u32 %v4260, 16
  %v4301 = vrot.slane %v4299, 1
  %v4302 = vor.u32 %v4297, %v4301
  %v4304 = vshll.u32 %v4261, 16
  %v4306 = vrot.slane %v4304, 1
  %v4307 = vsel %vm3916, %v4302, %v4306
  %v4309 = vshrl.u32 %v4262, 16
  %v4311 = vshll.u32 %v4262, 16
  %v4313 = vrot.slane %v4311, 1
  %v4314 = vor.u32 %v4309, %v4313
  %v4316 = vshll.u32 %v4263, 16
  %v4318 = vrot.slane %v4316, 1
  %v4319 = vsel %vm3916, %v4314, %v4318
  %v4321 = vshrl.u32 %v4264, 16
  %v4323 = vshll.u32 %v4264, 16
  %v4325 = vrot.slane %v4323, 1
  %v4326 = vor.u32 %v4321, %v4325
  %v4328 = vshll.u32 %v4265, 16
  %v4330 = vrot.slane %v4328, 1
  %v4331 = vsel %vm3916, %v4326, %v4330
  %v4333 = vshrl.u32 %v4266, 16
  %v4335 = vshll.u32 %v4266, 16
  %v4337 = vrot.slane %v4335, 1
  %v4338 = vor.u32 %v4333, %v4337
  %v4340 = vshll.u32 %v4267, 16
  %v4342 = vrot.slane %v4340, 1
  %v4343 = vsel %vm3916, %v4338, %v4342
  %v4345 = vshrl.u32 %v4268, 16
  %v4347 = vshll.u32 %v4268, 16
  %v4349 = vrot.slane %v4347, 1
  %v4350 = vor.u32 %v4345, %v4349
  %v4352 = vshll.u32 %v4269, 16
  %v4354 = vrot.slane %v4352, 1
  %v4355 = vsel %vm3916, %v4350, %v4354
  %v4357 = vshrl.u32 %v4270, 16
  %v4359 = vshll.u32 %v4270, 16
  %v4361 = vrot.slane %v4359, 1
  %v4362 = vor.u32 %v4357, %v4361
  %v4364 = vshll.u32 %v4271, 16
  %v4366 = vrot.slane %v4364, 1
  %v4367 = vsel %vm3916, %v4362, %v4366
  %v4369 = vshrl.u32 %v4272, 16
  %v4371 = vshll.u32 %v4272, 16
  %v4373 = vrot.slane %v4371, 1
  %v4374 = vor.u32 %v4369, %v4373
  %v4376 = vshll.u32 %v4273, 16
  %v4378 = vrot.slane %v4376, 1
  %v4379 = vsel %vm3916, %v4374, %v4378
  %v4381 = vshrl.u32 %v4274, 16
  %v4383 = vshll.u32 %v4274, 16
  %v4385 = vrot.slane %v4383, 1
  %v4386 = vor.u32 %v4381, %v4385
  %v4388 = vshll.u32 %v4275, 16
  %v4390 = vrot.slane %v4388, 1
  %v4391 = vsel %vm3916, %v4386, %v4390
  %v4393 = vshrl.u32 %v4276, 16
  %v4395 = vshll.u32 %v4276, 16
  %v4397 = vrot.slane %v4395, 1
  %v4398 = vor.u32 %v4393, %v4397
  %v4400 = vshll.u32 %v4277, 16
  %v4402 = vrot.slane %v4400, 1
  %v4403 = vsel %vm3916, %v4398, %v4402
  %v4405 = vshrl.u32 %v4278, 16
  %v4407 = vshll.u32 %v4278, 16
  %v4409 = vrot.slane %v4407, 1
  %v4410 = vor.u32 %v4405, %v4409
  %v4412 = vshll.u32 %v4279, 16
  %v4414 = vrot.slane %v4412, 1
  %v4415 = vsel %vm3916, %v4410, %v4414
  %v4417 = vshrl.u32 %v4280, 16
  %v4419 = vshll.u32 %v4280, 16
  %v4421 = vrot.slane %v4419, 1
  %v4422 = vor.u32 %v4417, %v4421
  %v4424 = vshll.u32 %v4281, 16
  %v4426 = vrot.slane %v4424, 1
  %v4427 = vsel %vm3916, %v4422, %v4426
  %v4429 = vshrl.u32 %v4282, 16
  %v4431 = vshll.u32 %v4282, 16
  %v4433 = vrot.slane %v4431, 1
  %v4434 = vor.u32 %v4429, %v4433
  %v4436 = vshll.u32 %v4283, 16
  %v4438 = vrot.slane %v4436, 1
  %v4439 = vsel %vm3916, %v4434, %v4438
  %v4441 = vshrl.u32 %v4284, 16
  %v4443 = vshll.u32 %v4284, 16
  %v4445 = vrot.slane %v4443, 1
  %v4446 = vor.u32 %v4441, %v4445
  %v4448 = vshll.u32 %v4285, 16
  %v4450 = vrot.slane %v4448, 1
  %v4451 = vsel %vm3916, %v4446, %v4450
  %v4453 = vshrl.u32 %v4286, 16
  %v4455 = vshll.u32 %v4286, 16
  %v4457 = vrot.slane %v4455, 1
  %v4458 = vor.u32 %v4453, %v4457
  %v4460 = vshll.u32 %v4287, 16
  %v4462 = vrot.slane %v4460, 1
  %v4463 = vsel %vm3916, %v4458, %v4462
  %v4465 = vshrl.u32 %v4288, 16
  %v4467 = vshll.u32 %v4288, 16
  %v4469 = vrot.slane %v4467, 1
  %v4470 = vor.u32 %v4465, %v4469
  %v4472 = vshll.u32 %v4289, 16
  %v4474 = vrot.slane %v4472, 1
  %v4475 = vsel %vm3916, %v4470, %v4474
  %v4477 = vshrl.u32 %v4290, 16
  %v4479 = vshll.u32 %v4290, 16
  %v4481 = vrot.slane %v4479, 1
  %v4482 = vor.u32 %v4477, %v4481
  %v4484 = vshll.u32 %v4291, 16
  %v4486 = vrot.slane %v4484, 1
  %v4487 = vsel %vm3916, %v4482, %v4486
  %v4536 = vrot.slane %v4260, 1
  %v4537 = vrot.slane %v4261, 1
  %v4538 = vsel %vm4157, %v4536, %v4537
  %v4539 = vrot.slane %v4262, 1
  %v4540 = vrot.slane %v4263, 1
  %v4541 = vsel %vm4157, %v4539, %v4540
  %v4542 = vrot.slane %v4264, 1
  %v4543 = vrot.slane %v4265, 1
  %v4544 = vsel %vm4157, %v4542, %v4543
  %v4545 = vrot.slane %v4266, 1
  %v4546 = vrot.slane %v4267, 1
  %v4547 = vsel %vm4157, %v4545, %v4546
  %v4548 = vrot.slane %v4268, 1
  %v4549 = vrot.slane %v4269, 1
  %v4550 = vsel %vm4157, %v4548, %v4549
  %v4551 = vrot.slane %v4270, 1
  %v4552 = vrot.slane %v4271, 1
  %v4553 = vsel %vm4157, %v4551, %v4552
  %v4554 = vrot.slane %v4272, 1
  %v4555 = vrot.slane %v4273, 1
  %v4556 = vsel %vm4157, %v4554, %v4555
  %v4557 = vrot.slane %v4274, 1
  %v4558 = vrot.slane %v4275, 1
  %v4559 = vsel %vm4157, %v4557, %v4558
  %v4560 = vrot.slane %v4276, 1
  %v4561 = vrot.slane %v4277, 1
  %v4562 = vsel %vm4157, %v4560, %v4561
  %v4563 = vrot.slane %v4278, 1
  %v4564 = vrot.slane %v4279, 1
  %v4565 = vsel %vm4157, %v4563, %v4564
  %v4566 = vrot.slane %v4280, 1
  %v4567 = vrot.slane %v4281, 1
  %v4568 = vsel %vm4157, %v4566, %v4567
  %v4569 = vrot.slane %v4282, 1
  %v4570 = vrot.slane %v4283, 1
  %v4571 = vsel %vm4157, %v4569, %v4570
  %v4572 = vrot.slane %v4284, 1
  %v4573 = vrot.slane %v4285, 1
  %v4574 = vsel %vm4157, %v4572, %v4573
  %v4575 = vrot.slane %v4286, 1
  %v4576 = vrot.slane %v4287, 1
  %v4577 = vsel %vm4157, %v4575, %v4576
  %v4578 = vrot.slane %v4288, 1
  %v4579 = vrot.slane %v4289, 1
  %v4580 = vsel %vm4157, %v4578, %v4579
  %v4581 = vrot.slane %v4290, 1
  %v4582 = vrot.slane %v4291, 1
  %v4583 = vsel %vm4157, %v4581, %v4582
  %v4601 = vshrl.u32 %v4292, 16
  %v4603 = vshll.u32 %v4292, 16
  %v4605 = vrot.slane %v4603, 1
  %v4606 = vor.u32 %v4601, %v4605
  %v4608 = vshll.u32 %v4293, 16
  %v4610 = vrot.slane %v4608, 1
  %v4611 = vsel %vm3916, %v4606, %v4610
  %v4615 = vrot.slane %v4292, 1
  %v4616 = vrot.slane %v4293, 1
  %v4617 = vsel %vm4157, %v4615, %v4616
  %v4620 = vshrl.u32 %v4294, 16
  %v4622 = vshll.u32 %v4294, 16
  %v4624 = vrot.slane %v4622, 1
  %v4625 = vor.u32 %v4620, %v4624
  %v4627 = vshll.u32 %v4295, 16
  %v4629 = vrot.slane %v4627, 1
  %v4630 = vsel %vm3916, %v4625, %v4629
  %v4634 = vrot.slane %v4294, 1
  %v4635 = vrot.slane %v4295, 1
  %v4636 = vsel %vm4157, %v4634, %v4635
  %v4638 = vld [vmem:[%s6] sm:$0x1]
  %v4640 = vlaneseq
  %v4641 = vshrl.u32 %v4640, 7
  %v4642 = vsub.s32 0, %v4641
  %v4643 = vrot.slane %v4638, %v4642
  %4645 = vmatprep.subr.bf16.mxu0 0
  %4646 = vmatpush1.bf16.msra.mxu0 %v3520
  %4647 = vmatprep.subr.bf16.mxu0 0
  %4648 = vmatpush1.bf16.msra.mxu0 %v3521
  %4649 = vmatprep.subr.bf16.mxu0 0
  %4650 = vmatpush1.bf16.msra.mxu0 %v3522
  %4651 = vmatprep.subr.bf16.mxu0 0
  %4652 = vmatpush1.bf16.msra.mxu0 %v3523
  %4653 = vmatprep.subr.bf16.mxu0 0
  %4654 = vmatpush1.bf16.msra.mxu0 %v3524
  %4655 = vmatprep.subr.bf16.mxu0 0
  %4656 = vmatpush1.bf16.msra.mxu0 %v3525
  %4657 = vmatprep.subr.bf16.mxu0 0
  %4658 = vmatpush1.bf16.msra.mxu0 %v3526
  %4659 = vmatprep.subr.bf16.mxu0 0
  %4660 = vmatpush1.bf16.msra.mxu0 %v3527
  %4661 = vmatprep.subr.bf16.mxu0 0
  %4662 = vmatpush1.bf16.msra.mxu0 %v3528
  %4663 = vmatprep.subr.bf16.mxu0 0
  %4664 = vmatpush1.bf16.msra.mxu0 %v3529
  %4665 = vmatprep.subr.bf16.mxu0 0
  %4666 = vmatpush1.bf16.msra.mxu0 %v3530
  %4667 = vmatprep.subr.bf16.mxu0 0
  %4668 = vmatpush1.bf16.msra.mxu0 %v3531
  %4669 = vmatprep.subr.bf16.mxu0 0
  %4670 = vmatpush1.bf16.msra.mxu0 %v3532
  %4671 = vmatprep.subr.bf16.mxu0 0
  %4672 = vmatpush1.bf16.msra.mxu0 %v3533
  %4673 = vmatprep.subr.bf16.mxu0 0
  %4674 = vmatpush1.bf16.msra.mxu0 %v3534
  %4675 = vmatprep.subr.bf16.mxu0 0
  %4676 = vmatpush1.bf16.msra.mxu0 %v3535
  %4677 = vmatprep.mubr.bf16.mxu0 %v3928
  %4678 = vmatmul.mubr.bf16.gmra.mrb[0].mxu0 %v3880
  %v4679 = vpop.f32.mrb[0].mxu0
  %v4680 = vadd.f32 %v4643, %v4679
  %v4681 = vpop.f32.mrb[0].mxu0
  %v4682 = vpop.f32.mrb[0].mxu0
  %v4683 = vadd.f32 %v4643, %v4682
  %v4684 = vpop.f32.mrb[0].mxu0
  %4685 = vmatprep.mubr.bf16.mxu0 %v3940
  %4686 = vmatmul.mubr.bf16.gmra.mrb[0].mxu0 %v3882
  %v4687 = vpop.f32.mrb[0].mxu0
  %v4688 = vadd.f32 %v4643, %v4687
  %v4689 = vpop.f32.mrb[0].mxu0
  %v4690 = vpop.f32.mrb[0].mxu0
  %v4691 = vadd.f32 %v4643, %v4690
  %v4692 = vpop.f32.mrb[0].mxu0
  %4693 = vmatprep.mubr.bf16.mxu0 %v3952
  %4694 = vmatmul.mubr.bf16.gmra.mrb[0].mxu0 %v3884
  %v4695 = vpop.f32.mrb[0].mxu0
  %v4696 = vadd.f32 %v4643, %v4695
  %v4697 = vpop.f32.mrb[0].mxu0
  %v4698 = vpop.f32.mrb[0].mxu0
  %v4699 = vadd.f32 %v4643, %v4698
  %v4700 = vpop.f32.mrb[0].mxu0
  %4701 = vmatprep.mubr.bf16.mxu0 %v3964
  %4702 = vmatmul.mubr.bf16.gmra.mrb[0].mxu0 %v3886
  %v4703 = vpop.f32.mrb[0].mxu0
  %v4704 = vadd.f32 %v4643, %v4703
  %v4705 = vpop.f32.mrb[0].mxu0
  %v4706 = vpop.f32.mrb[0].mxu0
  %v4707 = vadd.f32 %v4643, %v4706
  %v4708 = vpop.f32.mrb[0].mxu0
  %4709 = vmatprep.mubr.bf16.mxu0 %v3976
  %4710 = vmatmul.mubr.bf16.gmra.mrb[0].mxu0 %v3888
  %v4711 = vpop.f32.mrb[0].mxu0
  %v4712 = vadd.f32 %v4643, %v4711
  %v4713 = vpop.f32.mrb[0].mxu0
  %v4714 = vpop.f32.mrb[0].mxu0
  %v4715 = vadd.f32 %v4643, %v4714
  %v4716 = vpop.f32.mrb[0].mxu0
  %4717 = vmatprep.mubr.bf16.mxu0 %v3988
  %4718 = vmatmul.mubr.bf16.gmra.mrb[0].mxu0 %v3890
  %v4719 = vpop.f32.mrb[0].mxu0
  %v4720 = vadd.f32 %v4643, %v4719
  %v4721 = vpop.f32.mrb[0].mxu0
  %v4722 = vpop.f32.mrb[0].mxu0
  %v4723 = vadd.f32 %v4643, %v4722
  %v4724 = vpop.f32.mrb[0].mxu0
  %4725 = vmatprep.mubr.bf16.mxu0 %v4000
  %4726 = vmatmul.mubr.bf16.gmra.mrb[0].mxu0 %v3892
  %v4727 = vpop.f32.mrb[0].mxu0
  %v4728 = vadd.f32 %v4643, %v4727
  %v4729 = vpop.f32.mrb[0].mxu0
  %v4730 = vpop.f32.mrb[0].mxu0
  %v4731 = vadd.f32 %v4643, %v4730
  %v4732 = vpop.f32.mrb[0].mxu0
  %4733 = vmatprep.mubr.bf16.mxu0 %v4012
  %4734 = vmatmul.mubr.bf16.gmra.mrb[0].mxu0 %v3894
  %v4735 = vpop.f32.mrb[0].mxu0
  %v4736 = vadd.f32 %v4643, %v4735
  %v4737 = vpop.f32.mrb[0].mxu0
  %v4738 = vpop.f32.mrb[0].mxu0
  %v4739 = vadd.f32 %v4643, %v4738
  %v4740 = vpop.f32.mrb[0].mxu0
  %4741 = vmatprep.mubr.bf16.mxu0 %v4024
  %4742 = vmatmul.mubr.bf16.gmra.mrb[0].mxu0 %v3896
  %v4743 = vpop.f32.mrb[0].mxu0
  %v4744 = vadd.f32 %v4643, %v4743
  %v4745 = vpop.f32.mrb[0].mxu0
  %v4746 = vpop.f32.mrb[0].mxu0
  %v4747 = vadd.f32 %v4643, %v4746
  %v4748 = vpop.f32.mrb[0].mxu0
  %4749 = vmatprep.mubr.bf16.mxu0 %v4036
  %4750 = vmatmul.mubr.bf16.gmra.mrb[0].mxu0 %v3898
  %v4751 = vpop.f32.mrb[0].mxu0
  %v4752 = vadd.f32 %v4643, %v4751
  %v4753 = vpop.f32.mrb[0].mxu0
  %v4754 = vpop.f32.mrb[0].mxu0
  %v4755 = vadd.f32 %v4643, %v4754
  %v4756 = vpop.f32.mrb[0].mxu0
  %4757 = vmatprep.mubr.bf16.mxu0 %v4048
  %4758 = vmatmul.mubr.bf16.gmra.mrb[0].mxu0 %v3900
  %v4759 = vpop.f32.mrb[0].mxu0
  %v4760 = vadd.f32 %v4643, %v4759
  %v4761 = vpop.f32.mrb[0].mxu0
  %v4762 = vpop.f32.mrb[0].mxu0
  %v4763 = vadd.f32 %v4643, %v4762
  %v4764 = vpop.f32.mrb[0].mxu0
  %4765 = vmatprep.mubr.bf16.mxu0 %v4060
  %4766 = vmatmul.mubr.bf16.gmra.mrb[0].mxu0 %v3902
  %v4767 = vpop.f32.mrb[0].mxu0
  %v4768 = vadd.f32 %v4643, %v4767
  %v4769 = vpop.f32.mrb[0].mxu0
  %v4770 = vpop.f32.mrb[0].mxu0
  %v4771 = vadd.f32 %v4643, %v4770
  %v4772 = vpop.f32.mrb[0].mxu0
  %4773 = vmatprep.mubr.bf16.mxu0 %v4072
  %4774 = vmatmul.mubr.bf16.gmra.mrb[0].mxu0 %v3904
  %v4775 = vpop.f32.mrb[0].mxu0
  %v4776 = vadd.f32 %v4643, %v4775
  %v4777 = vpop.f32.mrb[0].mxu0
  %v4778 = vpop.f32.mrb[0].mxu0
  %v4779 = vadd.f32 %v4643, %v4778
  %v4780 = vpop.f32.mrb[0].mxu0
  %4781 = vmatprep.mubr.bf16.mxu0 %v4084
  %4782 = vmatmul.mubr.bf16.gmra.mrb[0].mxu0 %v3906
  %v4783 = vpop.f32.mrb[0].mxu0
  %v4784 = vadd.f32 %v4643, %v4783
  %v4785 = vpop.f32.mrb[0].mxu0
  %v4786 = vpop.f32.mrb[0].mxu0
  %v4787 = vadd.f32 %v4643, %v4786
  %v4788 = vpop.f32.mrb[0].mxu0
  %4789 = vmatprep.mubr.bf16.mxu0 %v4096
  %4790 = vmatmul.mubr.bf16.gmra.mrb[0].mxu0 %v3908
  %v4791 = vpop.f32.mrb[0].mxu0
  %v4792 = vadd.f32 %v4643, %v4791
  %v4793 = vpop.f32.mrb[0].mxu0
  %v4794 = vpop.f32.mrb[0].mxu0
  %v4795 = vadd.f32 %v4643, %v4794
  %v4796 = vpop.f32.mrb[0].mxu0
  %4797 = vmatprep.mubr.bf16.mxu0 %v4108
  %4798 = vmatmul.mubr.bf16.gmra.mrb[0].mxu0 %v3910
  %v4799 = vpop.f32.mrb[0].mxu0
  %v4800 = vadd.f32 %v4643, %v4799
  %v4801 = vpop.f32.mrb[0].mxu0
  %v4802 = vpop.f32.mrb[0].mxu0
  %v4803 = vadd.f32 %v4643, %v4802
  %v4804 = vpop.f32.mrb[0].mxu0
  %4805 = vmatprep.mubr.bf16.mxu0 %v4307
  %4806 = vmatmul.mubr.bf16.gmra.mrb[0].mxu0 %v4260
  %v4807 = vpop.f32.mrb[0].mxu0
  %v4808 = vadd.f32 %v4643, %v4807
  %v4809 = vpop.f32.mrb[0].mxu0
  %v4810 = vpop.f32.mrb[0].mxu0
  %v4811 = vadd.f32 %v4643, %v4810
  %v4812 = vpop.f32.mrb[0].mxu0
  %4813 = vmatprep.mubr.bf16.mxu0 %v4319
  %4814 = vmatmul.mubr.bf16.gmra.mrb[0].mxu0 %v4262
  %v4815 = vpop.f32.mrb[0].mxu0
  %v4816 = vadd.f32 %v4643, %v4815
  %v4817 = vpop.f32.mrb[0].mxu0
  %v4818 = vpop.f32.mrb[0].mxu0
  %v4819 = vadd.f32 %v4643, %v4818
  %v4820 = vpop.f32.mrb[0].mxu0
  %4821 = vmatprep.mubr.bf16.mxu0 %v4331
  %4822 = vmatmul.mubr.bf16.gmra.mrb[0].mxu0 %v4264
  %v4823 = vpop.f32.mrb[0].mxu0
  %v4824 = vadd.f32 %v4643, %v4823
  %v4825 = vpop.f32.mrb[0].mxu0
  %v4826 = vpop.f32.mrb[0].mxu0
  %v4827 = vadd.f32 %v4643, %v4826
  %v4828 = vpop.f32.mrb[0].mxu0
  %4829 = vmatprep.mubr.bf16.mxu0 %v4343
  %4830 = vmatmul.mubr.bf16.gmra.mrb[0].mxu0 %v4266
  %v4831 = vpop.f32.mrb[0].mxu0
  %v4832 = vadd.f32 %v4643, %v4831
  %v4833 = vpop.f32.mrb[0].mxu0
  %v4834 = vpop.f32.mrb[0].mxu0
  %v4835 = vadd.f32 %v4643, %v4834
  %v4836 = vpop.f32.mrb[0].mxu0
  %4837 = vmatprep.mubr.bf16.mxu0 %v4355
  %4838 = vmatmul.mubr.bf16.gmra.mrb[0].mxu0 %v4268
  %v4839 = vpop.f32.mrb[0].mxu0
  %v4840 = vadd.f32 %v4643, %v4839
  %v4841 = vpop.f32.mrb[0].mxu0
  %v4842 = vpop.f32.mrb[0].mxu0
  %v4843 = vadd.f32 %v4643, %v4842
  %v4844 = vpop.f32.mrb[0].mxu0
  %4845 = vmatprep.mubr.bf16.mxu0 %v4367
  %4846 = vmatmul.mubr.bf16.gmra.mrb[0].mxu0 %v4270
  %v4847 = vpop.f32.mrb[0].mxu0
  %v4848 = vadd.f32 %v4643, %v4847
  %v4849 = vpop.f32.mrb[0].mxu0
  %v4850 = vpop.f32.mrb[0].mxu0
  %v4851 = vadd.f32 %v4643, %v4850
  %v4852 = vpop.f32.mrb[0].mxu0
  %4853 = vmatprep.mubr.bf16.mxu0 %v4379
  %4854 = vmatmul.mubr.bf16.gmra.mrb[0].mxu0 %v4272
  %v4855 = vpop.f32.mrb[0].mxu0
  %v4856 = vadd.f32 %v4643, %v4855
  %v4857 = vpop.f32.mrb[0].mxu0
  %v4858 = vpop.f32.mrb[0].mxu0
  %v4859 = vadd.f32 %v4643, %v4858
  %v4860 = vpop.f32.mrb[0].mxu0
  %4861 = vmatprep.mubr.bf16.mxu0 %v4391
  %4862 = vmatmul.mubr.bf16.gmra.mrb[0].mxu0 %v4274
  %v4863 = vpop.f32.mrb[0].mxu0
  %v4864 = vadd.f32 %v4643, %v4863
  %v4865 = vpop.f32.mrb[0].mxu0
  %v4866 = vpop.f32.mrb[0].mxu0
  %v4867 = vadd.f32 %v4643, %v4866
  %v4868 = vpop.f32.mrb[0].mxu0
  %4869 = vmatprep.mubr.bf16.mxu0 %v4403
  %4870 = vmatmul.mubr.bf16.gmra.mrb[0].mxu0 %v4276
  %v4871 = vpop.f32.mrb[0].mxu0
  %v4872 = vadd.f32 %v4643, %v4871
  %v4873 = vpop.f32.mrb[0].mxu0
  %v4874 = vpop.f32.mrb[0].mxu0
  %v4875 = vadd.f32 %v4643, %v4874
  %v4876 = vpop.f32.mrb[0].mxu0
  %4877 = vmatprep.mubr.bf16.mxu0 %v4415
  %4878 = vmatmul.mubr.bf16.gmra.mrb[0].mxu0 %v4278
  %v4879 = vpop.f32.mrb[0].mxu0
  %v4880 = vadd.f32 %v4643, %v4879
  %v4881 = vpop.f32.mrb[0].mxu0
  %v4882 = vpop.f32.mrb[0].mxu0
  %v4883 = vadd.f32 %v4643, %v4882
  %v4884 = vpop.f32.mrb[0].mxu0
  %4885 = vmatprep.mubr.bf16.mxu0 %v4427
  %4886 = vmatmul.mubr.bf16.gmra.mrb[0].mxu0 %v4280
  %v4887 = vpop.f32.mrb[0].mxu0
  %v4888 = vadd.f32 %v4643, %v4887
  %v4889 = vpop.f32.mrb[0].mxu0
  %v4890 = vpop.f32.mrb[0].mxu0
  %v4891 = vadd.f32 %v4643, %v4890
  %v4892 = vpop.f32.mrb[0].mxu0
  %4893 = vmatprep.mubr.bf16.mxu0 %v4439
  %4894 = vmatmul.mubr.bf16.gmra.mrb[0].mxu0 %v4282
  %v4895 = vpop.f32.mrb[0].mxu0
  %v4896 = vadd.f32 %v4643, %v4895
  %v4897 = vpop.f32.mrb[0].mxu0
  %v4898 = vpop.f32.mrb[0].mxu0
  %v4899 = vadd.f32 %v4643, %v4898
  %v4900 = vpop.f32.mrb[0].mxu0
  %4901 = vmatprep.mubr.bf16.mxu0 %v4451
  %4902 = vmatmul.mubr.bf16.gmra.mrb[0].mxu0 %v4284
  %v4903 = vpop.f32.mrb[0].mxu0
  %v4904 = vadd.f32 %v4643, %v4903
  %v4905 = vpop.f32.mrb[0].mxu0
  %v4906 = vpop.f32.mrb[0].mxu0
  %v4907 = vadd.f32 %v4643, %v4906
  %v4908 = vpop.f32.mrb[0].mxu0
  %4909 = vmatprep.mubr.bf16.mxu0 %v4463
  %4910 = vmatmul.mubr.bf16.gmra.mrb[0].mxu0 %v4286
  %v4911 = vpop.f32.mrb[0].mxu0
  %v4912 = vadd.f32 %v4643, %v4911
  %v4913 = vpop.f32.mrb[0].mxu0
  %v4914 = vpop.f32.mrb[0].mxu0
  %v4915 = vadd.f32 %v4643, %v4914
  %v4916 = vpop.f32.mrb[0].mxu0
  %4917 = vmatprep.mubr.bf16.mxu0 %v4475
  %4918 = vmatmul.mubr.bf16.gmra.mrb[0].mxu0 %v4288
  %v4919 = vpop.f32.mrb[0].mxu0
  %v4920 = vadd.f32 %v4643, %v4919
  %v4921 = vpop.f32.mrb[0].mxu0
  %v4922 = vpop.f32.mrb[0].mxu0
  %v4923 = vadd.f32 %v4643, %v4922
  %v4924 = vpop.f32.mrb[0].mxu0
  %4925 = vmatprep.mubr.bf16.mxu0 %v4487
  %4926 = vmatmul.mubr.bf16.gmra.mrb[0].mxu0 %v4290
  %v4927 = vpop.f32.mrb[0].mxu0
  %v4928 = vadd.f32 %v4643, %v4927
  %v4929 = vpop.f32.mrb[0].mxu0
  %v4930 = vpop.f32.mrb[0].mxu0
  %v4931 = vadd.f32 %v4643, %v4930
  %v4932 = vpop.f32.mrb[0].mxu0
  %4933 = vdwg.mxu0
  %4934 = vmatprep.subr.bf16.mxu0 0
  %4935 = vmatpush1.bf16.msra.mxu0 %v3536
  %4936 = vmatprep.subr.bf16.mxu0 0
  %4937 = vmatpush1.bf16.msra.mxu0 %v3537
  %4938 = vmatprep.subr.bf16.mxu0 0
  %4939 = vmatpush1.bf16.msra.mxu0 %v3538
  %4940 = vmatprep.subr.bf16.mxu0 0
  %4941 = vmatpush1.bf16.msra.mxu0 %v3539
  %4942 = vmatprep.subr.bf16.mxu0 0
  %4943 = vmatpush1.bf16.msra.mxu0 %v3540
  %4944 = vmatprep.subr.bf16.mxu0 0
  %4945 = vmatpush1.bf16.msra.mxu0 %v3541
  %4946 = vmatprep.subr.bf16.mxu0 0
  %4947 = vmatpush1.bf16.msra.mxu0 %v3542
  %4948 = vmatprep.subr.bf16.mxu0 0
  %4949 = vmatpush1.bf16.msra.mxu0 %v3543
  %4950 = vmatprep.subr.bf16.mxu0 0
  %4951 = vmatpush1.bf16.msra.mxu0 %v3544
  %4952 = vmatprep.subr.bf16.mxu0 0
  %4953 = vmatpush1.bf16.msra.mxu0 %v3545
  %4954 = vmatprep.subr.bf16.mxu0 0
  %4955 = vmatpush1.bf16.msra.mxu0 %v3546
  %4956 = vmatprep.subr.bf16.mxu0 0
  %4957 = vmatpush1.bf16.msra.mxu0 %v3547
  %4958 = vmatprep.subr.bf16.mxu0 0
  %4959 = vmatpush1.bf16.msra.mxu0 %v3548
  %4960 = vmatprep.subr.bf16.mxu0 0
  %4961 = vmatpush1.bf16.msra.mxu0 %v3549
  %4962 = vmatprep.subr.bf16.mxu0 0
  %4963 = vmatpush1.bf16.msra.mxu0 %v3550
  %4964 = vmatprep.subr.bf16.mxu0 0
  %4965 = vmatpush1.bf16.msra.mxu0 %v3551
  %4966 = vmatprep.mubr.bf16.mxu0 %v3882
  %4967 = vmatmul.mubr.bf16.gmra.mrb[0].mxu0 %v4160
  %v4968 = vpop.f32.mrb[0].mxu0
  %v4969 = vadd.f32 %v4680, %v4968
  %v4970 = vpop.f32.mrb[0].mxu0
  %v4971 = vpop.f32.mrb[0].mxu0
  %v4972 = vadd.f32 %v4683, %v4971
  %v4973 = vpop.f32.mrb[0].mxu0
  %4974 = vmatprep.mubr.bf16.mxu0 %v3884
  %4975 = vmatmul.mubr.bf16.gmra.mrb[0].mxu0 %v4163
  %v4976 = vpop.f32.mrb[0].mxu0
  %v4977 = vadd.f32 %v4688, %v4976
  %v4978 = vpop.f32.mrb[0].mxu0
  %v4979 = vpop.f32.mrb[0].mxu0
  %v4980 = vadd.f32 %v4691, %v4979
  %v4981 = vpop.f32.mrb[0].mxu0
  %4982 = vmatprep.mubr.bf16.mxu0 %v3886
  %4983 = vmatmul.mubr.bf16.gmra.mrb[0].mxu0 %v4166
  %v4984 = vpop.f32.mrb[0].mxu0
  %v4985 = vadd.f32 %v4696, %v4984
  %v4986 = vpop.f32.mrb[0].mxu0
  %v4987 = vpop.f32.mrb[0].mxu0
  %v4988 = vadd.f32 %v4699, %v4987
  %v4989 = vpop.f32.mrb[0].mxu0
  %4990 = vmatprep.mubr.bf16.mxu0 %v3888
  %4991 = vmatmul.mubr.bf16.gmra.mrb[0].mxu0 %v4169
  %v4992 = vpop.f32.mrb[0].mxu0
  %v4993 = vadd.f32 %v4704, %v4992
  %v4994 = vpop.f32.mrb[0].mxu0
  %v4995 = vpop.f32.mrb[0].mxu0
  %v4996 = vadd.f32 %v4707, %v4995
  %v4997 = vpop.f32.mrb[0].mxu0
  %4998 = vmatprep.mubr.bf16.mxu0 %v3890
  %4999 = vmatmul.mubr.bf16.gmra.mrb[0].mxu0 %v4172
  %v5000 = vpop.f32.mrb[0].mxu0
  %v5001 = vadd.f32 %v4712, %v5000
  %v5002 = vpop.f32.mrb[0].mxu0
  %v5003 = vpop.f32.mrb[0].mxu0
  %v5004 = vadd.f32 %v4715, %v5003
  %v5005 = vpop.f32.mrb[0].mxu0
  %5006 = vmatprep.mubr.bf16.mxu0 %v3892
  %5007 = vmatmul.mubr.bf16.gmra.mrb[0].mxu0 %v4175
  %v5008 = vpop.f32.mrb[0].mxu0
  %v5009 = vadd.f32 %v4720, %v5008
  %v5010 = vpop.f32.mrb[0].mxu0
  %v5011 = vpop.f32.mrb[0].mxu0
  %v5012 = vadd.f32 %v4723, %v5011
  %v5013 = vpop.f32.mrb[0].mxu0
  %5014 = vmatprep.mubr.bf16.mxu0 %v3894
  %5015 = vmatmul.mubr.bf16.gmra.mrb[0].mxu0 %v4178
  %v5016 = vpop.f32.mrb[0].mxu0
  %v5017 = vadd.f32 %v4728, %v5016
  %v5018 = vpop.f32.mrb[0].mxu0
  %v5019 = vpop.f32.mrb[0].mxu0
  %v5020 = vadd.f32 %v4731, %v5019
  %v5021 = vpop.f32.mrb[0].mxu0
  %5022 = vmatprep.mubr.bf16.mxu0 %v3896
  %5023 = vmatmul.mubr.bf16.gmra.mrb[0].mxu0 %v4181
  %v5024 = vpop.f32.mrb[0].mxu0
  %v5025 = vadd.f32 %v4736, %v5024
  %v5026 = vpop.f32.mrb[0].mxu0
  %v5027 = vpop.f32.mrb[0].mxu0
  %v5028 = vadd.f32 %v4739, %v5027
  %v5029 = vpop.f32.mrb[0].mxu0
  %5030 = vmatprep.mubr.bf16.mxu0 %v3898
  %5031 = vmatmul.mubr.bf16.gmra.mrb[0].mxu0 %v4184
  %v5032 = vpop.f32.mrb[0].mxu0
  %v5033 = vadd.f32 %v4744, %v5032
  %v5034 = vpop.f32.mrb[0].mxu0
  %v5035 = vpop.f32.mrb[0].mxu0
  %v5036 = vadd.f32 %v4747, %v5035
  %v5037 = vpop.f32.mrb[0].mxu0
  %5038 = vmatprep.mubr.bf16.mxu0 %v3900
  %5039 = vmatmul.mubr.bf16.gmra.mrb[0].mxu0 %v4187
  %v5040 = vpop.f32.mrb[0].mxu0
  %v5041 = vadd.f32 %v4752, %v5040
  %v5042 = vpop.f32.mrb[0].mxu0
  %v5043 = vpop.f32.mrb[0].mxu0
  %v5044 = vadd.f32 %v4755, %v5043
  %v5045 = vpop.f32.mrb[0].mxu0
  %5046 = vmatprep.mubr.bf16.mxu0 %v3902
  %5047 = vmatmul.mubr.bf16.gmra.mrb[0].mxu0 %v4190
  %v5048 = vpop.f32.mrb[0].mxu0
  %v5049 = vadd.f32 %v4760, %v5048
  %v5050 = vpop.f32.mrb[0].mxu0
  %v5051 = vpop.f32.mrb[0].mxu0
  %v5052 = vadd.f32 %v4763, %v5051
  %v5053 = vpop.f32.mrb[0].mxu0
  %5054 = vmatprep.mubr.bf16.mxu0 %v3904
  %5055 = vmatmul.mubr.bf16.gmra.mrb[0].mxu0 %v4193
  %v5056 = vpop.f32.mrb[0].mxu0
  %v5057 = vadd.f32 %v4768, %v5056
  %v5058 = vpop.f32.mrb[0].mxu0
  %v5059 = vpop.f32.mrb[0].mxu0
  %v5060 = vadd.f32 %v4771, %v5059
  %v5061 = vpop.f32.mrb[0].mxu0
  %5062 = vmatprep.mubr.bf16.mxu0 %v3906
  %5063 = vmatmul.mubr.bf16.gmra.mrb[0].mxu0 %v4196
  %v5064 = vpop.f32.mrb[0].mxu0
  %v5065 = vadd.f32 %v4776, %v5064
  %v5066 = vpop.f32.mrb[0].mxu0
  %v5067 = vpop.f32.mrb[0].mxu0
  %v5068 = vadd.f32 %v4779, %v5067
  %v5069 = vpop.f32.mrb[0].mxu0
  %5070 = vmatprep.mubr.bf16.mxu0 %v3908
  %5071 = vmatmul.mubr.bf16.gmra.mrb[0].mxu0 %v4199
  %v5072 = vpop.f32.mrb[0].mxu0
  %v5073 = vadd.f32 %v4784, %v5072
  %v5074 = vpop.f32.mrb[0].mxu0
  %v5075 = vpop.f32.mrb[0].mxu0
  %v5076 = vadd.f32 %v4787, %v5075
  %v5077 = vpop.f32.mrb[0].mxu0
  %5078 = vmatprep.mubr.bf16.mxu0 %v3910
  %5079 = vmatmul.mubr.bf16.gmra.mrb[0].mxu0 %v4202
  %v5080 = vpop.f32.mrb[0].mxu0
  %v5081 = vadd.f32 %v4792, %v5080
  %v5082 = vpop.f32.mrb[0].mxu0
  %v5083 = vpop.f32.mrb[0].mxu0
  %v5084 = vadd.f32 %v4795, %v5083
  %v5085 = vpop.f32.mrb[0].mxu0
  %5086 = vmatprep.mubr.bf16.mxu0 %v3912
  %5087 = vmatmul.mubr.bf16.gmra.mrb[0].mxu0 %v4205
  %v5088 = vpop.f32.mrb[0].mxu0
  %v5089 = vadd.f32 %v4800, %v5088
  %v5090 = vpop.f32.mrb[0].mxu0
  %v5091 = vpop.f32.mrb[0].mxu0
  %v5092 = vadd.f32 %v4803, %v5091
  %v5093 = vpop.f32.mrb[0].mxu0
  %5094 = vmatprep.mubr.bf16.mxu0 %v4262
  %5095 = vmatmul.mubr.bf16.gmra.mrb[0].mxu0 %v4538
  %v5096 = vpop.f32.mrb[0].mxu0
  %v5097 = vadd.f32 %v4808, %v5096
  %v5098 = vpop.f32.mrb[0].mxu0
  %v5099 = vpop.f32.mrb[0].mxu0
  %v5100 = vadd.f32 %v4811, %v5099
  %v5101 = vpop.f32.mrb[0].mxu0
  %5102 = vmatprep.mubr.bf16.mxu0 %v4264
  %5103 = vmatmul.mubr.bf16.gmra.mrb[0].mxu0 %v4541
  %v5104 = vpop.f32.mrb[0].mxu0
  %v5105 = vadd.f32 %v4816, %v5104
  %v5106 = vpop.f32.mrb[0].mxu0
  %v5107 = vpop.f32.mrb[0].mxu0
  %v5108 = vadd.f32 %v4819, %v5107
  %v5109 = vpop.f32.mrb[0].mxu0
  %5110 = vmatprep.mubr.bf16.mxu0 %v4266
  %5111 = vmatmul.mubr.bf16.gmra.mrb[0].mxu0 %v4544
  %v5112 = vpop.f32.mrb[0].mxu0
  %v5113 = vadd.f32 %v4824, %v5112
  %v5114 = vpop.f32.mrb[0].mxu0
  %v5115 = vpop.f32.mrb[0].mxu0
  %v5116 = vadd.f32 %v4827, %v5115
  %v5117 = vpop.f32.mrb[0].mxu0
  %5118 = vmatprep.mubr.bf16.mxu0 %v4268
  %5119 = vmatmul.mubr.bf16.gmra.mrb[0].mxu0 %v4547
  %v5120 = vpop.f32.mrb[0].mxu0
  %v5121 = vadd.f32 %v4832, %v5120
  %v5122 = vpop.f32.mrb[0].mxu0
  %v5123 = vpop.f32.mrb[0].mxu0
  %v5124 = vadd.f32 %v4835, %v5123
  %v5125 = vpop.f32.mrb[0].mxu0
  %5126 = vmatprep.mubr.bf16.mxu0 %v4270
  %5127 = vmatmul.mubr.bf16.gmra.mrb[0].mxu0 %v4550
  %v5128 = vpop.f32.mrb[0].mxu0
  %v5129 = vadd.f32 %v4840, %v5128
  %v5130 = vpop.f32.mrb[0].mxu0
  %v5131 = vpop.f32.mrb[0].mxu0
  %v5132 = vadd.f32 %v4843, %v5131
  %v5133 = vpop.f32.mrb[0].mxu0
  %5134 = vmatprep.mubr.bf16.mxu0 %v4272
  %5135 = vmatmul.mubr.bf16.gmra.mrb[0].mxu0 %v4553
  %v5136 = vpop.f32.mrb[0].mxu0
  %v5137 = vadd.f32 %v4848, %v5136
  %v5138 = vpop.f32.mrb[0].mxu0
  %v5139 = vpop.f32.mrb[0].mxu0
  %v5140 = vadd.f32 %v4851, %v5139
  %v5141 = vpop.f32.mrb[0].mxu0
  %5142 = vmatprep.mubr.bf16.mxu0 %v4274
  %5143 = vmatmul.mubr.bf16.gmra.mrb[0].mxu0 %v4556
  %v5144 = vpop.f32.mrb[0].mxu0
  %v5145 = vadd.f32 %v4856, %v5144
  %v5146 = vpop.f32.mrb[0].mxu0
  %v5147 = vpop.f32.mrb[0].mxu0
  %v5148 = vadd.f32 %v4859, %v5147
  %v5149 = vpop.f32.mrb[0].mxu0
  %5150 = vmatprep.mubr.bf16.mxu0 %v4276
  %5151 = vmatmul.mubr.bf16.gmra.mrb[0].mxu0 %v4559
  %v5152 = vpop.f32.mrb[0].mxu0
  %v5153 = vadd.f32 %v4864, %v5152
  %v5154 = vpop.f32.mrb[0].mxu0
  %v5155 = vpop.f32.mrb[0].mxu0
  %v5156 = vadd.f32 %v4867, %v5155
  %v5157 = vpop.f32.mrb[0].mxu0
  %5158 = vmatprep.mubr.bf16.mxu0 %v4278
  %5159 = vmatmul.mubr.bf16.gmra.mrb[0].mxu0 %v4562
  %v5160 = vpop.f32.mrb[0].mxu0
  %v5161 = vadd.f32 %v4872, %v5160
  %v5162 = vpop.f32.mrb[0].mxu0
  %v5163 = vpop.f32.mrb[0].mxu0
  %v5164 = vadd.f32 %v4875, %v5163
  %v5165 = vpop.f32.mrb[0].mxu0
  %5166 = vmatprep.mubr.bf16.mxu0 %v4280
  %5167 = vmatmul.mubr.bf16.gmra.mrb[0].mxu0 %v4565
  %v5168 = vpop.f32.mrb[0].mxu0
  %v5169 = vadd.f32 %v4880, %v5168
  %v5170 = vpop.f32.mrb[0].mxu0
  %v5171 = vpop.f32.mrb[0].mxu0
  %v5172 = vadd.f32 %v4883, %v5171
  %v5173 = vpop.f32.mrb[0].mxu0
  %5174 = vmatprep.mubr.bf16.mxu0 %v4282
  %5175 = vmatmul.mubr.bf16.gmra.mrb[0].mxu0 %v4568
  %v5176 = vpop.f32.mrb[0].mxu0
  %v5177 = vadd.f32 %v4888, %v5176
  %v5178 = vpop.f32.mrb[0].mxu0
  %v5179 = vpop.f32.mrb[0].mxu0
  %v5180 = vadd.f32 %v4891, %v5179
  %v5181 = vpop.f32.mrb[0].mxu0
  %5182 = vmatprep.mubr.bf16.mxu0 %v4284
  %5183 = vmatmul.mubr.bf16.gmra.mrb[0].mxu0 %v4571
  %v5184 = vpop.f32.mrb[0].mxu0
  %v5185 = vadd.f32 %v4896, %v5184
  %v5186 = vpop.f32.mrb[0].mxu0
  %v5187 = vpop.f32.mrb[0].mxu0
  %v5188 = vadd.f32 %v4899, %v5187
  %v5189 = vpop.f32.mrb[0].mxu0
  %5190 = vmatprep.mubr.bf16.mxu0 %v4286
  %5191 = vmatmul.mubr.bf16.gmra.mrb[0].mxu0 %v4574
  %v5192 = vpop.f32.mrb[0].mxu0
  %v5193 = vadd.f32 %v4904, %v5192
  %v5194 = vpop.f32.mrb[0].mxu0
  %v5195 = vpop.f32.mrb[0].mxu0
  %v5196 = vadd.f32 %v4907, %v5195
  %v5197 = vpop.f32.mrb[0].mxu0
  %5198 = vmatprep.mubr.bf16.mxu0 %v4288
  %5199 = vmatmul.mubr.bf16.gmra.mrb[0].mxu0 %v4577
  %v5200 = vpop.f32.mrb[0].mxu0
  %v5201 = vadd.f32 %v4912, %v5200
  %v5202 = vpop.f32.mrb[0].mxu0
  %v5203 = vpop.f32.mrb[0].mxu0
  %v5204 = vadd.f32 %v4915, %v5203
  %v5205 = vpop.f32.mrb[0].mxu0
  %5206 = vmatprep.mubr.bf16.mxu0 %v4290
  %5207 = vmatmul.mubr.bf16.gmra.mrb[0].mxu0 %v4580
  %v5208 = vpop.f32.mrb[0].mxu0
  %v5209 = vadd.f32 %v4920, %v5208
  %v5210 = vpop.f32.mrb[0].mxu0
  %v5211 = vpop.f32.mrb[0].mxu0
  %v5212 = vadd.f32 %v4923, %v5211
  %v5213 = vpop.f32.mrb[0].mxu0
  %5214 = vmatprep.mubr.bf16.mxu0 %v4292
  %5215 = vmatmul.mubr.bf16.gmra.mrb[0].mxu0 %v4583
  %v5216 = vpop.f32.mrb[0].mxu0
  %v5217 = vadd.f32 %v4928, %v5216
  %v5218 = vpop.f32.mrb[0].mxu0
  %v5219 = vpop.f32.mrb[0].mxu0
  %v5220 = vadd.f32 %v4931, %v5219
  %v5221 = vpop.f32.mrb[0].mxu0
  %5222 = vdwg.mxu0
  %5223 = vmatprep.subr.bf16.mxu0 0
  %5224 = vmatpush1.bf16.msra.mxu0 %v3552
  %5225 = vmatprep.subr.bf16.mxu0 0
  %5226 = vmatpush1.bf16.msra.mxu0 %v3553
  %5227 = vmatprep.subr.bf16.mxu0 0
  %5228 = vmatpush1.bf16.msra.mxu0 %v3554
  %5229 = vmatprep.subr.bf16.mxu0 0
  %5230 = vmatpush1.bf16.msra.mxu0 %v3555
  %5231 = vmatprep.subr.bf16.mxu0 0
  %5232 = vmatpush1.bf16.msra.mxu0 %v3556
  %5233 = vmatprep.subr.bf16.mxu0 0
  %5234 = vmatpush1.bf16.msra.mxu0 %v3557
  %5235 = vmatprep.subr.bf16.mxu0 0
  %5236 = vmatpush1.bf16.msra.mxu0 %v3558
  %5237 = vmatprep.subr.bf16.mxu0 0
  %5238 = vmatpush1.bf16.msra.mxu0 %v3559
  %5239 = vmatprep.subr.bf16.mxu0 0
  %5240 = vmatpush1.bf16.msra.mxu0 %v3560
  %5241 = vmatprep.subr.bf16.mxu0 0
  %5242 = vmatpush1.bf16.msra.mxu0 %v3561
  %5243 = vmatprep.subr.bf16.mxu0 0
  %5244 = vmatpush1.bf16.msra.mxu0 %v3562
  %5245 = vmatprep.subr.bf16.mxu0 0
  %5246 = vmatpush1.bf16.msra.mxu0 %v3563
  %5247 = vmatprep.subr.bf16.mxu0 0
  %5248 = vmatpush1.bf16.msra.mxu0 %v3564
  %5249 = vmatprep.subr.bf16.mxu0 0
  %5250 = vmatpush1.bf16.msra.mxu0 %v3565
  %5251 = vmatprep.subr.bf16.mxu0 0
  %5252 = vmatpush1.bf16.msra.mxu0 %v3566
  %5253 = vmatprep.subr.bf16.mxu0 0
  %5254 = vmatpush1.bf16.msra.mxu0 %v3567
  %5255 = vmatprep.mubr.bf16.mxu0 %v4163
  %5256 = vmatmul.mubr.bf16.gmra.mrb[0].mxu0 %v3940
  %v5257 = vpop.f32.mrb[0].mxu0
  %v5258 = vadd.f32 %v4969, %v5257
  %v5259 = vpop.f32.mrb[0].mxu0
  %v5260 = vpop.f32.mrb[0].mxu0
  %v5261 = vadd.f32 %v4972, %v5260
  %v5262 = vpop.f32.mrb[0].mxu0
  %5263 = vmatprep.mubr.bf16.mxu0 %v4166
  %5264 = vmatmul.mubr.bf16.gmra.mrb[0].mxu0 %v3952
  %v5265 = vpop.f32.mrb[0].mxu0
  %v5266 = vadd.f32 %v4977, %v5265
  %v5267 = vpop.f32.mrb[0].mxu0
  %v5268 = vpop.f32.mrb[0].mxu0
  %v5269 = vadd.f32 %v4980, %v5268
  %v5270 = vpop.f32.mrb[0].mxu0
  %5271 = vmatprep.mubr.bf16.mxu0 %v4169
  %5272 = vmatmul.mubr.bf16.gmra.mrb[0].mxu0 %v3964
  %v5273 = vpop.f32.mrb[0].mxu0
  %v5274 = vadd.f32 %v4985, %v5273
  %v5275 = vpop.f32.mrb[0].mxu0
  %v5276 = vpop.f32.mrb[0].mxu0
  %v5277 = vadd.f32 %v4988, %v5276
  %v5278 = vpop.f32.mrb[0].mxu0
  %5279 = vmatprep.mubr.bf16.mxu0 %v4172
  %5280 = vmatmul.mubr.bf16.gmra.mrb[0].mxu0 %v3976
  %v5281 = vpop.f32.mrb[0].mxu0
  %v5282 = vadd.f32 %v4993, %v5281
  %v5283 = vpop.f32.mrb[0].mxu0
  %v5284 = vpop.f32.mrb[0].mxu0
  %v5285 = vadd.f32 %v4996, %v5284
  %v5286 = vpop.f32.mrb[0].mxu0
  %5287 = vmatprep.mubr.bf16.mxu0 %v4175
  %5288 = vmatmul.mubr.bf16.gmra.mrb[0].mxu0 %v3988
  %v5289 = vpop.f32.mrb[0].mxu0
  %v5290 = vadd.f32 %v5001, %v5289
  %v5291 = vpop.f32.mrb[0].mxu0
  %v5292 = vpop.f32.mrb[0].mxu0
  %v5293 = vadd.f32 %v5004, %v5292
  %v5294 = vpop.f32.mrb[0].mxu0
  %5295 = vmatprep.mubr.bf16.mxu0 %v4178
  %5296 = vmatmul.mubr.bf16.gmra.mrb[0].mxu0 %v4000
  %v5297 = vpop.f32.mrb[0].mxu0
  %v5298 = vadd.f32 %v5009, %v5297
  %v5299 = vpop.f32.mrb[0].mxu0
  %v5300 = vpop.f32.mrb[0].mxu0
  %v5301 = vadd.f32 %v5012, %v5300
  %v5302 = vpop.f32.mrb[0].mxu0
  %5303 = vmatprep.mubr.bf16.mxu0 %v4181
  %5304 = vmatmul.mubr.bf16.gmra.mrb[0].mxu0 %v4012
  %v5305 = vpop.f32.mrb[0].mxu0
  %v5306 = vadd.f32 %v5017, %v5305
  %v5307 = vpop.f32.mrb[0].mxu0
  %v5308 = vpop.f32.mrb[0].mxu0
  %v5309 = vadd.f32 %v5020, %v5308
  %v5310 = vpop.f32.mrb[0].mxu0
  %5311 = vmatprep.mubr.bf16.mxu0 %v4184
  %5312 = vmatmul.mubr.bf16.gmra.mrb[0].mxu0 %v4024
  %v5313 = vpop.f32.mrb[0].mxu0
  %v5314 = vadd.f32 %v5025, %v5313
  %v5315 = vpop.f32.mrb[0].mxu0
  %v5316 = vpop.f32.mrb[0].mxu0
  %v5317 = vadd.f32 %v5028, %v5316
  %v5318 = vpop.f32.mrb[0].mxu0
  %5319 = vmatprep.mubr.bf16.mxu0 %v4187
  %5320 = vmatmul.mubr.bf16.gmra.mrb[0].mxu0 %v4036
  %v5321 = vpop.f32.mrb[0].mxu0
  %v5322 = vadd.f32 %v5033, %v5321
  %v5323 = vpop.f32.mrb[0].mxu0
  %v5324 = vpop.f32.mrb[0].mxu0
  %v5325 = vadd.f32 %v5036, %v5324
  %v5326 = vpop.f32.mrb[0].mxu0
  %5327 = vmatprep.mubr.bf16.mxu0 %v4190
  %5328 = vmatmul.mubr.bf16.gmra.mrb[0].mxu0 %v4048
  %v5329 = vpop.f32.mrb[0].mxu0
  %v5330 = vadd.f32 %v5041, %v5329
  %v5331 = vpop.f32.mrb[0].mxu0
  %v5332 = vpop.f32.mrb[0].mxu0
  %v5333 = vadd.f32 %v5044, %v5332
  %v5334 = vpop.f32.mrb[0].mxu0
  %5335 = vmatprep.mubr.bf16.mxu0 %v4193
  %5336 = vmatmul.mubr.bf16.gmra.mrb[0].mxu0 %v4060
  %v5337 = vpop.f32.mrb[0].mxu0
  %v5338 = vadd.f32 %v5049, %v5337
  %v5339 = vpop.f32.mrb[0].mxu0
  %v5340 = vpop.f32.mrb[0].mxu0
  %v5341 = vadd.f32 %v5052, %v5340
  %v5342 = vpop.f32.mrb[0].mxu0
  %5343 = vmatprep.mubr.bf16.mxu0 %v4196
  %5344 = vmatmul.mubr.bf16.gmra.mrb[0].mxu0 %v4072
  %v5345 = vpop.f32.mrb[0].mxu0
  %v5346 = vadd.f32 %v5057, %v5345
  %v5347 = vpop.f32.mrb[0].mxu0
  %v5348 = vpop.f32.mrb[0].mxu0
  %v5349 = vadd.f32 %v5060, %v5348
  %v5350 = vpop.f32.mrb[0].mxu0
  %5351 = vmatprep.mubr.bf16.mxu0 %v4199
  %5352 = vmatmul.mubr.bf16.gmra.mrb[0].mxu0 %v4084
  %v5353 = vpop.f32.mrb[0].mxu0
  %v5354 = vadd.f32 %v5065, %v5353
  %v5355 = vpop.f32.mrb[0].mxu0
  %v5356 = vpop.f32.mrb[0].mxu0
  %v5357 = vadd.f32 %v5068, %v5356
  %v5358 = vpop.f32.mrb[0].mxu0
  %5359 = vmatprep.mubr.bf16.mxu0 %v4202
  %5360 = vmatmul.mubr.bf16.gmra.mrb[0].mxu0 %v4096
  %v5361 = vpop.f32.mrb[0].mxu0
  %v5362 = vadd.f32 %v5073, %v5361
  %v5363 = vpop.f32.mrb[0].mxu0
  %v5364 = vpop.f32.mrb[0].mxu0
  %v5365 = vadd.f32 %v5076, %v5364
  %v5366 = vpop.f32.mrb[0].mxu0
  %5367 = vmatprep.mubr.bf16.mxu0 %v4205
  %5368 = vmatmul.mubr.bf16.gmra.mrb[0].mxu0 %v4108
  %v5369 = vpop.f32.mrb[0].mxu0
  %v5370 = vadd.f32 %v5081, %v5369
  %v5371 = vpop.f32.mrb[0].mxu0
  %v5372 = vpop.f32.mrb[0].mxu0
  %v5373 = vadd.f32 %v5084, %v5372
  %v5374 = vpop.f32.mrb[0].mxu0
  %5375 = vmatprep.mubr.bf16.mxu0 %v4239
  %5376 = vmatmul.mubr.bf16.gmra.mrb[0].mxu0 %v4233
  %v5377 = vpop.f32.mrb[0].mxu0
  %v5378 = vadd.f32 %v5089, %v5377
  %v5379 = vpop.f32.mrb[0].mxu0
  %v5380 = vpop.f32.mrb[0].mxu0
  %v5381 = vadd.f32 %v5092, %v5380
  %v5382 = vpop.f32.mrb[0].mxu0
  %5383 = vmatprep.mubr.bf16.mxu0 %v4541
  %5384 = vmatmul.mubr.bf16.gmra.mrb[0].mxu0 %v4319
  %v5385 = vpop.f32.mrb[0].mxu0
  %v5386 = vadd.f32 %v5097, %v5385
  %v5387 = vpop.f32.mrb[0].mxu0
  %v5388 = vpop.f32.mrb[0].mxu0
  %v5389 = vadd.f32 %v5100, %v5388
  %v5390 = vpop.f32.mrb[0].mxu0
  %5391 = vmatprep.mubr.bf16.mxu0 %v4544
  %5392 = vmatmul.mubr.bf16.gmra.mrb[0].mxu0 %v4331
  %v5393 = vpop.f32.mrb[0].mxu0
  %v5394 = vadd.f32 %v5105, %v5393
  %v5395 = vpop.f32.mrb[0].mxu0
  %v5396 = vpop.f32.mrb[0].mxu0
  %v5397 = vadd.f32 %v5108, %v5396
  %v5398 = vpop.f32.mrb[0].mxu0
  %5399 = vmatprep.mubr.bf16.mxu0 %v4547
  %5400 = vmatmul.mubr.bf16.gmra.mrb[0].mxu0 %v4343
  %v5401 = vpop.f32.mrb[0].mxu0
  %v5402 = vadd.f32 %v5113, %v5401
  %v5403 = vpop.f32.mrb[0].mxu0
  %v5404 = vpop.f32.mrb[0].mxu0
  %v5405 = vadd.f32 %v5116, %v5404
  %v5406 = vpop.f32.mrb[0].mxu0
  %5407 = vmatprep.mubr.bf16.mxu0 %v4550
  %5408 = vmatmul.mubr.bf16.gmra.mrb[0].mxu0 %v4355
  %v5409 = vpop.f32.mrb[0].mxu0
  %v5410 = vadd.f32 %v5121, %v5409
  %v5411 = vpop.f32.mrb[0].mxu0
  %v5412 = vpop.f32.mrb[0].mxu0
  %v5413 = vadd.f32 %v5124, %v5412
  %v5414 = vpop.f32.mrb[0].mxu0
  %5415 = vmatprep.mubr.bf16.mxu0 %v4553
  %5416 = vmatmul.mubr.bf16.gmra.mrb[0].mxu0 %v4367
  %v5417 = vpop.f32.mrb[0].mxu0
  %v5418 = vadd.f32 %v5129, %v5417
  %v5419 = vpop.f32.mrb[0].mxu0
  %v5420 = vpop.f32.mrb[0].mxu0
  %v5421 = vadd.f32 %v5132, %v5420
  %v5422 = vpop.f32.mrb[0].mxu0
  %5423 = vmatprep.mubr.bf16.mxu0 %v4556
  %5424 = vmatmul.mubr.bf16.gmra.mrb[0].mxu0 %v4379
  %v5425 = vpop.f32.mrb[0].mxu0
  %v5426 = vadd.f32 %v5137, %v5425
  %v5427 = vpop.f32.mrb[0].mxu0
  %v5428 = vpop.f32.mrb[0].mxu0
  %v5429 = vadd.f32 %v5140, %v5428
  %v5430 = vpop.f32.mrb[0].mxu0
  %5431 = vmatprep.mubr.bf16.mxu0 %v4559
  %5432 = vmatmul.mubr.bf16.gmra.mrb[0].mxu0 %v4391
  %v5433 = vpop.f32.mrb[0].mxu0
  %v5434 = vadd.f32 %v5145, %v5433
  %v5435 = vpop.f32.mrb[0].mxu0
  %v5436 = vpop.f32.mrb[0].mxu0
  %v5437 = vadd.f32 %v5148, %v5436
  %v5438 = vpop.f32.mrb[0].mxu0
  %5439 = vmatprep.mubr.bf16.mxu0 %v4562
  %5440 = vmatmul.mubr.bf16.gmra.mrb[0].mxu0 %v4403
  %v5441 = vpop.f32.mrb[0].mxu0
  %v5442 = vadd.f32 %v5153, %v5441
  %v5443 = vpop.f32.mrb[0].mxu0
  %v5444 = vpop.f32.mrb[0].mxu0
  %v5445 = vadd.f32 %v5156, %v5444
  %v5446 = vpop.f32.mrb[0].mxu0
  %5447 = vmatprep.mubr.bf16.mxu0 %v4565
  %5448 = vmatmul.mubr.bf16.gmra.mrb[0].mxu0 %v4415
  %v5449 = vpop.f32.mrb[0].mxu0
  %v5450 = vadd.f32 %v5161, %v5449
  %v5451 = vpop.f32.mrb[0].mxu0
  %v5452 = vpop.f32.mrb[0].mxu0
  %v5453 = vadd.f32 %v5164, %v5452
  %v5454 = vpop.f32.mrb[0].mxu0
  %5455 = vmatprep.mubr.bf16.mxu0 %v4568
  %5456 = vmatmul.mubr.bf16.gmra.mrb[0].mxu0 %v4427
  %v5457 = vpop.f32.mrb[0].mxu0
  %v5458 = vadd.f32 %v5169, %v5457
  %v5459 = vpop.f32.mrb[0].mxu0
  %v5460 = vpop.f32.mrb[0].mxu0
  %v5461 = vadd.f32 %v5172, %v5460
  %v5462 = vpop.f32.mrb[0].mxu0
  %5463 = vmatprep.mubr.bf16.mxu0 %v4571
  %5464 = vmatmul.mubr.bf16.gmra.mrb[0].mxu0 %v4439
  %v5465 = vpop.f32.mrb[0].mxu0
  %v5466 = vadd.f32 %v5177, %v5465
  %v5467 = vpop.f32.mrb[0].mxu0
  %v5468 = vpop.f32.mrb[0].mxu0
  %v5469 = vadd.f32 %v5180, %v5468
  %v5470 = vpop.f32.mrb[0].mxu0
  %5471 = vmatprep.mubr.bf16.mxu0 %v4574
  %5472 = vmatmul.mubr.bf16.gmra.mrb[0].mxu0 %v4451
  %v5473 = vpop.f32.mrb[0].mxu0
  %v5474 = vadd.f32 %v5185, %v5473
  %v5475 = vpop.f32.mrb[0].mxu0
  %v5476 = vpop.f32.mrb[0].mxu0
  %v5477 = vadd.f32 %v5188, %v5476
  %v5478 = vpop.f32.mrb[0].mxu0
  %5479 = vmatprep.mubr.bf16.mxu0 %v4577
  %5480 = vmatmul.mubr.bf16.gmra.mrb[0].mxu0 %v4463
  %v5481 = vpop.f32.mrb[0].mxu0
  %v5482 = vadd.f32 %v5193, %v5481
  %v5483 = vpop.f32.mrb[0].mxu0
  %v5484 = vpop.f32.mrb[0].mxu0
  %v5485 = vadd.f32 %v5196, %v5484
  %v5486 = vpop.f32.mrb[0].mxu0
  %5487 = vmatprep.mubr.bf16.mxu0 %v4580
  %5488 = vmatmul.mubr.bf16.gmra.mrb[0].mxu0 %v4475
  %v5489 = vpop.f32.mrb[0].mxu0
  %v5490 = vadd.f32 %v5201, %v5489
  %v5491 = vpop.f32.mrb[0].mxu0
  %v5492 = vpop.f32.mrb[0].mxu0
  %v5493 = vadd.f32 %v5204, %v5492
  %v5494 = vpop.f32.mrb[0].mxu0
  %5495 = vmatprep.mubr.bf16.mxu0 %v4583
  %5496 = vmatmul.mubr.bf16.gmra.mrb[0].mxu0 %v4487
  %v5497 = vpop.f32.mrb[0].mxu0
  %v5498 = vadd.f32 %v5209, %v5497
  %v5499 = vpop.f32.mrb[0].mxu0
  %v5500 = vpop.f32.mrb[0].mxu0
  %v5501 = vadd.f32 %v5212, %v5500
  %v5502 = vpop.f32.mrb[0].mxu0
  %5503 = vmatprep.mubr.bf16.mxu0 %v4617
  %5504 = vmatmul.mubr.bf16.gmra.mrb[0].mxu0 %v4611
  %v5505 = vpop.f32.mrb[0].mxu0
  %v5506 = vadd.f32 %v5217, %v5505
  %v5507 = vpop.f32.mrb[0].mxu0
  %v5508 = vpop.f32.mrb[0].mxu0
  %v5509 = vadd.f32 %v5220, %v5508
  %v5510 = vpop.f32.mrb[0].mxu0
  %5511 = vdwg.mxu0
  %5512 = vmatprep.subr.bf16.mxu0 0
  %5513 = vmatpush1.bf16.msra.mxu0 %v3568
  %5514 = vmatprep.subr.bf16.mxu0 0
  %5515 = vmatpush1.bf16.msra.mxu0 %v3569
  %5516 = vmatprep.subr.bf16.mxu0 0
  %5517 = vmatpush1.bf16.msra.mxu0 %v3570
  %5518 = vmatprep.subr.bf16.mxu0 0
  %5519 = vmatpush1.bf16.msra.mxu0 %v3571
  %5520 = vmatprep.subr.bf16.mxu0 0
  %5521 = vmatpush1.bf16.msra.mxu0 %v3572
  %5522 = vmatprep.subr.bf16.mxu0 0
  %5523 = vmatpush1.bf16.msra.mxu0 %v3573
  %5524 = vmatprep.subr.bf16.mxu0 0
  %5525 = vmatpush1.bf16.msra.mxu0 %v3574
  %5526 = vmatprep.subr.bf16.mxu0 0
  %5527 = vmatpush1.bf16.msra.mxu0 %v3575
  %5528 = vmatprep.subr.bf16.mxu0 0
  %5529 = vmatpush1.bf16.msra.mxu0 %v3576
  %5530 = vmatprep.subr.bf16.mxu0 0
  %5531 = vmatpush1.bf16.msra.mxu0 %v3577
  %5532 = vmatprep.subr.bf16.mxu0 0
  %5533 = vmatpush1.bf16.msra.mxu0 %v3578
  %5534 = vmatprep.subr.bf16.mxu0 0
  %5535 = vmatpush1.bf16.msra.mxu0 %v3579
  %5536 = vmatprep.subr.bf16.mxu0 0
  %5537 = vmatpush1.bf16.msra.mxu0 %v3580
  %5538 = vmatprep.subr.bf16.mxu0 0
  %5539 = vmatpush1.bf16.msra.mxu0 %v3581
  %5540 = vmatprep.subr.bf16.mxu0 0
  %5541 = vmatpush1.bf16.msra.mxu0 %v3582
  %5542 = vmatprep.subr.bf16.mxu0 0
  %5543 = vmatpush1.bf16.msra.mxu0 %v3583
  %5544 = vmatprep.mubr.bf16.mxu0 %v3952
  %5545 = vmatmul.mubr.bf16.gmra.mrb[0].mxu0 %v3884
  %v5546 = vpop.f32.mrb[0].mxu0
  %v5547 = vadd.f32 %v5258, %v5546
  %v5548 = vpop.f32.mrb[0].mxu0
  %v5549 = vpop.f32.mrb[0].mxu0
  %v5550 = vadd.f32 %v5261, %v5549
  %v5551 = vpop.f32.mrb[0].mxu0
  %5552 = vmatprep.mubr.bf16.mxu0 %v3964
  %5553 = vmatmul.mubr.bf16.gmra.mrb[0].mxu0 %v3886
  %v5554 = vpop.f32.mrb[0].mxu0
  %v5555 = vadd.f32 %v5266, %v5554
  %v5556 = vpop.f32.mrb[0].mxu0
  %v5557 = vpop.f32.mrb[0].mxu0
  %v5558 = vadd.f32 %v5269, %v5557
  %v5559 = vpop.f32.mrb[0].mxu0
  %5560 = vmatprep.mubr.bf16.mxu0 %v3976
  %5561 = vmatmul.mubr.bf16.gmra.mrb[0].mxu0 %v3888
  %v5562 = vpop.f32.mrb[0].mxu0
  %v5563 = vadd.f32 %v5274, %v5562
  %v5564 = vpop.f32.mrb[0].mxu0
  %v5565 = vpop.f32.mrb[0].mxu0
  %v5566 = vadd.f32 %v5277, %v5565
  %v5567 = vpop.f32.mrb[0].mxu0
  %5568 = vmatprep.mubr.bf16.mxu0 %v3988
  %5569 = vmatmul.mubr.bf16.gmra.mrb[0].mxu0 %v3890
  %v5570 = vpop.f32.mrb[0].mxu0
  %v5571 = vadd.f32 %v5282, %v5570
  %v5572 = vpop.f32.mrb[0].mxu0
  %v5573 = vpop.f32.mrb[0].mxu0
  %v5574 = vadd.f32 %v5285, %v5573
  %v5575 = vpop.f32.mrb[0].mxu0
  %5576 = vmatprep.mubr.bf16.mxu0 %v4000
  %5577 = vmatmul.mubr.bf16.gmra.mrb[0].mxu0 %v3892
  %v5578 = vpop.f32.mrb[0].mxu0
  %v5579 = vadd.f32 %v5290, %v5578
  %v5580 = vpop.f32.mrb[0].mxu0
  %v5581 = vpop.f32.mrb[0].mxu0
  %v5582 = vadd.f32 %v5293, %v5581
  %v5583 = vpop.f32.mrb[0].mxu0
  %5584 = vmatprep.mubr.bf16.mxu0 %v4012
  %5585 = vmatmul.mubr.bf16.gmra.mrb[0].mxu0 %v3894
  %v5586 = vpop.f32.mrb[0].mxu0
  %v5587 = vadd.f32 %v5298, %v5586
  %v5588 = vpop.f32.mrb[0].mxu0
  %v5589 = vpop.f32.mrb[0].mxu0
  %v5590 = vadd.f32 %v5301, %v5589
  %v5591 = vpop.f32.mrb[0].mxu0
  %5592 = vmatprep.mubr.bf16.mxu0 %v4024
  %5593 = vmatmul.mubr.bf16.gmra.mrb[0].mxu0 %v3896
  %v5594 = vpop.f32.mrb[0].mxu0
  %v5595 = vadd.f32 %v5306, %v5594
  %v5596 = vpop.f32.mrb[0].mxu0
  %v5597 = vpop.f32.mrb[0].mxu0
  %v5598 = vadd.f32 %v5309, %v5597
  %v5599 = vpop.f32.mrb[0].mxu0
  %5600 = vmatprep.mubr.bf16.mxu0 %v4036
  %5601 = vmatmul.mubr.bf16.gmra.mrb[0].mxu0 %v3898
  %v5602 = vpop.f32.mrb[0].mxu0
  %v5603 = vadd.f32 %v5314, %v5602
  %v5604 = vpop.f32.mrb[0].mxu0
  %v5605 = vpop.f32.mrb[0].mxu0
  %v5606 = vadd.f32 %v5317, %v5605
  %v5607 = vpop.f32.mrb[0].mxu0
  %5608 = vmatprep.mubr.bf16.mxu0 %v4048
  %5609 = vmatmul.mubr.bf16.gmra.mrb[0].mxu0 %v3900
  %v5610 = vpop.f32.mrb[0].mxu0
  %v5611 = vadd.f32 %v5322, %v5610
  %v5612 = vpop.f32.mrb[0].mxu0
  %v5613 = vpop.f32.mrb[0].mxu0
  %v5614 = vadd.f32 %v5325, %v5613
  %v5615 = vpop.f32.mrb[0].mxu0
  %5616 = vmatprep.mubr.bf16.mxu0 %v4060
  %5617 = vmatmul.mubr.bf16.gmra.mrb[0].mxu0 %v3902
  %v5618 = vpop.f32.mrb[0].mxu0
  %v5619 = vadd.f32 %v5330, %v5618
  %v5620 = vpop.f32.mrb[0].mxu0
  %v5621 = vpop.f32.mrb[0].mxu0
  %v5622 = vadd.f32 %v5333, %v5621
  %v5623 = vpop.f32.mrb[0].mxu0
  %5624 = vmatprep.mubr.bf16.mxu0 %v4072
  %5625 = vmatmul.mubr.bf16.gmra.mrb[0].mxu0 %v3904
  %v5626 = vpop.f32.mrb[0].mxu0
  %v5627 = vadd.f32 %v5338, %v5626
  %v5628 = vpop.f32.mrb[0].mxu0
  %v5629 = vpop.f32.mrb[0].mxu0
  %v5630 = vadd.f32 %v5341, %v5629
  %v5631 = vpop.f32.mrb[0].mxu0
  %5632 = vmatprep.mubr.bf16.mxu0 %v4084
  %5633 = vmatmul.mubr.bf16.gmra.mrb[0].mxu0 %v3906
  %v5634 = vpop.f32.mrb[0].mxu0
  %v5635 = vadd.f32 %v5346, %v5634
  %v5636 = vpop.f32.mrb[0].mxu0
  %v5637 = vpop.f32.mrb[0].mxu0
  %v5638 = vadd.f32 %v5349, %v5637
  %v5639 = vpop.f32.mrb[0].mxu0
  %5640 = vmatprep.mubr.bf16.mxu0 %v4096
  %5641 = vmatmul.mubr.bf16.gmra.mrb[0].mxu0 %v3908
  %v5642 = vpop.f32.mrb[0].mxu0
  %v5643 = vadd.f32 %v5354, %v5642
  %v5644 = vpop.f32.mrb[0].mxu0
  %v5645 = vpop.f32.mrb[0].mxu0
  %v5646 = vadd.f32 %v5357, %v5645
  %v5647 = vpop.f32.mrb[0].mxu0
  %5648 = vmatprep.mubr.bf16.mxu0 %v4108
  %5649 = vmatmul.mubr.bf16.gmra.mrb[0].mxu0 %v3910
  %v5650 = vpop.f32.mrb[0].mxu0
  %v5651 = vadd.f32 %v5362, %v5650
  %v5652 = vpop.f32.mrb[0].mxu0
  %v5653 = vpop.f32.mrb[0].mxu0
  %v5654 = vadd.f32 %v5365, %v5653
  %v5655 = vpop.f32.mrb[0].mxu0
  %5656 = vmatprep.mubr.bf16.mxu0 %v4233
  %5657 = vmatmul.mubr.bf16.gmra.mrb[0].mxu0 %v3912
  %v5658 = vpop.f32.mrb[0].mxu0
  %v5659 = vadd.f32 %v5370, %v5658
  %v5660 = vpop.f32.mrb[0].mxu0
  %v5661 = vpop.f32.mrb[0].mxu0
  %v5662 = vadd.f32 %v5373, %v5661
  %v5663 = vpop.f32.mrb[0].mxu0
  %5664 = vmatprep.mubr.bf16.mxu0 %v4252
  %5665 = vmatmul.mubr.bf16.gmra.mrb[0].mxu0 %v3914
  %v5666 = vpop.f32.mrb[0].mxu0
  %v5667 = vadd.f32 %v5378, %v5666
  %v5668 = vpop.f32.mrb[0].mxu0
  %v5669 = vpop.f32.mrb[0].mxu0
  %v5670 = vadd.f32 %v5381, %v5669
  %v5671 = vpop.f32.mrb[0].mxu0
  %5672 = vmatprep.mubr.bf16.mxu0 %v4331
  %5673 = vmatmul.mubr.bf16.gmra.mrb[0].mxu0 %v4264
  %v5674 = vpop.f32.mrb[0].mxu0
  %v5675 = vadd.f32 %v5386, %v5674
  %v5676 = vpop.f32.mrb[0].mxu0
  %v5677 = vpop.f32.mrb[0].mxu0
  %v5678 = vadd.f32 %v5389, %v5677
  %v5679 = vpop.f32.mrb[0].mxu0
  %5680 = vmatprep.mubr.bf16.mxu0 %v4343
  %5681 = vmatmul.mubr.bf16.gmra.mrb[0].mxu0 %v4266
  %v5682 = vpop.f32.mrb[0].mxu0
  %v5683 = vadd.f32 %v5394, %v5682
  %v5684 = vpop.f32.mrb[0].mxu0
  %v5685 = vpop.f32.mrb[0].mxu0
  %v5686 = vadd.f32 %v5397, %v5685
  %v5687 = vpop.f32.mrb[0].mxu0
  %5688 = vmatprep.mubr.bf16.mxu0 %v4355
  %5689 = vmatmul.mubr.bf16.gmra.mrb[0].mxu0 %v4268
  %v5690 = vpop.f32.mrb[0].mxu0
  %v5691 = vadd.f32 %v5402, %v5690
  %v5692 = vpop.f32.mrb[0].mxu0
  %v5693 = vpop.f32.mrb[0].mxu0
  %v5694 = vadd.f32 %v5405, %v5693
  %v5695 = vpop.f32.mrb[0].mxu0
  %5696 = vmatprep.mubr.bf16.mxu0 %v4367
  %5697 = vmatmul.mubr.bf16.gmra.mrb[0].mxu0 %v4270
  %v5698 = vpop.f32.mrb[0].mxu0
  %v5699 = vadd.f32 %v5410, %v5698
  %v5700 = vpop.f32.mrb[0].mxu0
  %v5701 = vpop.f32.mrb[0].mxu0
  %v5702 = vadd.f32 %v5413, %v5701
  %v5703 = vpop.f32.mrb[0].mxu0
  %5704 = vmatprep.mubr.bf16.mxu0 %v4379
  %5705 = vmatmul.mubr.bf16.gmra.mrb[0].mxu0 %v4272
  %v5706 = vpop.f32.mrb[0].mxu0
  %v5707 = vadd.f32 %v5418, %v5706
  %v5708 = vpop.f32.mrb[0].mxu0
  %v5709 = vpop.f32.mrb[0].mxu0
  %v5710 = vadd.f32 %v5421, %v5709
  %v5711 = vpop.f32.mrb[0].mxu0
  %5712 = vmatprep.mubr.bf16.mxu0 %v4391
  %5713 = vmatmul.mubr.bf16.gmra.mrb[0].mxu0 %v4274
  %v5714 = vpop.f32.mrb[0].mxu0
  %v5715 = vadd.f32 %v5426, %v5714
  %v5716 = vpop.f32.mrb[0].mxu0
  %v5717 = vpop.f32.mrb[0].mxu0
  %v5718 = vadd.f32 %v5429, %v5717
  %v5719 = vpop.f32.mrb[0].mxu0
  %5720 = vmatprep.mubr.bf16.mxu0 %v4403
  %5721 = vmatmul.mubr.bf16.gmra.mrb[0].mxu0 %v4276
  %v5722 = vpop.f32.mrb[0].mxu0
  %v5723 = vadd.f32 %v5434, %v5722
  %v5724 = vpop.f32.mrb[0].mxu0
  %v5725 = vpop.f32.mrb[0].mxu0
  %v5726 = vadd.f32 %v5437, %v5725
  %v5727 = vpop.f32.mrb[0].mxu0
  %5728 = vmatprep.mubr.bf16.mxu0 %v4415
  %5729 = vmatmul.mubr.bf16.gmra.mrb[0].mxu0 %v4278
  %v5730 = vpop.f32.mrb[0].mxu0
  %v5731 = vadd.f32 %v5442, %v5730
  %v5732 = vpop.f32.mrb[0].mxu0
  %v5733 = vpop.f32.mrb[0].mxu0
  %v5734 = vadd.f32 %v5445, %v5733
  %v5735 = vpop.f32.mrb[0].mxu0
  %5736 = vmatprep.mubr.bf16.mxu0 %v4427
  %5737 = vmatmul.mubr.bf16.gmra.mrb[0].mxu0 %v4280
  %v5738 = vpop.f32.mrb[0].mxu0
  %v5739 = vadd.f32 %v5450, %v5738
  %v5740 = vpop.f32.mrb[0].mxu0
  %v5741 = vpop.f32.mrb[0].mxu0
  %v5742 = vadd.f32 %v5453, %v5741
  %v5743 = vpop.f32.mrb[0].mxu0
  %5744 = vmatprep.mubr.bf16.mxu0 %v4439
  %5745 = vmatmul.mubr.bf16.gmra.mrb[0].mxu0 %v4282
  %v5746 = vpop.f32.mrb[0].mxu0
  %v5747 = vadd.f32 %v5458, %v5746
  %v5748 = vpop.f32.mrb[0].mxu0
  %v5749 = vpop.f32.mrb[0].mxu0
  %v5750 = vadd.f32 %v5461, %v5749
  %v5751 = vpop.f32.mrb[0].mxu0
  %5752 = vmatprep.mubr.bf16.mxu0 %v4451
  %5753 = vmatmul.mubr.bf16.gmra.mrb[0].mxu0 %v4284
  %v5754 = vpop.f32.mrb[0].mxu0
  %v5755 = vadd.f32 %v5466, %v5754
  %v5756 = vpop.f32.mrb[0].mxu0
  %v5757 = vpop.f32.mrb[0].mxu0
  %v5758 = vadd.f32 %v5469, %v5757
  %v5759 = vpop.f32.mrb[0].mxu0
  %5760 = vmatprep.mubr.bf16.mxu0 %v4463
  %5761 = vmatmul.mubr.bf16.gmra.mrb[0].mxu0 %v4286
  %v5762 = vpop.f32.mrb[0].mxu0
  %v5763 = vadd.f32 %v5474, %v5762
  %v5764 = vpop.f32.mrb[0].mxu0
  %v5765 = vpop.f32.mrb[0].mxu0
  %v5766 = vadd.f32 %v5477, %v5765
  %v5767 = vpop.f32.mrb[0].mxu0
  %5768 = vmatprep.mubr.bf16.mxu0 %v4475
  %5769 = vmatmul.mubr.bf16.gmra.mrb[0].mxu0 %v4288
  %v5770 = vpop.f32.mrb[0].mxu0
  %v5771 = vadd.f32 %v5482, %v5770
  %v5772 = vpop.f32.mrb[0].mxu0
  %v5773 = vpop.f32.mrb[0].mxu0
  %v5774 = vadd.f32 %v5485, %v5773
  %v5775 = vpop.f32.mrb[0].mxu0
  %5776 = vmatprep.mubr.bf16.mxu0 %v4487
  %5777 = vmatmul.mubr.bf16.gmra.mrb[0].mxu0 %v4290
  %v5778 = vpop.f32.mrb[0].mxu0
  %v5779 = vadd.f32 %v5490, %v5778
  %v5780 = vpop.f32.mrb[0].mxu0
  %v5781 = vpop.f32.mrb[0].mxu0
  %v5782 = vadd.f32 %v5493, %v5781
  %v5783 = vpop.f32.mrb[0].mxu0
  %5784 = vmatprep.mubr.bf16.mxu0 %v4611
  %5785 = vmatmul.mubr.bf16.gmra.mrb[0].mxu0 %v4292
  %v5786 = vpop.f32.mrb[0].mxu0
  %v5787 = vadd.f32 %v5498, %v5786
  %v5788 = vpop.f32.mrb[0].mxu0
  %v5789 = vpop.f32.mrb[0].mxu0
  %v5790 = vadd.f32 %v5501, %v5789
  %v5791 = vpop.f32.mrb[0].mxu0
  %5792 = vmatprep.mubr.bf16.mxu0 %v4630
  %5793 = vmatmul.mubr.bf16.gmra.mrb[0].mxu0 %v4294
  %v5794 = vpop.f32.mrb[0].mxu0
  %v5795 = vadd.f32 %v5506, %v5794
  %v5796 = vpop.f32.mrb[0].mxu0
  %v5797 = vpop.f32.mrb[0].mxu0
  %v5798 = vadd.f32 %v5509, %v5797
  %v5799 = vpop.f32.mrb[0].mxu0
  %5800 = vdwg.mxu0
  %5801 = vmatprep.subr.bf16.mxu0 0
  %5802 = vmatpush1.bf16.msra.mxu0 %v3584
  %5803 = vmatprep.subr.bf16.mxu0 0
  %5804 = vmatpush1.bf16.msra.mxu0 %v3585
  %5805 = vmatprep.subr.bf16.mxu0 0
  %5806 = vmatpush1.bf16.msra.mxu0 %v3586
  %5807 = vmatprep.subr.bf16.mxu0 0
  %5808 = vmatpush1.bf16.msra.mxu0 %v3587
  %5809 = vmatprep.subr.bf16.mxu0 0
  %5810 = vmatpush1.bf16.msra.mxu0 %v3588
  %5811 = vmatprep.subr.bf16.mxu0 0
  %5812 = vmatpush1.bf16.msra.mxu0 %v3589
  %5813 = vmatprep.subr.bf16.mxu0 0
  %5814 = vmatpush1.bf16.msra.mxu0 %v3590
  %5815 = vmatprep.subr.bf16.mxu0 0
  %5816 = vmatpush1.bf16.msra.mxu0 %v3591
  %5817 = vmatprep.subr.bf16.mxu0 0
  %5818 = vmatpush1.bf16.msra.mxu0 0
  %5819 = vmatprep.subr.bf16.mxu0 0
  %5820 = vmatpush1.bf16.msra.mxu0 0
  %5821 = vmatprep.subr.bf16.mxu0 0
  %5822 = vmatpush1.bf16.msra.mxu0 0
  %5823 = vmatprep.subr.bf16.mxu0 0
  %5824 = vmatpush1.bf16.msra.mxu0 0
  %5825 = vmatprep.subr.bf16.mxu0 0
  %5826 = vmatpush1.bf16.msra.mxu0 0
  %5827 = vmatprep.subr.bf16.mxu0 0
  %5828 = vmatpush1.bf16.msra.mxu0 0
  %5829 = vmatprep.subr.bf16.mxu0 0
  %5830 = vmatpush1.bf16.msra.mxu0 0
  %5831 = vmatprep.subr.bf16.mxu0 0
  %5832 = vmatpush1.bf16.msra.mxu0 0
  %5833 = vmatprep.mubr.bf16.mxu0 0
  %5834 = vmatmul.mubr.bf16.gmra.mrb[0].mxu0 %v4166
  %v5835 = vpop.f32.mrb[0].mxu0
  %v5836 = vadd.f32 %v5547, %v5835
  %v5837 = vpop.f32.mrb[0].mxu0
  %v5838 = vpop.f32.mrb[0].mxu0
  %v5839 = vadd.f32 %v5550, %v5838
  %v5840 = vpop.f32.mrb[0].mxu0
  %5841 = vmatprep.mubr.bf16.mxu0 0
  %5842 = vmatmul.mubr.bf16.gmra.mrb[0].mxu0 %v4169
  %v5843 = vpop.f32.mrb[0].mxu0
  %v5844 = vadd.f32 %v5555, %v5843
  %v5845 = vpop.f32.mrb[0].mxu0
  %v5846 = vpop.f32.mrb[0].mxu0
  %v5847 = vadd.f32 %v5558, %v5846
  %v5848 = vpop.f32.mrb[0].mxu0
  %5849 = vmatprep.mubr.bf16.mxu0 0
  %5850 = vmatmul.mubr.bf16.gmra.mrb[0].mxu0 %v4172
  %v5851 = vpop.f32.mrb[0].mxu0
  %v5852 = vadd.f32 %v5563, %v5851
  %v5853 = vpop.f32.mrb[0].mxu0
  %v5854 = vpop.f32.mrb[0].mxu0
  %v5855 = vadd.f32 %v5566, %v5854
  %v5856 = vpop.f32.mrb[0].mxu0
  %5857 = vmatprep.mubr.bf16.mxu0 0
  %5858 = vmatmul.mubr.bf16.gmra.mrb[0].mxu0 %v4175
  %v5859 = vpop.f32.mrb[0].mxu0
  %v5860 = vadd.f32 %v5571, %v5859
  %v5861 = vpop.f32.mrb[0].mxu0
  %v5862 = vpop.f32.mrb[0].mxu0
  %v5863 = vadd.f32 %v5574, %v5862
  %v5864 = vpop.f32.mrb[0].mxu0
  %5865 = vmatprep.mubr.bf16.mxu0 0
  %5866 = vmatmul.mubr.bf16.gmra.mrb[0].mxu0 %v4178
  %v5867 = vpop.f32.mrb[0].mxu0
  %v5868 = vadd.f32 %v5579, %v5867
  %v5869 = vpop.f32.mrb[0].mxu0
  %v5870 = vpop.f32.mrb[0].mxu0
  %v5871 = vadd.f32 %v5582, %v5870
  %v5872 = vpop.f32.mrb[0].mxu0
  %5873 = vmatprep.mubr.bf16.mxu0 0
  %5874 = vmatmul.mubr.bf16.gmra.mrb[0].mxu0 %v4181
  %v5875 = vpop.f32.mrb[0].mxu0
  %v5876 = vadd.f32 %v5587, %v5875
  %v5877 = vpop.f32.mrb[0].mxu0
  %v5878 = vpop.f32.mrb[0].mxu0
  %v5879 = vadd.f32 %v5590, %v5878
  %v5880 = vpop.f32.mrb[0].mxu0
  %5881 = vmatprep.mubr.bf16.mxu0 0
  %5882 = vmatmul.mubr.bf16.gmra.mrb[0].mxu0 %v4184
  %v5883 = vpop.f32.mrb[0].mxu0
  %v5884 = vadd.f32 %v5595, %v5883
  %v5885 = vpop.f32.mrb[0].mxu0
  %v5886 = vpop.f32.mrb[0].mxu0
  %v5887 = vadd.f32 %v5598, %v5886
  %v5888 = vpop.f32.mrb[0].mxu0
  %5889 = vmatprep.mubr.bf16.mxu0 0
  %5890 = vmatmul.mubr.bf16.gmra.mrb[0].mxu0 %v4187
  %v5891 = vpop.f32.mrb[0].mxu0
  %v5892 = vadd.f32 %v5603, %v5891
  %v5893 = vpop.f32.mrb[0].mxu0
  %v5894 = vpop.f32.mrb[0].mxu0
  %v5895 = vadd.f32 %v5606, %v5894
  %v5896 = vpop.f32.mrb[0].mxu0
  %5897 = vmatprep.mubr.bf16.mxu0 0
  %5898 = vmatmul.mubr.bf16.gmra.mrb[0].mxu0 %v4190
  %v5899 = vpop.f32.mrb[0].mxu0
  %v5900 = vadd.f32 %v5611, %v5899
  %v5901 = vpop.f32.mrb[0].mxu0
  %v5902 = vpop.f32.mrb[0].mxu0
  %v5903 = vadd.f32 %v5614, %v5902
  %v5904 = vpop.f32.mrb[0].mxu0
  %5905 = vmatprep.mubr.bf16.mxu0 0
  %5906 = vmatmul.mubr.bf16.gmra.mrb[0].mxu0 %v4193
  %v5907 = vpop.f32.mrb[0].mxu0
  %v5908 = vadd.f32 %v5619, %v5907
  %v5909 = vpop.f32.mrb[0].mxu0
  %v5910 = vpop.f32.mrb[0].mxu0
  %v5911 = vadd.f32 %v5622, %v5910
  %v5912 = vpop.f32.mrb[0].mxu0
  %5913 = vmatprep.mubr.bf16.mxu0 0
  %5914 = vmatmul.mubr.bf16.gmra.mrb[0].mxu0 %v4196
  %v5915 = vpop.f32.mrb[0].mxu0
  %v5916 = vadd.f32 %v5627, %v5915
  %v5917 = vpop.f32.mrb[0].mxu0
  %v5918 = vpop.f32.mrb[0].mxu0
  %v5919 = vadd.f32 %v5630, %v5918
  %v5920 = vpop.f32.mrb[0].mxu0
  %5921 = vmatprep.mubr.bf16.mxu0 0
  %5922 = vmatmul.mubr.bf16.gmra.mrb[0].mxu0 %v4199
  %v5923 = vpop.f32.mrb[0].mxu0
  %v5924 = vadd.f32 %v5635, %v5923
  %v5925 = vpop.f32.mrb[0].mxu0
  %v5926 = vpop.f32.mrb[0].mxu0
  %v5927 = vadd.f32 %v5638, %v5926
  %v5928 = vpop.f32.mrb[0].mxu0
  %5929 = vmatprep.mubr.bf16.mxu0 0
  %5930 = vmatmul.mubr.bf16.gmra.mrb[0].mxu0 %v4202
  %v5931 = vpop.f32.mrb[0].mxu0
  %v5932 = vadd.f32 %v5643, %v5931
  %v5933 = vpop.f32.mrb[0].mxu0
  %v5934 = vpop.f32.mrb[0].mxu0
  %v5935 = vadd.f32 %v5646, %v5934
  %v5936 = vpop.f32.mrb[0].mxu0
  %5937 = vmatprep.mubr.bf16.mxu0 0
  %5938 = vmatmul.mubr.bf16.gmra.mrb[0].mxu0 %v4205
  %v5939 = vpop.f32.mrb[0].mxu0
  %v5940 = vadd.f32 %v5651, %v5939
  %v5941 = vpop.f32.mrb[0].mxu0
  %v5942 = vpop.f32.mrb[0].mxu0
  %v5943 = vadd.f32 %v5654, %v5942
  %v5944 = vpop.f32.mrb[0].mxu0
  %5945 = vmatprep.mubr.bf16.mxu0 0
  %5946 = vmatmul.mubr.bf16.gmra.mrb[0].mxu0 %v4239
  %v5947 = vpop.f32.mrb[0].mxu0
  %v5948 = vadd.f32 %v5659, %v5947
  %v5949 = vpop.f32.mrb[0].mxu0
  %v5950 = vpop.f32.mrb[0].mxu0
  %v5951 = vadd.f32 %v5662, %v5950
  %v5952 = vpop.f32.mrb[0].mxu0
  %5953 = vmatprep.mubr.bf16.mxu0 0
  %5954 = vmatmul.mubr.bf16.gmra.mrb[0].mxu0 %v4258
  %v5955 = vpop.f32.mrb[0].mxu0
  %v5956 = vadd.f32 %v5667, %v5955
  %v5957 = vpop.f32.mrb[0].mxu0
  %v5958 = vpop.f32.mrb[0].mxu0
  %v5959 = vadd.f32 %v5670, %v5958
  %v5960 = vpop.f32.mrb[0].mxu0
  %5961 = vmatprep.mubr.bf16.mxu0 0
  %5962 = vmatmul.mubr.bf16.gmra.mrb[0].mxu0 %v4544
  %v5963 = vpop.f32.mrb[0].mxu0
  %v5964 = vadd.f32 %v5675, %v5963
  %v5965 = vpop.f32.mrb[0].mxu0
  %v5966 = vpop.f32.mrb[0].mxu0
  %v5967 = vadd.f32 %v5678, %v5966
  %v5968 = vpop.f32.mrb[0].mxu0
  %5969 = vmatprep.mubr.bf16.mxu0 0
  %5970 = vmatmul.mubr.bf16.gmra.mrb[0].mxu0 %v4547
  %v5971 = vpop.f32.mrb[0].mxu0
  %v5972 = vadd.f32 %v5683, %v5971
  %v5973 = vpop.f32.mrb[0].mxu0
  %v5974 = vpop.f32.mrb[0].mxu0
  %v5975 = vadd.f32 %v5686, %v5974
  %v5976 = vpop.f32.mrb[0].mxu0
  %5977 = vmatprep.mubr.bf16.mxu0 0
  %5978 = vmatmul.mubr.bf16.gmra.mrb[0].mxu0 %v4550
  %v5979 = vpop.f32.mrb[0].mxu0
  %v5980 = vadd.f32 %v5691, %v5979
  %v5981 = vpop.f32.mrb[0].mxu0
  %v5982 = vpop.f32.mrb[0].mxu0
  %v5983 = vadd.f32 %v5694, %v5982
  %v5984 = vpop.f32.mrb[0].mxu0
  %5985 = vmatprep.mubr.bf16.mxu0 0
  %5986 = vmatmul.mubr.bf16.gmra.mrb[0].mxu0 %v4553
  %v5987 = vpop.f32.mrb[0].mxu0
  %v5988 = vadd.f32 %v5699, %v5987
  %v5989 = vpop.f32.mrb[0].mxu0
  %v5990 = vpop.f32.mrb[0].mxu0
  %v5991 = vadd.f32 %v5702, %v5990
  %v5992 = vpop.f32.mrb[0].mxu0
  %5993 = vmatprep.mubr.bf16.mxu0 0
  %5994 = vmatmul.mubr.bf16.gmra.mrb[0].mxu0 %v4556
  %v5995 = vpop.f32.mrb[0].mxu0
  %v5996 = vadd.f32 %v5707, %v5995
  %v5997 = vpop.f32.mrb[0].mxu0
  %v5998 = vpop.f32.mrb[0].mxu0
  %v5999 = vadd.f32 %v5710, %v5998
  %v6000 = vpop.f32.mrb[0].mxu0
  %6001 = vmatprep.mubr.bf16.mxu0 0
  %6002 = vmatmul.mubr.bf16.gmra.mrb[0].mxu0 %v4559
  %v6003 = vpop.f32.mrb[0].mxu0
  %v6004 = vadd.f32 %v5715, %v6003
  %v6005 = vpop.f32.mrb[0].mxu0
  %v6006 = vpop.f32.mrb[0].mxu0
  %v6007 = vadd.f32 %v5718, %v6006
  %v6008 = vpop.f32.mrb[0].mxu0
  %6009 = vmatprep.mubr.bf16.mxu0 0
  %6010 = vmatmul.mubr.bf16.gmra.mrb[0].mxu0 %v4562
  %v6011 = vpop.f32.mrb[0].mxu0
  %v6012 = vadd.f32 %v5723, %v6011
  %v6013 = vpop.f32.mrb[0].mxu0
  %v6014 = vpop.f32.mrb[0].mxu0
  %v6015 = vadd.f32 %v5726, %v6014
  %v6016 = vpop.f32.mrb[0].mxu0
  %6017 = vmatprep.mubr.bf16.mxu0 0
  %6018 = vmatmul.mubr.bf16.gmra.mrb[0].mxu0 %v4565
  %v6019 = vpop.f32.mrb[0].mxu0
  %v6020 = vadd.f32 %v5731, %v6019
  %v6021 = vpop.f32.mrb[0].mxu0
  %v6022 = vpop.f32.mrb[0].mxu0
  %v6023 = vadd.f32 %v5734, %v6022
  %v6024 = vpop.f32.mrb[0].mxu0
  %6025 = vmatprep.mubr.bf16.mxu0 0
  %6026 = vmatmul.mubr.bf16.gmra.mrb[0].mxu0 %v4568
  %v6027 = vpop.f32.mrb[0].mxu0
  %v6028 = vadd.f32 %v5739, %v6027
  %v6029 = vpop.f32.mrb[0].mxu0
  %v6030 = vpop.f32.mrb[0].mxu0
  %v6031 = vadd.f32 %v5742, %v6030
  %v6032 = vpop.f32.mrb[0].mxu0
  %6033 = vmatprep.mubr.bf16.mxu0 0
  %6034 = vmatmul.mubr.bf16.gmra.mrb[0].mxu0 %v4571
  %v6035 = vpop.f32.mrb[0].mxu0
  %v6036 = vadd.f32 %v5747, %v6035
  %v6037 = vpop.f32.mrb[0].mxu0
  %v6038 = vpop.f32.mrb[0].mxu0
  %v6039 = vadd.f32 %v5750, %v6038
  %v6040 = vpop.f32.mrb[0].mxu0
  %6041 = vmatprep.mubr.bf16.mxu0 0
  %6042 = vmatmul.mubr.bf16.gmra.mrb[0].mxu0 %v4574
  %v6043 = vpop.f32.mrb[0].mxu0
  %v6044 = vadd.f32 %v5755, %v6043
  %v6045 = vpop.f32.mrb[0].mxu0
  %v6046 = vpop.f32.mrb[0].mxu0
  %v6047 = vadd.f32 %v5758, %v6046
  %v6048 = vpop.f32.mrb[0].mxu0
  %6049 = vmatprep.mubr.bf16.mxu0 0
  %6050 = vmatmul.mubr.bf16.gmra.mrb[0].mxu0 %v4577
  %v6051 = vpop.f32.mrb[0].mxu0
  %v6052 = vadd.f32 %v5763, %v6051
  %v6053 = vpop.f32.mrb[0].mxu0
  %v6054 = vpop.f32.mrb[0].mxu0
  %v6055 = vadd.f32 %v5766, %v6054
  %v6056 = vpop.f32.mrb[0].mxu0
  %6057 = vmatprep.mubr.bf16.mxu0 0
  %6058 = vmatmul.mubr.bf16.gmra.mrb[0].mxu0 %v4580
  %v6059 = vpop.f32.mrb[0].mxu0
  %v6060 = vadd.f32 %v5771, %v6059
  %v6061 = vpop.f32.mrb[0].mxu0
  %v6062 = vpop.f32.mrb[0].mxu0
  %v6063 = vadd.f32 %v5774, %v6062
  %v6064 = vpop.f32.mrb[0].mxu0
  %6065 = vmatprep.mubr.bf16.mxu0 0
  %6066 = vmatmul.mubr.bf16.gmra.mrb[0].mxu0 %v4583
  %v6067 = vpop.f32.mrb[0].mxu0
  %v6068 = vadd.f32 %v5779, %v6067
  %v6069 = vpop.f32.mrb[0].mxu0
  %v6070 = vpop.f32.mrb[0].mxu0
  %v6071 = vadd.f32 %v5782, %v6070
  %v6072 = vpop.f32.mrb[0].mxu0
  %6073 = vmatprep.mubr.bf16.mxu0 0
  %6074 = vmatmul.mubr.bf16.gmra.mrb[0].mxu0 %v4617
  %v6075 = vpop.f32.mrb[0].mxu0
  %v6076 = vadd.f32 %v5787, %v6075
  %v6077 = vpop.f32.mrb[0].mxu0
  %v6078 = vpop.f32.mrb[0].mxu0
  %v6079 = vadd.f32 %v5790, %v6078
  %v6080 = vpop.f32.mrb[0].mxu0
  %6081 = vmatprep.mubr.bf16.mxu0 0
  %6082 = vmatmul.mubr.bf16.gmra.mrb[0].mxu0 %v4636
  %v6083 = vpop.f32.mrb[0].mxu0
  %v6084 = vadd.f32 %v5795, %v6083
  %v6085 = vpop.f32.mrb[0].mxu0
  %v6086 = vpop.f32.mrb[0].mxu0
  %v6087 = vadd.f32 %v5798, %v6086
  %v6088 = vpop.f32.mrb[0].mxu0
  %6089 = vdwg.mxu0
  %vm6090 = vcmask 64512
  %6091 = vst.msk [vmem:[%s7] sm:$0xff] %vm6090, %v5836
  %6092 = vst.msk [vmem:[%s7 + $0x8] sm:$0xff] %vm6090, %v5839
  %6093 = vst.msk [vmem:[%s7 + $0x10] sm:$0xff] %vm6090, %v5844
  %6094 = vst.msk [vmem:[%s7 + $0x18] sm:$0xff] %vm6090, %v5847
  %6095 = vst.msk [vmem:[%s7 + $0x20] sm:$0xff] %vm6090, %v5852
  %6096 = vst.msk [vmem:[%s7 + $0x28] sm:$0xff] %vm6090, %v5855
  %6097 = vst.msk [vmem:[%s7 + $0x30] sm:$0xff] %vm6090, %v5860
  %6098 = vst.msk [vmem:[%s7 + $0x38] sm:$0xff] %vm6090, %v5863
  %6099 = vst.msk [vmem:[%s7 + $0x40] sm:$0xff] %vm6090, %v5868
  %6100 = vst.msk [vmem:[%s7 + $0x48] sm:$0xff] %vm6090, %v5871
  %6101 = vst.msk [vmem:[%s7 + $0x50] sm:$0xff] %vm6090, %v5876
  %6102 = vst.msk [vmem:[%s7 + $0x58] sm:$0xff] %vm6090, %v5879
  %6103 = vst.msk [vmem:[%s7 + $0x60] sm:$0xff] %vm6090, %v5884
  %6104 = vst.msk [vmem:[%s7 + $0x68] sm:$0xff] %vm6090, %v5887
  %6105 = vst.msk [vmem:[%s7 + $0x70] sm:$0xff] %vm6090, %v5892
  %6106 = vst.msk [vmem:[%s7 + $0x78] sm:$0xff] %vm6090, %v5895
  %6107 = vst.msk [vmem:[%s7 + $0x80] sm:$0xff] %vm6090, %v5900
  %6108 = vst.msk [vmem:[%s7 + $0x88] sm:$0xff] %vm6090, %v5903
  %6109 = vst.msk [vmem:[%s7 + $0x90] sm:$0xff] %vm6090, %v5908
  %6110 = vst.msk [vmem:[%s7 + $0x98] sm:$0xff] %vm6090, %v5911
  %6111 = vst.msk [vmem:[%s7 + $0xa0] sm:$0xff] %vm6090, %v5916
  %6112 = vst.msk [vmem:[%s7 + $0xa8] sm:$0xff] %vm6090, %v5919
  %6113 = vst.msk [vmem:[%s7 + $0xb0] sm:$0xff] %vm6090, %v5924
  %6114 = vst.msk [vmem:[%s7 + $0xb8] sm:$0xff] %vm6090, %v5927
  %6115 = vst.msk [vmem:[%s7 + $0xc0] sm:$0xff] %vm6090, %v5932
  %6116 = vst.msk [vmem:[%s7 + $0xc8] sm:$0xff] %vm6090, %v5935
  %6117 = vst.msk [vmem:[%s7 + $0xd0] sm:$0xff] %vm6090, %v5940
  %6118 = vst.msk [vmem:[%s7 + $0xd8] sm:$0xff] %vm6090, %v5943
  %6119 = vst.msk [vmem:[%s7 + $0xe0] sm:$0xff] %vm6090, %v5948
  %6120 = vst.msk [vmem:[%s7 + $0xe8] sm:$0xff] %vm6090, %v5951
  %6121 = vst.msk [vmem:[%s7 + $0xf0] sm:$0xff] %vm6090, %v5956
  %6122 = vst.msk [vmem:[%s7 + $0xf8] sm:$0xff] %vm6090, %v5959
  %6123 = vst.msk [vmem:[%s7 + $0x100] sm:$0xff] %vm6090, %v5964
  %6124 = vst.msk [vmem:[%s7 + $0x108] sm:$0xff] %vm6090, %v5967
  %6125 = vst.msk [vmem:[%s7 + $0x110] sm:$0xff] %vm6090, %v5972
  %6126 = vst.msk [vmem:[%s7 + $0x118] sm:$0xff] %vm6090, %v5975
  %6127 = vst.msk [vmem:[%s7 + $0x120] sm:$0xff] %vm6090, %v5980
  %6128 = vst.msk [vmem:[%s7 + $0x128] sm:$0xff] %vm6090, %v5983
  %6129 = vst.msk [vmem:[%s7 + $0x130] sm:$0xff] %vm6090, %v5988
  %6130 = vst.msk [vmem:[%s7 + $0x138] sm:$0xff] %vm6090, %v5991
  %6131 = vst.msk [vmem:[%s7 + $0x140] sm:$0xff] %vm6090, %v5996
  %6132 = vst.msk [vmem:[%s7 + $0x148] sm:$0xff] %vm6090, %v5999
  %6133 = vst.msk [vmem:[%s7 + $0x150] sm:$0xff] %vm6090, %v6004
  %6134 = vst.msk [vmem:[%s7 + $0x158] sm:$0xff] %vm6090, %v6007
  %6135 = vst.msk [vmem:[%s7 + $0x160] sm:$0xff] %vm6090, %v6012
  %6136 = vst.msk [vmem:[%s7 + $0x168] sm:$0xff] %vm6090, %v6015
  %6137 = vst.msk [vmem:[%s7 + $0x170] sm:$0xff] %vm6090, %v6020
  %6138 = vst.msk [vmem:[%s7 + $0x178] sm:$0xff] %vm6090, %v6023
  %6139 = vst.msk [vmem:[%s7 + $0x180] sm:$0xff] %vm6090, %v6028
  %6140 = vst.msk [vmem:[%s7 + $0x188] sm:$0xff] %vm6090, %v6031
  %6141 = vst.msk [vmem:[%s7 + $0x190] sm:$0xff] %vm6090, %v6036
  %6142 = vst.msk [vmem:[%s7 + $0x198] sm:$0xff] %vm6090, %v6039
  %6143 = vst.msk [vmem:[%s7 + $0x1a0] sm:$0xff] %vm6090, %v6044
  %6144 = vst.msk [vmem:[%s7 + $0x1a8] sm:$0xff] %vm6090, %v6047
  %6145 = vst.msk [vmem:[%s7 + $0x1b0] sm:$0xff] %vm6090, %v6052
  %6146 = vst.msk [vmem:[%s7 + $0x1b8] sm:$0xff] %vm6090, %v6055
  %6147 = vst.msk [vmem:[%s7 + $0x1c0] sm:$0xff] %vm6090, %v6060
  %6148 = vst.msk [vmem:[%s7 + $0x1c8] sm:$0xff] %vm6090, %v6063
  %6149 = vst.msk [vmem:[%s7 + $0x1d0] sm:$0xff] %vm6090, %v6068
  %6150 = vst.msk [vmem:[%s7 + $0x1d8] sm:$0xff] %vm6090, %v6071
  %6151 = vst.msk [vmem:[%s7 + $0x1e0] sm:$0xff] %vm6090, %v6076
  %6152 = vst.msk [vmem:[%s7 + $0x1e8] sm:$0xff] %vm6090, %v6079
  %6153 = vst.msk [vmem:[%s7 + $0x1f0] sm:$0xff] %vm6090, %v6084
  %6154 = vst.msk [vmem:[%s7 + $0x1f8] sm:$0xff] %vm6090, %v6087
  // Predicated region
  $region30: #{simple_block_pallas.1} parent=0 // pred_check
    _
  $region31: #{simple_block_pallas.1} parent=0 // pred_check_branch
    %6156 = sbr.rel (0) target = $region33
  $region32: #{simple_block_pallas.1} parent=0 // pred_region
    _
  $region33: #{simple_block_pallas.1} parent=0 // pred_fallthru
    _
  // Predicated region
  $region34: #{simple_block_pallas.1} parent=0 // pred_check
    _
  $region35: #{simple_block_pallas.1} parent=0 // pred_check_branch
    %6158 = sbr.rel (0) target = $region37
  $region36: #{simple_block_pallas.1} parent=0 // pred_region
    _
  $region37: #{simple_block_pallas.1} parent=0 // pred_fallthru
    _

</llo_original>
